<compile_context>
chip_gen: v5e
topology: v5e:2x2
jax: 0.10.0
libtpu: 0.0.40
codegen_flags: <defaults>
</compile_context>

<pallas_src>
import functools

import jax
import jax.numpy as jnp
from jax.experimental import pallas as pl
from jax.experimental.pallas import tpu as pltpu


def _inception_kernel(x_ref, row_ref, col_ref,
                      wcat_ref, bcat_ref, wpool_ref, bpool_ref,
                      w5_ref, b5_ref, w3a_ref, b3a_ref, w3b_ref, b3b_ref,
                      o_ref, y0_ref, *, H, W):
    """One image per grid step. Channels on sublanes, flattened H*W on lanes.

    x_ref    : (1, Cin, HW)       input image
    row_ref  : (1, HW) int32      spatial row index of each lane position
    col_ref  : (1, HW) int32      spatial col index of each lane position
    wcat_ref : (48, Cin)          fused reduce-1x1 weights [1x1|5x5r|3x3r]
    bcat_ref : (48, 1)            fused reduce-1x1 biases
    wpool_ref: (24, Cin)          pool-branch 1x1 weights, bpool_ref (24, 1)
    w5_ref   : (5, 24, 5*16)      branch_5x5_2 weights, per-kh (Co, KW*Ci)
    w3a_ref  : (3, 24, 3*16)      branch_3x3_2 weights
    w3b_ref  : (3, 24, 3*24)      branch_3x3_3 weights
    o_ref    : (1, 88, HW)        concatenated output (lane-dense)
    y0_ref   : VMEM (48, HW) f32  fused reduce-1x1 results
    """
    HW = H * W
    x = x_ref[0]                       # (Cin, HW)
    row = row_ref[...]                 # (1, HW)
    col = col_ref[...]                 # (1, HW)

    def tap(slab, dh, dw):
        """slab (C, HW) spatially shifted by (dh, dw), zero outside the image."""
        d = dh * W + dw
        r = pltpu.roll(slab, shift=(-d) % HW, axis=1) if d != 0 else slab
        conds = []
        if dh > 0:
            conds.append(row < (H - dh))
        elif dh < 0:
            conds.append(row >= (-dh))
        if dw > 0:
            conds.append(col < (W - dw))
        elif dw < 0:
            conds.append(col >= (-dw))
        if conds:
            m = conds[0]
            for c in conds[1:]:
                m = m & c
            r = jnp.where(m, r, 0.0)
        return r

    def conv_kxk(u, w_ref, b_ref, K, P):
        """KxK conv (stride 1, pad P) on u (Ci, HW); w_ref is (K, Co, K*Ci)."""
        Co = w_ref.shape[1]
        acc = jnp.zeros((Co, HW), jnp.float32)
        for kh in range(K):
            # Per-kh im2col: stack the KW shifted slabs along sublanes -> K = K*Ci.
            col_mat = jnp.concatenate(
                [tap(u, kh - P, kw - P) for kw in range(K)], axis=0)
            acc = acc + jnp.dot(w_ref[kh], col_mat,
                                preferred_element_type=jnp.float32)
        return acc + b_ref[...]

    # ---- fused reduce 1x1 convs: rows [0:16]=1x1, [16:32]=5x5-red, [32:48]=3x3-red
    y0_ref[...] = (jnp.dot(wcat_ref[...], x, preferred_element_type=jnp.float32)
                   + bcat_ref[...])

    # ---- branch_1x1 ----
    o_ref[0, 24:40, :] = y0_ref[0:16, :].astype(o_ref.dtype)

    # ---- branch_pool: AvgPool2d(3, s=1, p=1, count_include_pad) -> Conv1x1 ----
    pooled = jnp.zeros(x.shape, jnp.float32)
    for dh in (-1, 0, 1):
        for dw in (-1, 0, 1):
            pooled = pooled + tap(x, dh, dw)
    pooled = pooled * (1.0 / 9.0)
    o_ref[0, 0:24, :] = (
        jnp.dot(wpool_ref[...], pooled, preferred_element_type=jnp.float32)
        + bpool_ref[...]).astype(o_ref.dtype)

    # ---- branch_5x5: 1x1(->16) then 5x5(16->24, p=2) ----
    y5 = conv_kxk(y0_ref[16:32, :], w5_ref, b5_ref, 5, 2)
    o_ref[0, 40:64, :] = y5.astype(o_ref.dtype)

    # ---- branch_3x3: 1x1(->16) then 3x3(16->24, p=1) then 3x3(24->24, p=1) ----
    t = conv_kxk(y0_ref[32:48, :], w3a_ref, b3a_ref, 3, 1)
    y3 = conv_kxk(t, w3b_ref, b3b_ref, 3, 1)
    o_ref[0, 64:88, :] = y3.astype(o_ref.dtype)


def inception_block(x_nchw,
                    w_pool, b_pool, w_1x1, b_1x1,
                    w_5x5_1, b_5x5_1, w_5x5_2, b_5x5_2,
                    w_3x3_1, b_3x3_1, w_3x3_2, b_3x3_2, w_3x3_3, b_3x3_3):
    """Matches InceptionBlock.forward. Input NCHW, weights OIHW, output NCHW."""
    N, Cin, H, W = x_nchw.shape
    HW = H * W
    x_flat = x_nchw.reshape(N, Cin, HW)          # NCHW == (N, C, H*W): no transpose

    pos = jnp.arange(HW, dtype=jnp.int32)
    row_idx = (pos // W).reshape(1, HW)
    col_idx = (pos % W).reshape(1, HW)

    def w1x1(w):                                  # (Co, Ci, 1, 1) -> (Co, Ci)
        return w[:, :, 0, 0]

    def wtaps(w):                                 # (Co, Ci, KH, KW) -> (KH, Co, KW*Ci)
        Co, Ci, KH, KW = w.shape
        return jnp.transpose(w, (2, 0, 3, 1)).reshape(KH, Co, KW * Ci)

    # Fused reduce-1x1 weights: rows [0:16]=1x1, [16:32]=5x5-reduce, [32:48]=3x3-reduce.
    w_cat = jnp.concatenate([w1x1(w_1x1), w1x1(w_5x5_1), w1x1(w_3x3_1)], axis=0)
    b_cat = jnp.concatenate([b_1x1, b_5x5_1, b_3x3_1])[:, None]

    operands = (x_flat, row_idx, col_idx,
                w_cat, b_cat, w1x1(w_pool), b_pool[:, None],
                wtaps(w_5x5_2), b_5x5_2[:, None],
                wtaps(w_3x3_2), b_3x3_2[:, None],
                wtaps(w_3x3_3), b_3x3_3[:, None])

    def const_spec(a):
        nd = a.ndim
        return pl.BlockSpec(tuple(a.shape), lambda *_: (0,) * nd)

    in_specs = ([pl.BlockSpec((1, Cin, HW), lambda n: (n, 0, 0))]
                + [const_spec(a) for a in operands[1:]])

    kernel = functools.partial(_inception_kernel, H=H, W=W)

    out = pl.pallas_call(
        kernel,
        out_shape=jax.ShapeDtypeStruct((N, 88, HW), x_nchw.dtype),
        grid_spec=pltpu.PrefetchScalarGridSpec(
            num_scalar_prefetch=0,
            grid=(N,),
            in_specs=in_specs,
            out_specs=pl.BlockSpec((1, 88, HW), lambda n: (n, 0, 0)),
            scratch_shapes=[pltpu.VMEM((w_cat.shape[0], HW), jnp.float32)],
        ),
        compiler_params=pltpu.CompilerParams(
            dimension_semantics=("parallel",),
            vmem_limit_bytes=32 * 1024 * 1024),
    )(*operands)

    return out.reshape(N, 88, H, W)


def inception_reference(x, w_pool, b_pool, w_1x1, b_1x1,
                        w_5x5_1, b_5x5_1, w_5x5_2, b_5x5_2,
                        w_3x3_1, b_3x3_1, w_3x3_2, b_3x3_2, w_3x3_3, b_3x3_3):
    def conv(v, w, b, pad):
        y = jax.lax.conv_general_dilated(
            v, w, (1, 1), [(pad, pad), (pad, pad)],
            dimension_numbers=('NCHW', 'OIHW', 'NCHW'))
        return y + b.reshape(1, -1, 1, 1)

    # AvgPool2d(3, s=1, p=1) with count_include_pad=True (PyTorch default).
    xs = jax.lax.reduce_window(x, 0.0, jax.lax.add, (1, 1, 3, 3), (1, 1, 1, 1),
                               [(0, 0), (0, 0), (1, 1), (1, 1)]) / 9.0
    branch_pool = conv(xs, w_pool, b_pool, 0)
    branch_1x1 = conv(x, w_1x1, b_1x1, 0)
    branch_5x5 = conv(conv(x, w_5x5_1, b_5x5_1, 0), w_5x5_2, b_5x5_2, 2)
    branch_3x3 = conv(conv(conv(x, w_3x3_1, b_3x3_1, 0),
                           w_3x3_2, b_3x3_2, 1),
                      w_3x3_3, b_3x3_3, 1)
    return jnp.concatenate([branch_pool, branch_1x1, branch_5x5, branch_3x3],
                           axis=1)


if __name__ == "__main__":
    key = jax.random.PRNGKey(0)
    keys = jax.random.split(key, 16)

    N, Cin, H, W = 2, 4, 16, 16

    def conv_w(k, cout, cin, kh, kw):
        bound = 1.0 / float((cin * kh * kw) ** 0.5)
        return jax.random.uniform(k, (cout, cin, kh, kw), jnp.float32,
                                  minval=-bound, maxval=bound)

    def conv_b(k, cout, cin, kh, kw):
        bound = 1.0 / float((cin * kh * kw) ** 0.5)
        return jax.random.uniform(k, (cout,), jnp.float32,
                                  minval=-bound, maxval=bound)

    x = jax.random.normal(keys[0], (N, Cin, H, W), dtype=jnp.float32)
    w_pool = conv_w(keys[1], 24, Cin, 1, 1); b_pool = conv_b(keys[2], 24, Cin, 1, 1)
    w_1x1 = conv_w(keys[3], 16, Cin, 1, 1); b_1x1 = conv_b(keys[4], 16, Cin, 1, 1)
    w_5x5_1 = conv_w(keys[5], 16, Cin, 1, 1); b_5x5_1 = conv_b(keys[6], 16, Cin, 1, 1)
    w_5x5_2 = conv_w(keys[7], 24, 16, 5, 5); b_5x5_2 = conv_b(keys[8], 24, 16, 5, 5)
    w_3x3_1 = conv_w(keys[9], 16, Cin, 1, 1); b_3x3_1 = conv_b(keys[10], 16, Cin, 1, 1)
    w_3x3_2 = conv_w(keys[11], 24, 16, 3, 3); b_3x3_2 = conv_b(keys[12], 24, 16, 3, 3)
    w_3x3_3 = conv_w(keys[13], 24, 24, 3, 3); b_3x3_3 = conv_b(keys[14], 24, 24, 3, 3)

    args = (w_pool, b_pool, w_1x1, b_1x1, w_5x5_1, b_5x5_1, w_5x5_2, b_5x5_2,
            w_3x3_1, b_3x3_1, w_3x3_2, b_3x3_2, w_3x3_3, b_3x3_3)

    y = inception_block(x, *args)
    y = jax.block_until_ready(y)

    y_ref = inception_reference(x, *args)
    assert y.shape == (N, 88, H, W), y.shape
    max_err = float(jnp.max(jnp.abs(y - y_ref)))
    assert jnp.allclose(y, y_ref, atol=1e-4, rtol=1e-4), max_err
    print("KERNEL_OK")
</pallas_src>

<mosaic_0001>
module attributes {stable_mosaic.version = 11 : i64} {
  func.func @_inception_kernel(%arg0: i32, %arg1: memref<1x4x256xf32, #tpu.memory_space<vmem>>, %arg2: memref<1x256xi32, #tpu.memory_space<vmem>>, %arg3: memref<1x256xi32, #tpu.memory_space<vmem>>, %arg4: memref<48x4xf32, #tpu.memory_space<vmem>>, %arg5: memref<48x1xf32, #tpu.memory_space<vmem>>, %arg6: memref<24x4xf32, #tpu.memory_space<vmem>>, %arg7: memref<24x1xf32, #tpu.memory_space<vmem>>, %arg8: memref<5x24x80xf32, #tpu.memory_space<vmem>>, %arg9: memref<24x1xf32, #tpu.memory_space<vmem>>, %arg10: memref<3x24x48xf32, #tpu.memory_space<vmem>>, %arg11: memref<24x1xf32, #tpu.memory_space<vmem>>, %arg12: memref<3x24x72xf32, #tpu.memory_space<vmem>>, %arg13: memref<24x1xf32, #tpu.memory_space<vmem>>, %arg14: memref<1x88x256xf32, #tpu.memory_space<vmem>>, %arg15: memref<48x256xf32, #tpu.memory_space<vmem>>) attributes {dimension_semantics = [#tpu.dimension_semantics<parallel>], iteration_bounds = array<i64: 2>, scalar_prefetch = 0 : i64, scratch_operands = 1 : i64, tpu.core_type = #tpu.core_type<tc>, window_params = [{transform_indices = @transform_0, window_bounds = array<i64: 1, 4, 256>}, {pipeline_mode = #tpu.pipeline_mode<synchronous>, transform_indices = @transform_1, window_bounds = array<i64: 1, 256>}, {pipeline_mode = #tpu.pipeline_mode<synchronous>, transform_indices = @transform_2, window_bounds = array<i64: 1, 256>}, {pipeline_mode = #tpu.pipeline_mode<synchronous>, transform_indices = @transform_3, window_bounds = array<i64: 48, 4>}, {pipeline_mode = #tpu.pipeline_mode<synchronous>, transform_indices = @transform_4, window_bounds = array<i64: 48, 1>}, {pipeline_mode = #tpu.pipeline_mode<synchronous>, transform_indices = @transform_5, window_bounds = array<i64: 24, 4>}, {pipeline_mode = #tpu.pipeline_mode<synchronous>, transform_indices = @transform_6, window_bounds = array<i64: 24, 1>}, {pipeline_mode = #tpu.pipeline_mode<synchronous>, transform_indices = @transform_7, window_bounds = array<i64: 5, 24, 80>}, {pipeline_mode = #tpu.pipeline_mode<synchronous>, transform_indices = @transform_8, window_bounds = array<i64: 24, 1>}, {pipeline_mode = #tpu.pipeline_mode<synchronous>, transform_indices = @transform_9, window_bounds = array<i64: 3, 24, 48>}, {pipeline_mode = #tpu.pipeline_mode<synchronous>, transform_indices = @transform_10, window_bounds = array<i64: 24, 1>}, {pipeline_mode = #tpu.pipeline_mode<synchronous>, transform_indices = @transform_11, window_bounds = array<i64: 3, 24, 72>}, {pipeline_mode = #tpu.pipeline_mode<synchronous>, transform_indices = @transform_12, window_bounds = array<i64: 24, 1>}, {transform_indices = @transform_13, window_bounds = array<i64: 1, 88, 256>}]} {
    %c0 = arith.constant 0 : index
    %c0_0 = arith.constant 0 : index
    %c0_1 = arith.constant 0 : index
    %0 = vector.load %arg1[%c0, %c0_0, %c0_1] : memref<1x4x256xf32, #tpu.memory_space<vmem>>, vector<1x4x256xf32>
    %1 = vector.shape_cast %0 : vector<1x4x256xf32> to vector<4x256xf32>
    %c0_2 = arith.constant 0 : index
    %c0_3 = arith.constant 0 : index
    %2 = vector.load %arg2[%c0_2, %c0_3] : memref<1x256xi32, #tpu.memory_space<vmem>>, vector<1x256xi32>
    %c0_4 = arith.constant 0 : index
    %c0_5 = arith.constant 0 : index
    %3 = vector.load %arg3[%c0_4, %c0_5] : memref<1x256xi32, #tpu.memory_space<vmem>>, vector<1x256xi32>
    %c0_6 = arith.constant 0 : index
    %c0_7 = arith.constant 0 : index
    %4 = vector.load %arg4[%c0_6, %c0_7] : memref<48x4xf32, #tpu.memory_space<vmem>>, vector<48x4xf32>
    %cst = arith.constant dense<0.000000e+00> : vector<48x256xf32>
    %5 = tpu.matmul %4, %1, %cst {dimension_numbers = #tpu.dot_dimension_numbers<[1], [0], [0], [1], [0, 0, 1, 1], [], []>} : vector<48x4xf32>, vector<4x256xf32>, vector<48x256xf32> -> vector<48x256xf32>
    %c0_8 = arith.constant 0 : index
    %c0_9 = arith.constant 0 : index
    %6 = vector.load %arg5[%c0_8, %c0_9] : memref<48x1xf32, #tpu.memory_space<vmem>>, vector<48x1xf32>
    %7 = vector.broadcast %6 : vector<48x1xf32> to vector<48x256xf32>
    %8 = arith.addf %5, %7 : vector<48x256xf32>
    %c0_10 = arith.constant 0 : index
    %c0_11 = arith.constant 0 : index
    %9 = vector.load %arg15[%c0_10, %c0_11] : memref<48x256xf32, #tpu.memory_space<vmem>>, vector<48x256xf32>
    tpu.vector_store %arg15[%c0_10, %c0_11], %8 {strides = array<i32>} : memref<48x256xf32, #tpu.memory_space<vmem>>, vector<48x256xf32>,
    %c0_12 = arith.constant 0 : index
    %c0_13 = arith.constant 0 : index
    %10 = vector.load %arg15[%c0_12, %c0_13] : memref<48x256xf32, #tpu.memory_space<vmem>>, vector<16x256xf32>
    %c0_14 = arith.constant 0 : index
    %c24 = arith.constant 24 : index
    %c0_15 = arith.constant 0 : index
    %11 = vector.load %arg14[%c0_14, %c24, %c0_15] : memref<1x88x256xf32, #tpu.memory_space<vmem>>, vector<1x16x256xf32>
    %12 = vector.shape_cast %11 : vector<1x16x256xf32> to vector<16x256xf32>
    %13 = vector.shape_cast %10 : vector<16x256xf32> to vector<1x16x256xf32>
    tpu.vector_store %arg14[%c0_14, %c24, %c0_15], %13 {strides = array<i32>} : memref<1x88x256xf32, #tpu.memory_space<vmem>>, vector<1x16x256xf32>,
    %cst_16 = arith.constant 0.000000e+00 : f32
    %14 = vector.broadcast %cst_16 : f32 to vector<4x256xf32>
    %c17_i32 = arith.constant 17 : i32
    %15 = tpu.dynamic_rotate %1 by %c17_i32 dim 1 : vector<4x256xf32>, i32 -> vector<4x256xf32>
    %c1_i32 = arith.constant 1 : i32
    %16 = vector.broadcast %c1_i32 : i32 to vector<1x256xi32>
    %17 = arith.cmpi sge, %2, %16 : vector<1x256xi32>
    %c1_i32_17 = arith.constant 1 : i32
    %18 = vector.broadcast %c1_i32_17 : i32 to vector<1x256xi32>
    %19 = arith.cmpi sge, %3, %18 : vector<1x256xi32>
    %20 = arith.andi %17, %19 : vector<1x256xi1>
    %cst_18 = arith.constant 0.000000e+00 : f32
    %21 = vector.shape_cast %20 : vector<1x256xi1> to vector<1x256xi1>
    %22 = vector.broadcast %21 : vector<1x256xi1> to vector<4x256xi1>
    %23 = vector.broadcast %cst_18 : f32 to vector<4x256xf32>
    %24 = arith.select %22, %15, %23 : vector<4x256xi1>, vector<4x256xf32>
    %25 = arith.addf %14, %24 : vector<4x256xf32>
    %c16_i32 = arith.constant 16 : i32
    %26 = tpu.dynamic_rotate %1 by %c16_i32 dim 1 : vector<4x256xf32>, i32 -> vector<4x256xf32>
    %c1_i32_19 = arith.constant 1 : i32
    %27 = vector.broadcast %c1_i32_19 : i32 to vector<1x256xi32>
    %28 = arith.cmpi sge, %2, %27 : vector<1x256xi32>
    %cst_20 = arith.constant 0.000000e+00 : f32
    %29 = vector.shape_cast %28 : vector<1x256xi1> to vector<1x256xi1>
    %30 = vector.broadcast %29 : vector<1x256xi1> to vector<4x256xi1>
    %31 = vector.broadcast %cst_20 : f32 to vector<4x256xf32>
    %32 = arith.select %30, %26, %31 : vector<4x256xi1>, vector<4x256xf32>
    %33 = arith.addf %25, %32 : vector<4x256xf32>
    %c15_i32 = arith.constant 15 : i32
    %34 = tpu.dynamic_rotate %1 by %c15_i32 dim 1 : vector<4x256xf32>, i32 -> vector<4x256xf32>
    %c1_i32_21 = arith.constant 1 : i32
    %35 = vector.broadcast %c1_i32_21 : i32 to vector<1x256xi32>
    %36 = arith.cmpi sge, %2, %35 : vector<1x256xi32>
    %c15_i32_22 = arith.constant 15 : i32
    %37 = vector.broadcast %c15_i32_22 : i32 to vector<1x256xi32>
    %38 = arith.cmpi slt, %3, %37 : vector<1x256xi32>
    %39 = arith.andi %36, %38 : vector<1x256xi1>
    %cst_23 = arith.constant 0.000000e+00 : f32
    %40 = vector.shape_cast %39 : vector<1x256xi1> to vector<1x256xi1>
    %41 = vector.broadcast %40 : vector<1x256xi1> to vector<4x256xi1>
    %42 = vector.broadcast %cst_23 : f32 to vector<4x256xf32>
    %43 = arith.select %41, %34, %42 : vector<4x256xi1>, vector<4x256xf32>
    %44 = arith.addf %33, %43 : vector<4x256xf32>
    %c1_i32_24 = arith.constant 1 : i32
    %45 = tpu.dynamic_rotate %1 by %c1_i32_24 dim 1 : vector<4x256xf32>, i32 -> vector<4x256xf32>
    %c1_i32_25 = arith.constant 1 : i32
    %46 = vector.broadcast %c1_i32_25 : i32 to vector<1x256xi32>
    %47 = arith.cmpi sge, %3, %46 : vector<1x256xi32>
    %cst_26 = arith.constant 0.000000e+00 : f32
    %48 = vector.shape_cast %47 : vector<1x256xi1> to vector<1x256xi1>
    %49 = vector.broadcast %48 : vector<1x256xi1> to vector<4x256xi1>
    %50 = vector.broadcast %cst_26 : f32 to vector<4x256xf32>
    %51 = arith.select %49, %45, %50 : vector<4x256xi1>, vector<4x256xf32>
    %52 = arith.addf %44, %51 : vector<4x256xf32>
    %53 = arith.addf %52, %1 : vector<4x256xf32>
    %c255_i32 = arith.constant 255 : i32
    %54 = tpu.dynamic_rotate %1 by %c255_i32 dim 1 : vector<4x256xf32>, i32 -> vector<4x256xf32>
    %c15_i32_27 = arith.constant 15 : i32
    %55 = vector.broadcast %c15_i32_27 : i32 to vector<1x256xi32>
    %56 = arith.cmpi slt, %3, %55 : vector<1x256xi32>
    %cst_28 = arith.constant 0.000000e+00 : f32
    %57 = vector.shape_cast %56 : vector<1x256xi1> to vector<1x256xi1>
    %58 = vector.broadcast %57 : vector<1x256xi1> to vector<4x256xi1>
    %59 = vector.broadcast %cst_28 : f32 to vector<4x256xf32>
    %60 = arith.select %58, %54, %59 : vector<4x256xi1>, vector<4x256xf32>
    %61 = arith.addf %53, %60 : vector<4x256xf32>
    %c241_i32 = arith.constant 241 : i32
    %62 = tpu.dynamic_rotate %1 by %c241_i32 dim 1 : vector<4x256xf32>, i32 -> vector<4x256xf32>
    %c15_i32_29 = arith.constant 15 : i32
    %63 = vector.broadcast %c15_i32_29 : i32 to vector<1x256xi32>
    %64 = arith.cmpi slt, %2, %63 : vector<1x256xi32>
    %c1_i32_30 = arith.constant 1 : i32
    %65 = vector.broadcast %c1_i32_30 : i32 to vector<1x256xi32>
    %66 = arith.cmpi sge, %3, %65 : vector<1x256xi32>
    %67 = arith.andi %64, %66 : vector<1x256xi1>
    %cst_31 = arith.constant 0.000000e+00 : f32
    %68 = vector.shape_cast %67 : vector<1x256xi1> to vector<1x256xi1>
    %69 = vector.broadcast %68 : vector<1x256xi1> to vector<4x256xi1>
    %70 = vector.broadcast %cst_31 : f32 to vector<4x256xf32>
    %71 = arith.select %69, %62, %70 : vector<4x256xi1>, vector<4x256xf32>
    %72 = arith.addf %61, %71 : vector<4x256xf32>
    %c240_i32 = arith.constant 240 : i32
    %73 = tpu.dynamic_rotate %1 by %c240_i32 dim 1 : vector<4x256xf32>, i32 -> vector<4x256xf32>
    %c15_i32_32 = arith.constant 15 : i32
    %74 = vector.broadcast %c15_i32_32 : i32 to vector<1x256xi32>
    %75 = arith.cmpi slt, %2, %74 : vector<1x256xi32>
    %cst_33 = arith.constant 0.000000e+00 : f32
    %76 = vector.shape_cast %75 : vector<1x256xi1> to vector<1x256xi1>
    %77 = vector.broadcast %76 : vector<1x256xi1> to vector<4x256xi1>
    %78 = vector.broadcast %cst_33 : f32 to vector<4x256xf32>
    %79 = arith.select %77, %73, %78 : vector<4x256xi1>, vector<4x256xf32>
    %80 = arith.addf %72, %79 : vector<4x256xf32>
    %c239_i32 = arith.constant 239 : i32
    %81 = tpu.dynamic_rotate %1 by %c239_i32 dim 1 : vector<4x256xf32>, i32 -> vector<4x256xf32>
    %c15_i32_34 = arith.constant 15 : i32
    %82 = vector.broadcast %c15_i32_34 : i32 to vector<1x256xi32>
    %83 = arith.cmpi slt, %2, %82 : vector<1x256xi32>
    %c15_i32_35 = arith.constant 15 : i32
    %84 = vector.broadcast %c15_i32_35 : i32 to vector<1x256xi32>
    %85 = arith.cmpi slt, %3, %84 : vector<1x256xi32>
    %86 = arith.andi %83, %85 : vector<1x256xi1>
    %cst_36 = arith.constant 0.000000e+00 : f32
    %87 = vector.shape_cast %86 : vector<1x256xi1> to vector<1x256xi1>
    %88 = vector.broadcast %87 : vector<1x256xi1> to vector<4x256xi1>
    %89 = vector.broadcast %cst_36 : f32 to vector<4x256xf32>
    %90 = arith.select %88, %81, %89 : vector<4x256xi1>, vector<4x256xf32>
    %91 = arith.addf %80, %90 : vector<4x256xf32>
    %cst_37 = arith.constant 0.111111112 : f32
    %92 = vector.broadcast %cst_37 : f32 to vector<4x256xf32>
    %93 = arith.mulf %91, %92 : vector<4x256xf32>
    %c0_38 = arith.constant 0 : index
    %c0_39 = arith.constant 0 : index
    %94 = vector.load %arg6[%c0_38, %c0_39] : memref<24x4xf32, #tpu.memory_space<vmem>>, vector<24x4xf32>
    %cst_40 = arith.constant dense<0.000000e+00> : vector<24x256xf32>
    %95 = tpu.matmul %94, %93, %cst_40 {dimension_numbers = #tpu.dot_dimension_numbers<[1], [0], [0], [1], [0, 0, 1, 1], [], []>} : vector<24x4xf32>, vector<4x256xf32>, vector<24x256xf32> -> vector<24x256xf32>
    %c0_41 = arith.constant 0 : index
    %c0_42 = arith.constant 0 : index
    %96 = vector.load %arg7[%c0_41, %c0_42] : memref<24x1xf32, #tpu.memory_space<vmem>>, vector<24x1xf32>
    %97 = vector.broadcast %96 : vector<24x1xf32> to vector<24x256xf32>
    %98 = arith.addf %95, %97 : vector<24x256xf32>
    %c0_43 = arith.constant 0 : index
    %c0_44 = arith.constant 0 : index
    %c0_45 = arith.constant 0 : index
    %99 = vector.load %arg14[%c0_43, %c0_44, %c0_45] : memref<1x88x256xf32, #tpu.memory_space<vmem>>, vector<1x24x256xf32>
    %100 = vector.shape_cast %99 : vector<1x24x256xf32> to vector<24x256xf32>
    %101 = vector.shape_cast %98 : vector<24x256xf32> to vector<1x24x256xf32>
    tpu.vector_store %arg14[%c0_43, %c0_44, %c0_45], %101 {strides = array<i32>} : memref<1x88x256xf32, #tpu.memory_space<vmem>>, vector<1x24x256xf32>,
    %c16 = arith.constant 16 : index
    %c0_46 = arith.constant 0 : index
    %102 = vector.load %arg15[%c16, %c0_46] : memref<48x256xf32, #tpu.memory_space<vmem>>, vector<16x256xf32>
    %cst_47 = arith.constant 0.000000e+00 : f32
    %103 = vector.broadcast %cst_47 : f32 to vector<24x256xf32>
    %c34_i32 = arith.constant 34 : i32
    %104 = tpu.dynamic_rotate %102 by %c34_i32 dim 1 : vector<16x256xf32>, i32 -> vector<16x256xf32>
    %c2_i32 = arith.constant 2 : i32
    %105 = vector.broadcast %c2_i32 : i32 to vector<1x256xi32>
    %106 = arith.cmpi sge, %2, %105 : vector<1x256xi32>
    %c2_i32_48 = arith.constant 2 : i32
    %107 = vector.broadcast %c2_i32_48 : i32 to vector<1x256xi32>
    %108 = arith.cmpi sge, %3, %107 : vector<1x256xi32>
    %109 = arith.andi %106, %108 : vector<1x256xi1>
    %cst_49 = arith.constant 0.000000e+00 : f32
    %110 = vector.shape_cast %109 : vector<1x256xi1> to vector<1x256xi1>
    %111 = vector.broadcast %110 : vector<1x256xi1> to vector<16x256xi1>
    %112 = vector.broadcast %cst_49 : f32 to vector<16x256xf32>
    %113 = arith.select %111, %104, %112 : vector<16x256xi1>, vector<16x256xf32>
    %c33_i32 = arith.constant 33 : i32
    %114 = tpu.dynamic_rotate %102 by %c33_i32 dim 1 : vector<16x256xf32>, i32 -> vector<16x256xf32>
    %c2_i32_50 = arith.constant 2 : i32
    %115 = vector.broadcast %c2_i32_50 : i32 to vector<1x256xi32>
    %116 = arith.cmpi sge, %2, %115 : vector<1x256xi32>
    %c1_i32_51 = arith.constant 1 : i32
    %117 = vector.broadcast %c1_i32_51 : i32 to vector<1x256xi32>
    %118 = arith.cmpi sge, %3, %117 : vector<1x256xi32>
    %119 = arith.andi %116, %118 : vector<1x256xi1>
    %cst_52 = arith.constant 0.000000e+00 : f32
    %120 = vector.shape_cast %119 : vector<1x256xi1> to vector<1x256xi1>
    %121 = vector.broadcast %120 : vector<1x256xi1> to vector<16x256xi1>
    %122 = vector.broadcast %cst_52 : f32 to vector<16x256xf32>
    %123 = arith.select %121, %114, %122 : vector<16x256xi1>, vector<16x256xf32>
    %c32_i32 = arith.constant 32 : i32
    %124 = tpu.dynamic_rotate %102 by %c32_i32 dim 1 : vector<16x256xf32>, i32 -> vector<16x256xf32>
    %c2_i32_53 = arith.constant 2 : i32
    %125 = vector.broadcast %c2_i32_53 : i32 to vector<1x256xi32>
    %126 = arith.cmpi sge, %2, %125 : vector<1x256xi32>
    %cst_54 = arith.constant 0.000000e+00 : f32
    %127 = vector.shape_cast %126 : vector<1x256xi1> to vector<1x256xi1>
    %128 = vector.broadcast %127 : vector<1x256xi1> to vector<16x256xi1>
    %129 = vector.broadcast %cst_54 : f32 to vector<16x256xf32>
    %130 = arith.select %128, %124, %129 : vector<16x256xi1>, vector<16x256xf32>
    %c31_i32 = arith.constant 31 : i32
    %131 = tpu.dynamic_rotate %102 by %c31_i32 dim 1 : vector<16x256xf32>, i32 -> vector<16x256xf32>
    %c2_i32_55 = arith.constant 2 : i32
    %132 = vector.broadcast %c2_i32_55 : i32 to vector<1x256xi32>
    %133 = arith.cmpi sge, %2, %132 : vector<1x256xi32>
    %c15_i32_56 = arith.constant 15 : i32
    %134 = vector.broadcast %c15_i32_56 : i32 to vector<1x256xi32>
    %135 = arith.cmpi slt, %3, %134 : vector<1x256xi32>
    %136 = arith.andi %133, %135 : vector<1x256xi1>
    %cst_57 = arith.constant 0.000000e+00 : f32
    %137 = vector.shape_cast %136 : vector<1x256xi1> to vector<1x256xi1>
    %138 = vector.broadcast %137 : vector<1x256xi1> to vector<16x256xi1>
    %139 = vector.broadcast %cst_57 : f32 to vector<16x256xf32>
    %140 = arith.select %138, %131, %139 : vector<16x256xi1>, vector<16x256xf32>
    %c30_i32 = arith.constant 30 : i32
    %141 = tpu.dynamic_rotate %102 by %c30_i32 dim 1 : vector<16x256xf32>, i32 -> vector<16x256xf32>
    %c2_i32_58 = arith.constant 2 : i32
    %142 = vector.broadcast %c2_i32_58 : i32 to vector<1x256xi32>
    %143 = arith.cmpi sge, %2, %142 : vector<1x256xi32>
    %c14_i32 = arith.constant 14 : i32
    %144 = vector.broadcast %c14_i32 : i32 to vector<1x256xi32>
    %145 = arith.cmpi slt, %3, %144 : vector<1x256xi32>
    %146 = arith.andi %143, %145 : vector<1x256xi1>
    %cst_59 = arith.constant 0.000000e+00 : f32
    %147 = vector.shape_cast %146 : vector<1x256xi1> to vector<1x256xi1>
    %148 = vector.broadcast %147 : vector<1x256xi1> to vector<16x256xi1>
    %149 = vector.broadcast %cst_59 : f32 to vector<16x256xf32>
    %150 = arith.select %148, %141, %149 : vector<16x256xi1>, vector<16x256xf32>
    %151 = tpu.concatenate %113, %123, %130, %140, %150 in 0 : vector<16x256xf32>, vector<16x256xf32>, vector<16x256xf32>, vector<16x256xf32>, vector<16x256xf32> -> vector<80x256xf32>
    %c0_60 = arith.constant 0 : index
    %c0_61 = arith.constant 0 : index
    %c0_62 = arith.constant 0 : index
    %152 = vector.load %arg8[%c0_60, %c0_61, %c0_62] : memref<5x24x80xf32, #tpu.memory_space<vmem>>, vector<1x24x80xf32>
    %153 = vector.shape_cast %152 : vector<1x24x80xf32> to vector<24x80xf32>
    %cst_63 = arith.constant dense<0.000000e+00> : vector<24x256xf32>
    %154 = tpu.matmul %153, %151, %cst_63 {dimension_numbers = #tpu.dot_dimension_numbers<[1], [0], [0], [1], [0, 0, 1, 1], [], []>} : vector<24x80xf32>, vector<80x256xf32>, vector<24x256xf32> -> vector<24x256xf32>
    %155 = arith.addf %103, %154 : vector<24x256xf32>
    %c18_i32 = arith.constant 18 : i32
    %156 = tpu.dynamic_rotate %102 by %c18_i32 dim 1 : vector<16x256xf32>, i32 -> vector<16x256xf32>
    %c1_i32_64 = arith.constant 1 : i32
    %157 = vector.broadcast %c1_i32_64 : i32 to vector<1x256xi32>
    %158 = arith.cmpi sge, %2, %157 : vector<1x256xi32>
    %c2_i32_65 = arith.constant 2 : i32
    %159 = vector.broadcast %c2_i32_65 : i32 to vector<1x256xi32>
    %160 = arith.cmpi sge, %3, %159 : vector<1x256xi32>
    %161 = arith.andi %158, %160 : vector<1x256xi1>
    %cst_66 = arith.constant 0.000000e+00 : f32
    %162 = vector.shape_cast %161 : vector<1x256xi1> to vector<1x256xi1>
    %163 = vector.broadcast %162 : vector<1x256xi1> to vector<16x256xi1>
    %164 = vector.broadcast %cst_66 : f32 to vector<16x256xf32>
    %165 = arith.select %163, %156, %164 : vector<16x256xi1>, vector<16x256xf32>
    %c17_i32_67 = arith.constant 17 : i32
    %166 = tpu.dynamic_rotate %102 by %c17_i32_67 dim 1 : vector<16x256xf32>, i32 -> vector<16x256xf32>
    %c1_i32_68 = arith.constant 1 : i32
    %167 = vector.broadcast %c1_i32_68 : i32 to vector<1x256xi32>
    %168 = arith.cmpi sge, %2, %167 : vector<1x256xi32>
    %c1_i32_69 = arith.constant 1 : i32
    %169 = vector.broadcast %c1_i32_69 : i32 to vector<1x256xi32>
    %170 = arith.cmpi sge, %3, %169 : vector<1x256xi32>
    %171 = arith.andi %168, %170 : vector<1x256xi1>
    %cst_70 = arith.constant 0.000000e+00 : f32
    %172 = vector.shape_cast %171 : vector<1x256xi1> to vector<1x256xi1>
    %173 = vector.broadcast %172 : vector<1x256xi1> to vector<16x256xi1>
    %174 = vector.broadcast %cst_70 : f32 to vector<16x256xf32>
    %175 = arith.select %173, %166, %174 : vector<16x256xi1>, vector<16x256xf32>
    %c16_i32_71 = arith.constant 16 : i32
    %176 = tpu.dynamic_rotate %102 by %c16_i32_71 dim 1 : vector<16x256xf32>, i32 -> vector<16x256xf32>
    %c1_i32_72 = arith.constant 1 : i32
    %177 = vector.broadcast %c1_i32_72 : i32 to vector<1x256xi32>
    %178 = arith.cmpi sge, %2, %177 : vector<1x256xi32>
    %cst_73 = arith.constant 0.000000e+00 : f32
    %179 = vector.shape_cast %178 : vector<1x256xi1> to vector<1x256xi1>
    %180 = vector.broadcast %179 : vector<1x256xi1> to vector<16x256xi1>
    %181 = vector.broadcast %cst_73 : f32 to vector<16x256xf32>
    %182 = arith.select %180, %176, %181 : vector<16x256xi1>, vector<16x256xf32>
    %c15_i32_74 = arith.constant 15 : i32
    %183 = tpu.dynamic_rotate %102 by %c15_i32_74 dim 1 : vector<16x256xf32>, i32 -> vector<16x256xf32>
    %c1_i32_75 = arith.constant 1 : i32
    %184 = vector.broadcast %c1_i32_75 : i32 to vector<1x256xi32>
    %185 = arith.cmpi sge, %2, %184 : vector<1x256xi32>
    %c15_i32_76 = arith.constant 15 : i32
    %186 = vector.broadcast %c15_i32_76 : i32 to vector<1x256xi32>
    %187 = arith.cmpi slt, %3, %186 : vector<1x256xi32>
    %188 = arith.andi %185, %187 : vector<1x256xi1>
    %cst_77 = arith.constant 0.000000e+00 : f32
    %189 = vector.shape_cast %188 : vector<1x256xi1> to vector<1x256xi1>
    %190 = vector.broadcast %189 : vector<1x256xi1> to vector<16x256xi1>
    %191 = vector.broadcast %cst_77 : f32 to vector<16x256xf32>
    %192 = arith.select %190, %183, %191 : vector<16x256xi1>, vector<16x256xf32>
    %c14_i32_78 = arith.constant 14 : i32
    %193 = tpu.dynamic_rotate %102 by %c14_i32_78 dim 1 : vector<16x256xf32>, i32 -> vector<16x256xf32>
    %c1_i32_79 = arith.constant 1 : i32
    %194 = vector.broadcast %c1_i32_79 : i32 to vector<1x256xi32>
    %195 = arith.cmpi sge, %2, %194 : vector<1x256xi32>
    %c14_i32_80 = arith.constant 14 : i32
    %196 = vector.broadcast %c14_i32_80 : i32 to vector<1x256xi32>
    %197 = arith.cmpi slt, %3, %196 : vector<1x256xi32>
    %198 = arith.andi %195, %197 : vector<1x256xi1>
    %cst_81 = arith.constant 0.000000e+00 : f32
    %199 = vector.shape_cast %198 : vector<1x256xi1> to vector<1x256xi1>
    %200 = vector.broadcast %199 : vector<1x256xi1> to vector<16x256xi1>
    %201 = vector.broadcast %cst_81 : f32 to vector<16x256xf32>
    %202 = arith.select %200, %193, %201 : vector<16x256xi1>, vector<16x256xf32>
    %203 = tpu.concatenate %165, %175, %182, %192, %202 in 0 : vector<16x256xf32>, vector<16x256xf32>, vector<16x256xf32>, vector<16x256xf32>, vector<16x256xf32> -> vector<80x256xf32>
    %c1 = arith.constant 1 : index
    %c0_82 = arith.constant 0 : index
    %c0_83 = arith.constant 0 : index
    %204 = vector.load %arg8[%c1, %c0_82, %c0_83] : memref<5x24x80xf32, #tpu.memory_space<vmem>>, vector<1x24x80xf32>
    %205 = vector.shape_cast %204 : vector<1x24x80xf32> to vector<24x80xf32>
    %cst_84 = arith.constant dense<0.000000e+00> : vector<24x256xf32>
    %206 = tpu.matmul %205, %203, %cst_84 {dimension_numbers = #tpu.dot_dimension_numbers<[1], [0], [0], [1], [0, 0, 1, 1], [], []>} : vector<24x80xf32>, vector<80x256xf32>, vector<24x256xf32> -> vector<24x256xf32>
    %207 = arith.addf %155, %206 : vector<24x256xf32>
    %c2_i32_85 = arith.constant 2 : i32
    %208 = tpu.dynamic_rotate %102 by %c2_i32_85 dim 1 : vector<16x256xf32>, i32 -> vector<16x256xf32>
    %c2_i32_86 = arith.constant 2 : i32
    %209 = vector.broadcast %c2_i32_86 : i32 to vector<1x256xi32>
    %210 = arith.cmpi sge, %3, %209 : vector<1x256xi32>
    %cst_87 = arith.constant 0.000000e+00 : f32
    %211 = vector.shape_cast %210 : vector<1x256xi1> to vector<1x256xi1>
    %212 = vector.broadcast %211 : vector<1x256xi1> to vector<16x256xi1>
    %213 = vector.broadcast %cst_87 : f32 to vector<16x256xf32>
    %214 = arith.select %212, %208, %213 : vector<16x256xi1>, vector<16x256xf32>
    %c1_i32_88 = arith.constant 1 : i32
    %215 = tpu.dynamic_rotate %102 by %c1_i32_88 dim 1 : vector<16x256xf32>, i32 -> vector<16x256xf32>
    %c1_i32_89 = arith.constant 1 : i32
    %216 = vector.broadcast %c1_i32_89 : i32 to vector<1x256xi32>
    %217 = arith.cmpi sge, %3, %216 : vector<1x256xi32>
    %cst_90 = arith.constant 0.000000e+00 : f32
    %218 = vector.shape_cast %217 : vector<1x256xi1> to vector<1x256xi1>
    %219 = vector.broadcast %218 : vector<1x256xi1> to vector<16x256xi1>
    %220 = vector.broadcast %cst_90 : f32 to vector<16x256xf32>
    %221 = arith.select %219, %215, %220 : vector<16x256xi1>, vector<16x256xf32>
    %c255_i32_91 = arith.constant 255 : i32
    %222 = tpu.dynamic_rotate %102 by %c255_i32_91 dim 1 : vector<16x256xf32>, i32 -> vector<16x256xf32>
    %c15_i32_92 = arith.constant 15 : i32
    %223 = vector.broadcast %c15_i32_92 : i32 to vector<1x256xi32>
    %224 = arith.cmpi slt, %3, %223 : vector<1x256xi32>
    %cst_93 = arith.constant 0.000000e+00 : f32
    %225 = vector.shape_cast %224 : vector<1x256xi1> to vector<1x256xi1>
    %226 = vector.broadcast %225 : vector<1x256xi1> to vector<16x256xi1>
    %227 = vector.broadcast %cst_93 : f32 to vector<16x256xf32>
    %228 = arith.select %226, %222, %227 : vector<16x256xi1>, vector<16x256xf32>
    %c254_i32 = arith.constant 254 : i32
    %229 = tpu.dynamic_rotate %102 by %c254_i32 dim 1 : vector<16x256xf32>, i32 -> vector<16x256xf32>
    %c14_i32_94 = arith.constant 14 : i32
    %230 = vector.broadcast %c14_i32_94 : i32 to vector<1x256xi32>
    %231 = arith.cmpi slt, %3, %230 : vector<1x256xi32>
    %cst_95 = arith.constant 0.000000e+00 : f32
    %232 = vector.shape_cast %231 : vector<1x256xi1> to vector<1x256xi1>
    %233 = vector.broadcast %232 : vector<1x256xi1> to vector<16x256xi1>
    %234 = vector.broadcast %cst_95 : f32 to vector<16x256xf32>
    %235 = arith.select %233, %229, %234 : vector<16x256xi1>, vector<16x256xf32>
    %236 = tpu.concatenate %214, %221, %102, %228, %235 in 0 : vector<16x256xf32>, vector<16x256xf32>, vector<16x256xf32>, vector<16x256xf32>, vector<16x256xf32> -> vector<80x256xf32>
    %c2 = arith.constant 2 : index
    %c0_96 = arith.constant 0 : index
    %c0_97 = arith.constant 0 : index
    %237 = vector.load %arg8[%c2, %c0_96, %c0_97] : memref<5x24x80xf32, #tpu.memory_space<vmem>>, vector<1x24x80xf32>
    %238 = vector.shape_cast %237 : vector<1x24x80xf32> to vector<24x80xf32>
    %cst_98 = arith.constant dense<0.000000e+00> : vector<24x256xf32>
    %239 = tpu.matmul %238, %236, %cst_98 {dimension_numbers = #tpu.dot_dimension_numbers<[1], [0], [0], [1], [0, 0, 1, 1], [], []>} : vector<24x80xf32>, vector<80x256xf32>, vector<24x256xf32> -> vector<24x256xf32>
    %240 = arith.addf %207, %239 : vector<24x256xf32>
    %c242_i32 = arith.constant 242 : i32
    %241 = tpu.dynamic_rotate %102 by %c242_i32 dim 1 : vector<16x256xf32>, i32 -> vector<16x256xf32>
    %c15_i32_99 = arith.constant 15 : i32
    %242 = vector.broadcast %c15_i32_99 : i32 to vector<1x256xi32>
    %243 = arith.cmpi slt, %2, %242 : vector<1x256xi32>
    %c2_i32_100 = arith.constant 2 : i32
    %244 = vector.broadcast %c2_i32_100 : i32 to vector<1x256xi32>
    %245 = arith.cmpi sge, %3, %244 : vector<1x256xi32>
    %246 = arith.andi %243, %245 : vector<1x256xi1>
    %cst_101 = arith.constant 0.000000e+00 : f32
    %247 = vector.shape_cast %246 : vector<1x256xi1> to vector<1x256xi1>
    %248 = vector.broadcast %247 : vector<1x256xi1> to vector<16x256xi1>
    %249 = vector.broadcast %cst_101 : f32 to vector<16x256xf32>
    %250 = arith.select %248, %241, %249 : vector<16x256xi1>, vector<16x256xf32>
    %c241_i32_102 = arith.constant 241 : i32
    %251 = tpu.dynamic_rotate %102 by %c241_i32_102 dim 1 : vector<16x256xf32>, i32 -> vector<16x256xf32>
    %c15_i32_103 = arith.constant 15 : i32
    %252 = vector.broadcast %c15_i32_103 : i32 to vector<1x256xi32>
    %253 = arith.cmpi slt, %2, %252 : vector<1x256xi32>
    %c1_i32_104 = arith.constant 1 : i32
    %254 = vector.broadcast %c1_i32_104 : i32 to vector<1x256xi32>
    %255 = arith.cmpi sge, %3, %254 : vector<1x256xi32>
    %256 = arith.andi %253, %255 : vector<1x256xi1>
    %cst_105 = arith.constant 0.000000e+00 : f32
    %257 = vector.shape_cast %256 : vector<1x256xi1> to vector<1x256xi1>
    %258 = vector.broadcast %257 : vector<1x256xi1> to vector<16x256xi1>
    %259 = vector.broadcast %cst_105 : f32 to vector<16x256xf32>
    %260 = arith.select %258, %251, %259 : vector<16x256xi1>, vector<16x256xf32>
    %c240_i32_106 = arith.constant 240 : i32
    %261 = tpu.dynamic_rotate %102 by %c240_i32_106 dim 1 : vector<16x256xf32>, i32 -> vector<16x256xf32>
    %c15_i32_107 = arith.constant 15 : i32
    %262 = vector.broadcast %c15_i32_107 : i32 to vector<1x256xi32>
    %263 = arith.cmpi slt, %2, %262 : vector<1x256xi32>
    %cst_108 = arith.constant 0.000000e+00 : f32
    %264 = vector.shape_cast %263 : vector<1x256xi1> to vector<1x256xi1>
    %265 = vector.broadcast %264 : vector<1x256xi1> to vector<16x256xi1>
    %266 = vector.broadcast %cst_108 : f32 to vector<16x256xf32>
    %267 = arith.select %265, %261, %266 : vector<16x256xi1>, vector<16x256xf32>
    %c239_i32_109 = arith.constant 239 : i32
    %268 = tpu.dynamic_rotate %102 by %c239_i32_109 dim 1 : vector<16x256xf32>, i32 -> vector<16x256xf32>
    %c15_i32_110 = arith.constant 15 : i32
    %269 = vector.broadcast %c15_i32_110 : i32 to vector<1x256xi32>
    %270 = arith.cmpi slt, %2, %269 : vector<1x256xi32>
    %c15_i32_111 = arith.constant 15 : i32
    %271 = vector.broadcast %c15_i32_111 : i32 to vector<1x256xi32>
    %272 = arith.cmpi slt, %3, %271 : vector<1x256xi32>
    %273 = arith.andi %270, %272 : vector<1x256xi1>
    %cst_112 = arith.constant 0.000000e+00 : f32
    %274 = vector.shape_cast %273 : vector<1x256xi1> to vector<1x256xi1>
    %275 = vector.broadcast %274 : vector<1x256xi1> to vector<16x256xi1>
    %276 = vector.broadcast %cst_112 : f32 to vector<16x256xf32>
    %277 = arith.select %275, %268, %276 : vector<16x256xi1>, vector<16x256xf32>
    %c238_i32 = arith.constant 238 : i32
    %278 = tpu.dynamic_rotate %102 by %c238_i32 dim 1 : vector<16x256xf32>, i32 -> vector<16x256xf32>
    %c15_i32_113 = arith.constant 15 : i32
    %279 = vector.broadcast %c15_i32_113 : i32 to vector<1x256xi32>
    %280 = arith.cmpi slt, %2, %279 : vector<1x256xi32>
    %c14_i32_114 = arith.constant 14 : i32
    %281 = vector.broadcast %c14_i32_114 : i32 to vector<1x256xi32>
    %282 = arith.cmpi slt, %3, %281 : vector<1x256xi32>
    %283 = arith.andi %280, %282 : vector<1x256xi1>
    %cst_115 = arith.constant 0.000000e+00 : f32
    %284 = vector.shape_cast %283 : vector<1x256xi1> to vector<1x256xi1>
    %285 = vector.broadcast %284 : vector<1x256xi1> to vector<16x256xi1>
    %286 = vector.broadcast %cst_115 : f32 to vector<16x256xf32>
    %287 = arith.select %285, %278, %286 : vector<16x256xi1>, vector<16x256xf32>
    %288 = tpu.concatenate %250, %260, %267, %277, %287 in 0 : vector<16x256xf32>, vector<16x256xf32>, vector<16x256xf32>, vector<16x256xf32>, vector<16x256xf32> -> vector<80x256xf32>
    %c3 = arith.constant 3 : index
    %c0_116 = arith.constant 0 : index
    %c0_117 = arith.constant 0 : index
    %289 = vector.load %arg8[%c3, %c0_116, %c0_117] : memref<5x24x80xf32, #tpu.memory_space<vmem>>, vector<1x24x80xf32>
    %290 = vector.shape_cast %289 : vector<1x24x80xf32> to vector<24x80xf32>
    %cst_118 = arith.constant dense<0.000000e+00> : vector<24x256xf32>
    %291 = tpu.matmul %290, %288, %cst_118 {dimension_numbers = #tpu.dot_dimension_numbers<[1], [0], [0], [1], [0, 0, 1, 1], [], []>} : vector<24x80xf32>, vector<80x256xf32>, vector<24x256xf32> -> vector<24x256xf32>
    %292 = arith.addf %240, %291 : vector<24x256xf32>
    %c226_i32 = arith.constant 226 : i32
    %293 = tpu.dynamic_rotate %102 by %c226_i32 dim 1 : vector<16x256xf32>, i32 -> vector<16x256xf32>
    %c14_i32_119 = arith.constant 14 : i32
    %294 = vector.broadcast %c14_i32_119 : i32 to vector<1x256xi32>
    %295 = arith.cmpi slt, %2, %294 : vector<1x256xi32>
    %c2_i32_120 = arith.constant 2 : i32
    %296 = vector.broadcast %c2_i32_120 : i32 to vector<1x256xi32>
    %297 = arith.cmpi sge, %3, %296 : vector<1x256xi32>
    %298 = arith.andi %295, %297 : vector<1x256xi1>
    %cst_121 = arith.constant 0.000000e+00 : f32
    %299 = vector.shape_cast %298 : vector<1x256xi1> to vector<1x256xi1>
    %300 = vector.broadcast %299 : vector<1x256xi1> to vector<16x256xi1>
    %301 = vector.broadcast %cst_121 : f32 to vector<16x256xf32>
    %302 = arith.select %300, %293, %301 : vector<16x256xi1>, vector<16x256xf32>
    %c225_i32 = arith.constant 225 : i32
    %303 = tpu.dynamic_rotate %102 by %c225_i32 dim 1 : vector<16x256xf32>, i32 -> vector<16x256xf32>
    %c14_i32_122 = arith.constant 14 : i32
    %304 = vector.broadcast %c14_i32_122 : i32 to vector<1x256xi32>
    %305 = arith.cmpi slt, %2, %304 : vector<1x256xi32>
    %c1_i32_123 = arith.constant 1 : i32
    %306 = vector.broadcast %c1_i32_123 : i32 to vector<1x256xi32>
    %307 = arith.cmpi sge, %3, %306 : vector<1x256xi32>
    %308 = arith.andi %305, %307 : vector<1x256xi1>
    %cst_124 = arith.constant 0.000000e+00 : f32
    %309 = vector.shape_cast %308 : vector<1x256xi1> to vector<1x256xi1>
    %310 = vector.broadcast %309 : vector<1x256xi1> to vector<16x256xi1>
    %311 = vector.broadcast %cst_124 : f32 to vector<16x256xf32>
    %312 = arith.select %310, %303, %311 : vector<16x256xi1>, vector<16x256xf32>
    %c224_i32 = arith.constant 224 : i32
    %313 = tpu.dynamic_rotate %102 by %c224_i32 dim 1 : vector<16x256xf32>, i32 -> vector<16x256xf32>
    %c14_i32_125 = arith.constant 14 : i32
    %314 = vector.broadcast %c14_i32_125 : i32 to vector<1x256xi32>
    %315 = arith.cmpi slt, %2, %314 : vector<1x256xi32>
    %cst_126 = arith.constant 0.000000e+00 : f32
    %316 = vector.shape_cast %315 : vector<1x256xi1> to vector<1x256xi1>
    %317 = vector.broadcast %316 : vector<1x256xi1> to vector<16x256xi1>
    %318 = vector.broadcast %cst_126 : f32 to vector<16x256xf32>
    %319 = arith.select %317, %313, %318 : vector<16x256xi1>, vector<16x256xf32>
    %c223_i32 = arith.constant 223 : i32
    %320 = tpu.dynamic_rotate %102 by %c223_i32 dim 1 : vector<16x256xf32>, i32 -> vector<16x256xf32>
    %c14_i32_127 = arith.constant 14 : i32
    %321 = vector.broadcast %c14_i32_127 : i32 to vector<1x256xi32>
    %322 = arith.cmpi slt, %2, %321 : vector<1x256xi32>
    %c15_i32_128 = arith.constant 15 : i32
    %323 = vector.broadcast %c15_i32_128 : i32 to vector<1x256xi32>
    %324 = arith.cmpi slt, %3, %323 : vector<1x256xi32>
    %325 = arith.andi %322, %324 : vector<1x256xi1>
    %cst_129 = arith.constant 0.000000e+00 : f32
    %326 = vector.shape_cast %325 : vector<1x256xi1> to vector<1x256xi1>
    %327 = vector.broadcast %326 : vector<1x256xi1> to vector<16x256xi1>
    %328 = vector.broadcast %cst_129 : f32 to vector<16x256xf32>
    %329 = arith.select %327, %320, %328 : vector<16x256xi1>, vector<16x256xf32>
    %c222_i32 = arith.constant 222 : i32
    %330 = tpu.dynamic_rotate %102 by %c222_i32 dim 1 : vector<16x256xf32>, i32 -> vector<16x256xf32>
    %c14_i32_130 = arith.constant 14 : i32
    %331 = vector.broadcast %c14_i32_130 : i32 to vector<1x256xi32>
    %332 = arith.cmpi slt, %2, %331 : vector<1x256xi32>
    %c14_i32_131 = arith.constant 14 : i32
    %333 = vector.broadcast %c14_i32_131 : i32 to vector<1x256xi32>
    %334 = arith.cmpi slt, %3, %333 : vector<1x256xi32>
    %335 = arith.andi %332, %334 : vector<1x256xi1>
    %cst_132 = arith.constant 0.000000e+00 : f32
    %336 = vector.shape_cast %335 : vector<1x256xi1> to vector<1x256xi1>
    %337 = vector.broadcast %336 : vector<1x256xi1> to vector<16x256xi1>
    %338 = vector.broadcast %cst_132 : f32 to vector<16x256xf32>
    %339 = arith.select %337, %330, %338 : vector<16x256xi1>, vector<16x256xf32>
    %340 = tpu.concatenate %302, %312, %319, %329, %339 in 0 : vector<16x256xf32>, vector<16x256xf32>, vector<16x256xf32>, vector<16x256xf32>, vector<16x256xf32> -> vector<80x256xf32>
    %c4 = arith.constant 4 : index
    %c0_133 = arith.constant 0 : index
    %c0_134 = arith.constant 0 : index
    %341 = vector.load %arg8[%c4, %c0_133, %c0_134] : memref<5x24x80xf32, #tpu.memory_space<vmem>>, vector<1x24x80xf32>
    %342 = vector.shape_cast %341 : vector<1x24x80xf32> to vector<24x80xf32>
    %cst_135 = arith.constant dense<0.000000e+00> : vector<24x256xf32>
    %343 = tpu.matmul %342, %340, %cst_135 {dimension_numbers = #tpu.dot_dimension_numbers<[1], [0], [0], [1], [0, 0, 1, 1], [], []>} : vector<24x80xf32>, vector<80x256xf32>, vector<24x256xf32> -> vector<24x256xf32>
    %344 = arith.addf %292, %343 : vector<24x256xf32>
    %c0_136 = arith.constant 0 : index
    %c0_137 = arith.constant 0 : index
    %345 = vector.load %arg9[%c0_136, %c0_137] : memref<24x1xf32, #tpu.memory_space<vmem>>, vector<24x1xf32>
    %346 = vector.broadcast %345 : vector<24x1xf32> to vector<24x256xf32>
    %347 = arith.addf %344, %346 : vector<24x256xf32>
    %c0_138 = arith.constant 0 : index
    %c40 = arith.constant 40 : index
    %c0_139 = arith.constant 0 : index
    %348 = vector.load %arg14[%c0_138, %c40, %c0_139] : memref<1x88x256xf32, #tpu.memory_space<vmem>>, vector<1x24x256xf32>
    %349 = vector.shape_cast %348 : vector<1x24x256xf32> to vector<24x256xf32>
    %350 = vector.shape_cast %347 : vector<24x256xf32> to vector<1x24x256xf32>
    tpu.vector_store %arg14[%c0_138, %c40, %c0_139], %350 {strides = array<i32>} : memref<1x88x256xf32, #tpu.memory_space<vmem>>, vector<1x24x256xf32>,
    %c32 = arith.constant 32 : index
    %c0_140 = arith.constant 0 : index
    %351 = vector.load %arg15[%c32, %c0_140] : memref<48x256xf32, #tpu.memory_space<vmem>>, vector<16x256xf32>
    %cst_141 = arith.constant 0.000000e+00 : f32
    %352 = vector.broadcast %cst_141 : f32 to vector<24x256xf32>
    %c17_i32_142 = arith.constant 17 : i32
    %353 = tpu.dynamic_rotate %351 by %c17_i32_142 dim 1 : vector<16x256xf32>, i32 -> vector<16x256xf32>
    %c1_i32_143 = arith.constant 1 : i32
    %354 = vector.broadcast %c1_i32_143 : i32 to vector<1x256xi32>
    %355 = arith.cmpi sge, %2, %354 : vector<1x256xi32>
    %c1_i32_144 = arith.constant 1 : i32
    %356 = vector.broadcast %c1_i32_144 : i32 to vector<1x256xi32>
    %357 = arith.cmpi sge, %3, %356 : vector<1x256xi32>
    %358 = arith.andi %355, %357 : vector<1x256xi1>
    %cst_145 = arith.constant 0.000000e+00 : f32
    %359 = vector.shape_cast %358 : vector<1x256xi1> to vector<1x256xi1>
    %360 = vector.broadcast %359 : vector<1x256xi1> to vector<16x256xi1>
    %361 = vector.broadcast %cst_145 : f32 to vector<16x256xf32>
    %362 = arith.select %360, %353, %361 : vector<16x256xi1>, vector<16x256xf32>
    %c16_i32_146 = arith.constant 16 : i32
    %363 = tpu.dynamic_rotate %351 by %c16_i32_146 dim 1 : vector<16x256xf32>, i32 -> vector<16x256xf32>
    %c1_i32_147 = arith.constant 1 : i32
    %364 = vector.broadcast %c1_i32_147 : i32 to vector<1x256xi32>
    %365 = arith.cmpi sge, %2, %364 : vector<1x256xi32>
    %cst_148 = arith.constant 0.000000e+00 : f32
    %366 = vector.shape_cast %365 : vector<1x256xi1> to vector<1x256xi1>
    %367 = vector.broadcast %366 : vector<1x256xi1> to vector<16x256xi1>
    %368 = vector.broadcast %cst_148 : f32 to vector<16x256xf32>
    %369 = arith.select %367, %363, %368 : vector<16x256xi1>, vector<16x256xf32>
    %c15_i32_149 = arith.constant 15 : i32
    %370 = tpu.dynamic_rotate %351 by %c15_i32_149 dim 1 : vector<16x256xf32>, i32 -> vector<16x256xf32>
    %c1_i32_150 = arith.constant 1 : i32
    %371 = vector.broadcast %c1_i32_150 : i32 to vector<1x256xi32>
    %372 = arith.cmpi sge, %2, %371 : vector<1x256xi32>
    %c15_i32_151 = arith.constant 15 : i32
    %373 = vector.broadcast %c15_i32_151 : i32 to vector<1x256xi32>
    %374 = arith.cmpi slt, %3, %373 : vector<1x256xi32>
    %375 = arith.andi %372, %374 : vector<1x256xi1>
    %cst_152 = arith.constant 0.000000e+00 : f32
    %376 = vector.shape_cast %375 : vector<1x256xi1> to vector<1x256xi1>
    %377 = vector.broadcast %376 : vector<1x256xi1> to vector<16x256xi1>
    %378 = vector.broadcast %cst_152 : f32 to vector<16x256xf32>
    %379 = arith.select %377, %370, %378 : vector<16x256xi1>, vector<16x256xf32>
    %380 = tpu.concatenate %362, %369, %379 in 0 : vector<16x256xf32>, vector<16x256xf32>, vector<16x256xf32> -> vector<48x256xf32>
    %c0_153 = arith.constant 0 : index
    %c0_154 = arith.constant 0 : index
    %c0_155 = arith.constant 0 : index
    %381 = vector.load %arg10[%c0_153, %c0_154, %c0_155] : memref<3x24x48xf32, #tpu.memory_space<vmem>>, vector<1x24x48xf32>
    %382 = vector.shape_cast %381 : vector<1x24x48xf32> to vector<24x48xf32>
    %cst_156 = arith.constant dense<0.000000e+00> : vector<24x256xf32>
    %383 = tpu.matmul %382, %380, %cst_156 {dimension_numbers = #tpu.dot_dimension_numbers<[1], [0], [0], [1], [0, 0, 1, 1], [], []>} : vector<24x48xf32>, vector<48x256xf32>, vector<24x256xf32> -> vector<24x256xf32>
    %384 = arith.addf %352, %383 : vector<24x256xf32>
    %c1_i32_157 = arith.constant 1 : i32
    %385 = tpu.dynamic_rotate %351 by %c1_i32_157 dim 1 : vector<16x256xf32>, i32 -> vector<16x256xf32>
    %c1_i32_158 = arith.constant 1 : i32
    %386 = vector.broadcast %c1_i32_158 : i32 to vector<1x256xi32>
    %387 = arith.cmpi sge, %3, %386 : vector<1x256xi32>
    %cst_159 = arith.constant 0.000000e+00 : f32
    %388 = vector.shape_cast %387 : vector<1x256xi1> to vector<1x256xi1>
    %389 = vector.broadcast %388 : vector<1x256xi1> to vector<16x256xi1>
    %390 = vector.broadcast %cst_159 : f32 to vector<16x256xf32>
    %391 = arith.select %389, %385, %390 : vector<16x256xi1>, vector<16x256xf32>
    %c255_i32_160 = arith.constant 255 : i32
    %392 = tpu.dynamic_rotate %351 by %c255_i32_160 dim 1 : vector<16x256xf32>, i32 -> vector<16x256xf32>
    %c15_i32_161 = arith.constant 15 : i32
    %393 = vector.broadcast %c15_i32_161 : i32 to vector<1x256xi32>
    %394 = arith.cmpi slt, %3, %393 : vector<1x256xi32>
    %cst_162 = arith.constant 0.000000e+00 : f32
    %395 = vector.shape_cast %394 : vector<1x256xi1> to vector<1x256xi1>
    %396 = vector.broadcast %395 : vector<1x256xi1> to vector<16x256xi1>
    %397 = vector.broadcast %cst_162 : f32 to vector<16x256xf32>
    %398 = arith.select %396, %392, %397 : vector<16x256xi1>, vector<16x256xf32>
    %399 = tpu.concatenate %391, %351, %398 in 0 : vector<16x256xf32>, vector<16x256xf32>, vector<16x256xf32> -> vector<48x256xf32>
    %c1_163 = arith.constant 1 : index
    %c0_164 = arith.constant 0 : index
    %c0_165 = arith.constant 0 : index
    %400 = vector.load %arg10[%c1_163, %c0_164, %c0_165] : memref<3x24x48xf32, #tpu.memory_space<vmem>>, vector<1x24x48xf32>
    %401 = vector.shape_cast %400 : vector<1x24x48xf32> to vector<24x48xf32>
    %cst_166 = arith.constant dense<0.000000e+00> : vector<24x256xf32>
    %402 = tpu.matmul %401, %399, %cst_166 {dimension_numbers = #tpu.dot_dimension_numbers<[1], [0], [0], [1], [0, 0, 1, 1], [], []>} : vector<24x48xf32>, vector<48x256xf32>, vector<24x256xf32> -> vector<24x256xf32>
    %403 = arith.addf %384, %402 : vector<24x256xf32>
    %c241_i32_167 = arith.constant 241 : i32
    %404 = tpu.dynamic_rotate %351 by %c241_i32_167 dim 1 : vector<16x256xf32>, i32 -> vector<16x256xf32>
    %c15_i32_168 = arith.constant 15 : i32
    %405 = vector.broadcast %c15_i32_168 : i32 to vector<1x256xi32>
    %406 = arith.cmpi slt, %2, %405 : vector<1x256xi32>
    %c1_i32_169 = arith.constant 1 : i32
    %407 = vector.broadcast %c1_i32_169 : i32 to vector<1x256xi32>
    %408 = arith.cmpi sge, %3, %407 : vector<1x256xi32>
    %409 = arith.andi %406, %408 : vector<1x256xi1>
    %cst_170 = arith.constant 0.000000e+00 : f32
    %410 = vector.shape_cast %409 : vector<1x256xi1> to vector<1x256xi1>
    %411 = vector.broadcast %410 : vector<1x256xi1> to vector<16x256xi1>
    %412 = vector.broadcast %cst_170 : f32 to vector<16x256xf32>
    %413 = arith.select %411, %404, %412 : vector<16x256xi1>, vector<16x256xf32>
    %c240_i32_171 = arith.constant 240 : i32
    %414 = tpu.dynamic_rotate %351 by %c240_i32_171 dim 1 : vector<16x256xf32>, i32 -> vector<16x256xf32>
    %c15_i32_172 = arith.constant 15 : i32
    %415 = vector.broadcast %c15_i32_172 : i32 to vector<1x256xi32>
    %416 = arith.cmpi slt, %2, %415 : vector<1x256xi32>
    %cst_173 = arith.constant 0.000000e+00 : f32
    %417 = vector.shape_cast %416 : vector<1x256xi1> to vector<1x256xi1>
    %418 = vector.broadcast %417 : vector<1x256xi1> to vector<16x256xi1>
    %419 = vector.broadcast %cst_173 : f32 to vector<16x256xf32>
    %420 = arith.select %418, %414, %419 : vector<16x256xi1>, vector<16x256xf32>
    %c239_i32_174 = arith.constant 239 : i32
    %421 = tpu.dynamic_rotate %351 by %c239_i32_174 dim 1 : vector<16x256xf32>, i32 -> vector<16x256xf32>
    %c15_i32_175 = arith.constant 15 : i32
    %422 = vector.broadcast %c15_i32_175 : i32 to vector<1x256xi32>
    %423 = arith.cmpi slt, %2, %422 : vector<1x256xi32>
    %c15_i32_176 = arith.constant 15 : i32
    %424 = vector.broadcast %c15_i32_176 : i32 to vector<1x256xi32>
    %425 = arith.cmpi slt, %3, %424 : vector<1x256xi32>
    %426 = arith.andi %423, %425 : vector<1x256xi1>
    %cst_177 = arith.constant 0.000000e+00 : f32
    %427 = vector.shape_cast %426 : vector<1x256xi1> to vector<1x256xi1>
    %428 = vector.broadcast %427 : vector<1x256xi1> to vector<16x256xi1>
    %429 = vector.broadcast %cst_177 : f32 to vector<16x256xf32>
    %430 = arith.select %428, %421, %429 : vector<16x256xi1>, vector<16x256xf32>
    %431 = tpu.concatenate %413, %420, %430 in 0 : vector<16x256xf32>, vector<16x256xf32>, vector<16x256xf32> -> vector<48x256xf32>
    %c2_178 = arith.constant 2 : index
    %c0_179 = arith.constant 0 : index
    %c0_180 = arith.constant 0 : index
    %432 = vector.load %arg10[%c2_178, %c0_179, %c0_180] : memref<3x24x48xf32, #tpu.memory_space<vmem>>, vector<1x24x48xf32>
    %433 = vector.shape_cast %432 : vector<1x24x48xf32> to vector<24x48xf32>
    %cst_181 = arith.constant dense<0.000000e+00> : vector<24x256xf32>
    %434 = tpu.matmul %433, %431, %cst_181 {dimension_numbers = #tpu.dot_dimension_numbers<[1], [0], [0], [1], [0, 0, 1, 1], [], []>} : vector<24x48xf32>, vector<48x256xf32>, vector<24x256xf32> -> vector<24x256xf32>
    %435 = arith.addf %403, %434 : vector<24x256xf32>
    %c0_182 = arith.constant 0 : index
    %c0_183 = arith.constant 0 : index
    %436 = vector.load %arg11[%c0_182, %c0_183] : memref<24x1xf32, #tpu.memory_space<vmem>>, vector<24x1xf32>
    %437 = vector.broadcast %436 : vector<24x1xf32> to vector<24x256xf32>
    %438 = arith.addf %435, %437 : vector<24x256xf32>
    %cst_184 = arith.constant 0.000000e+00 : f32
    %439 = vector.broadcast %cst_184 : f32 to vector<24x256xf32>
    %c17_i32_185 = arith.constant 17 : i32
    %440 = tpu.dynamic_rotate %438 by %c17_i32_185 dim 1 : vector<24x256xf32>, i32 -> vector<24x256xf32>
    %c1_i32_186 = arith.constant 1 : i32
    %441 = vector.broadcast %c1_i32_186 : i32 to vector<1x256xi32>
    %442 = arith.cmpi sge, %2, %441 : vector<1x256xi32>
    %c1_i32_187 = arith.constant 1 : i32
    %443 = vector.broadcast %c1_i32_187 : i32 to vector<1x256xi32>
    %444 = arith.cmpi sge, %3, %443 : vector<1x256xi32>
    %445 = arith.andi %442, %444 : vector<1x256xi1>
    %cst_188 = arith.constant 0.000000e+00 : f32
    %446 = vector.shape_cast %445 : vector<1x256xi1> to vector<1x256xi1>
    %447 = vector.broadcast %446 : vector<1x256xi1> to vector<24x256xi1>
    %448 = vector.broadcast %cst_188 : f32 to vector<24x256xf32>
    %449 = arith.select %447, %440, %448 : vector<24x256xi1>, vector<24x256xf32>
    %c16_i32_189 = arith.constant 16 : i32
    %450 = tpu.dynamic_rotate %438 by %c16_i32_189 dim 1 : vector<24x256xf32>, i32 -> vector<24x256xf32>
    %c1_i32_190 = arith.constant 1 : i32
    %451 = vector.broadcast %c1_i32_190 : i32 to vector<1x256xi32>
    %452 = arith.cmpi sge, %2, %451 : vector<1x256xi32>
    %cst_191 = arith.constant 0.000000e+00 : f32
    %453 = vector.shape_cast %452 : vector<1x256xi1> to vector<1x256xi1>
    %454 = vector.broadcast %453 : vector<1x256xi1> to vector<24x256xi1>
    %455 = vector.broadcast %cst_191 : f32 to vector<24x256xf32>
    %456 = arith.select %454, %450, %455 : vector<24x256xi1>, vector<24x256xf32>
    %c15_i32_192 = arith.constant 15 : i32
    %457 = tpu.dynamic_rotate %438 by %c15_i32_192 dim 1 : vector<24x256xf32>, i32 -> vector<24x256xf32>
    %c1_i32_193 = arith.constant 1 : i32
    %458 = vector.broadcast %c1_i32_193 : i32 to vector<1x256xi32>
    %459 = arith.cmpi sge, %2, %458 : vector<1x256xi32>
    %c15_i32_194 = arith.constant 15 : i32
    %460 = vector.broadcast %c15_i32_194 : i32 to vector<1x256xi32>
    %461 = arith.cmpi slt, %3, %460 : vector<1x256xi32>
    %462 = arith.andi %459, %461 : vector<1x256xi1>
    %cst_195 = arith.constant 0.000000e+00 : f32
    %463 = vector.shape_cast %462 : vector<1x256xi1> to vector<1x256xi1>
    %464 = vector.broadcast %463 : vector<1x256xi1> to vector<24x256xi1>
    %465 = vector.broadcast %cst_195 : f32 to vector<24x256xf32>
    %466 = arith.select %464, %457, %465 : vector<24x256xi1>, vector<24x256xf32>
    %467 = tpu.concatenate %449, %456, %466 in 0 : vector<24x256xf32>, vector<24x256xf32>, vector<24x256xf32> -> vector<72x256xf32>
    %c0_196 = arith.constant 0 : index
    %c0_197 = arith.constant 0 : index
    %c0_198 = arith.constant 0 : index
    %468 = vector.load %arg12[%c0_196, %c0_197, %c0_198] : memref<3x24x72xf32, #tpu.memory_space<vmem>>, vector<1x24x72xf32>
    %469 = vector.shape_cast %468 : vector<1x24x72xf32> to vector<24x72xf32>
    %cst_199 = arith.constant dense<0.000000e+00> : vector<24x256xf32>
    %470 = tpu.matmul %469, %467, %cst_199 {dimension_numbers = #tpu.dot_dimension_numbers<[1], [0], [0], [1], [0, 0, 1, 1], [], []>} : vector<24x72xf32>, vector<72x256xf32>, vector<24x256xf32> -> vector<24x256xf32>
    %471 = arith.addf %439, %470 : vector<24x256xf32>
    %c1_i32_200 = arith.constant 1 : i32
    %472 = tpu.dynamic_rotate %438 by %c1_i32_200 dim 1 : vector<24x256xf32>, i32 -> vector<24x256xf32>
    %c1_i32_201 = arith.constant 1 : i32
    %473 = vector.broadcast %c1_i32_201 : i32 to vector<1x256xi32>
    %474 = arith.cmpi sge, %3, %473 : vector<1x256xi32>
    %cst_202 = arith.constant 0.000000e+00 : f32
    %475 = vector.shape_cast %474 : vector<1x256xi1> to vector<1x256xi1>
    %476 = vector.broadcast %475 : vector<1x256xi1> to vector<24x256xi1>
    %477 = vector.broadcast %cst_202 : f32 to vector<24x256xf32>
    %478 = arith.select %476, %472, %477 : vector<24x256xi1>, vector<24x256xf32>
    %c255_i32_203 = arith.constant 255 : i32
    %479 = tpu.dynamic_rotate %438 by %c255_i32_203 dim 1 : vector<24x256xf32>, i32 -> vector<24x256xf32>
    %c15_i32_204 = arith.constant 15 : i32
    %480 = vector.broadcast %c15_i32_204 : i32 to vector<1x256xi32>
    %481 = arith.cmpi slt, %3, %480 : vector<1x256xi32>
    %cst_205 = arith.constant 0.000000e+00 : f32
    %482 = vector.shape_cast %481 : vector<1x256xi1> to vector<1x256xi1>
    %483 = vector.broadcast %482 : vector<1x256xi1> to vector<24x256xi1>
    %484 = vector.broadcast %cst_205 : f32 to vector<24x256xf32>
    %485 = arith.select %483, %479, %484 : vector<24x256xi1>, vector<24x256xf32>
    %486 = tpu.concatenate %478, %438, %485 in 0 : vector<24x256xf32>, vector<24x256xf32>, vector<24x256xf32> -> vector<72x256xf32>
    %c1_206 = arith.constant 1 : index
    %c0_207 = arith.constant 0 : index
    %c0_208 = arith.constant 0 : index
    %487 = vector.load %arg12[%c1_206, %c0_207, %c0_208] : memref<3x24x72xf32, #tpu.memory_space<vmem>>, vector<1x24x72xf32>
    %488 = vector.shape_cast %487 : vector<1x24x72xf32> to vector<24x72xf32>
    %cst_209 = arith.constant dense<0.000000e+00> : vector<24x256xf32>
    %489 = tpu.matmul %488, %486, %cst_209 {dimension_numbers = #tpu.dot_dimension_numbers<[1], [0], [0], [1], [0, 0, 1, 1], [], []>} : vector<24x72xf32>, vector<72x256xf32>, vector<24x256xf32> -> vector<24x256xf32>
    %490 = arith.addf %471, %489 : vector<24x256xf32>
    %c241_i32_210 = arith.constant 241 : i32
    %491 = tpu.dynamic_rotate %438 by %c241_i32_210 dim 1 : vector<24x256xf32>, i32 -> vector<24x256xf32>
    %c15_i32_211 = arith.constant 15 : i32
    %492 = vector.broadcast %c15_i32_211 : i32 to vector<1x256xi32>
    %493 = arith.cmpi slt, %2, %492 : vector<1x256xi32>
    %c1_i32_212 = arith.constant 1 : i32
    %494 = vector.broadcast %c1_i32_212 : i32 to vector<1x256xi32>
    %495 = arith.cmpi sge, %3, %494 : vector<1x256xi32>
    %496 = arith.andi %493, %495 : vector<1x256xi1>
    %cst_213 = arith.constant 0.000000e+00 : f32
    %497 = vector.shape_cast %496 : vector<1x256xi1> to vector<1x256xi1>
    %498 = vector.broadcast %497 : vector<1x256xi1> to vector<24x256xi1>
    %499 = vector.broadcast %cst_213 : f32 to vector<24x256xf32>
    %500 = arith.select %498, %491, %499 : vector<24x256xi1>, vector<24x256xf32>
    %c240_i32_214 = arith.constant 240 : i32
    %501 = tpu.dynamic_rotate %438 by %c240_i32_214 dim 1 : vector<24x256xf32>, i32 -> vector<24x256xf32>
    %c15_i32_215 = arith.constant 15 : i32
    %502 = vector.broadcast %c15_i32_215 : i32 to vector<1x256xi32>
    %503 = arith.cmpi slt, %2, %502 : vector<1x256xi32>
    %cst_216 = arith.constant 0.000000e+00 : f32
    %504 = vector.shape_cast %503 : vector<1x256xi1> to vector<1x256xi1>
    %505 = vector.broadcast %504 : vector<1x256xi1> to vector<24x256xi1>
    %506 = vector.broadcast %cst_216 : f32 to vector<24x256xf32>
    %507 = arith.select %505, %501, %506 : vector<24x256xi1>, vector<24x256xf32>
    %c239_i32_217 = arith.constant 239 : i32
    %508 = tpu.dynamic_rotate %438 by %c239_i32_217 dim 1 : vector<24x256xf32>, i32 -> vector<24x256xf32>
    %c15_i32_218 = arith.constant 15 : i32
    %509 = vector.broadcast %c15_i32_218 : i32 to vector<1x256xi32>
    %510 = arith.cmpi slt, %2, %509 : vector<1x256xi32>
    %c15_i32_219 = arith.constant 15 : i32
    %511 = vector.broadcast %c15_i32_219 : i32 to vector<1x256xi32>
    %512 = arith.cmpi slt, %3, %511 : vector<1x256xi32>
    %513 = arith.andi %510, %512 : vector<1x256xi1>
    %cst_220 = arith.constant 0.000000e+00 : f32
    %514 = vector.shape_cast %513 : vector<1x256xi1> to vector<1x256xi1>
    %515 = vector.broadcast %514 : vector<1x256xi1> to vector<24x256xi1>
    %516 = vector.broadcast %cst_220 : f32 to vector<24x256xf32>
    %517 = arith.select %515, %508, %516 : vector<24x256xi1>, vector<24x256xf32>
    %518 = tpu.concatenate %500, %507, %517 in 0 : vector<24x256xf32>, vector<24x256xf32>, vector<24x256xf32> -> vector<72x256xf32>
    %c2_221 = arith.constant 2 : index
    %c0_222 = arith.constant 0 : index
    %c0_223 = arith.constant 0 : index
    %519 = vector.load %arg12[%c2_221, %c0_222, %c0_223] : memref<3x24x72xf32, #tpu.memory_space<vmem>>, vector<1x24x72xf32>
    %520 = vector.shape_cast %519 : vector<1x24x72xf32> to vector<24x72xf32>
    %cst_224 = arith.constant dense<0.000000e+00> : vector<24x256xf32>
    %521 = tpu.matmul %520, %518, %cst_224 {dimension_numbers = #tpu.dot_dimension_numbers<[1], [0], [0], [1], [0, 0, 1, 1], [], []>} : vector<24x72xf32>, vector<72x256xf32>, vector<24x256xf32> -> vector<24x256xf32>
    %522 = arith.addf %490, %521 : vector<24x256xf32>
    %c0_225 = arith.constant 0 : index
    %c0_226 = arith.constant 0 : index
    %523 = vector.load %arg13[%c0_225, %c0_226] : memref<24x1xf32, #tpu.memory_space<vmem>>, vector<24x1xf32>
    %524 = vector.broadcast %523 : vector<24x1xf32> to vector<24x256xf32>
    %525 = arith.addf %522, %524 : vector<24x256xf32>
    %c0_227 = arith.constant 0 : index
    %c64 = arith.constant 64 : index
    %c0_228 = arith.constant 0 : index
    %526 = vector.load %arg14[%c0_227, %c64, %c0_228] : memref<1x88x256xf32, #tpu.memory_space<vmem>>, vector<1x24x256xf32>
    %527 = vector.shape_cast %526 : vector<1x24x256xf32> to vector<24x256xf32>
    %528 = vector.shape_cast %525 : vector<24x256xf32> to vector<1x24x256xf32>
    tpu.vector_store %arg14[%c0_227, %c64, %c0_228], %528 {strides = array<i32>} : memref<1x88x256xf32, #tpu.memory_space<vmem>>, vector<1x24x256xf32>,
    return
  }
  func.func @transform_0(%arg0: i32) -> (i32, i32, i32) {
    %c0_i32 = arith.constant 0 : i32
    %c0_i32_0 = arith.constant 0 : i32
    %c0_i32_1 = arith.constant 0 : i32
    return %arg0, %c0_i32, %c0_i32_0 : i32, i32, i32
  }
  func.func @transform_1(%arg0: i32) -> (i32, i32) {
    %c0_i32 = arith.constant 0 : i32
    %c0_i32_0 = arith.constant 0 : i32
    %c0_i32_1 = arith.constant 0 : i32
    return %c0_i32, %c0_i32_0 : i32, i32
  }
  func.func @transform_2(%arg0: i32) -> (i32, i32) {
    %c0_i32 = arith.constant 0 : i32
    %c0_i32_0 = arith.constant 0 : i32
    %c0_i32_1 = arith.constant 0 : i32
    return %c0_i32, %c0_i32_0 : i32, i32
  }
  func.func @transform_3(%arg0: i32) -> (i32, i32) {
    %c0_i32 = arith.constant 0 : i32
    %c0_i32_0 = arith.constant 0 : i32
    %c0_i32_1 = arith.constant 0 : i32
    return %c0_i32, %c0_i32_0 : i32, i32
  }
  func.func @transform_4(%arg0: i32) -> (i32, i32) {
    %c0_i32 = arith.constant 0 : i32
    %c0_i32_0 = arith.constant 0 : i32
    %c0_i32_1 = arith.constant 0 : i32
    return %c0_i32, %c0_i32_0 : i32, i32
  }
  func.func @transform_5(%arg0: i32) -> (i32, i32) {
    %c0_i32 = arith.constant 0 : i32
    %c0_i32_0 = arith.constant 0 : i32
    %c0_i32_1 = arith.constant 0 : i32
    return %c0_i32, %c0_i32_0 : i32, i32
  }
  func.func @transform_6(%arg0: i32) -> (i32, i32) {
    %c0_i32 = arith.constant 0 : i32
    %c0_i32_0 = arith.constant 0 : i32
    %c0_i32_1 = arith.constant 0 : i32
    return %c0_i32, %c0_i32_0 : i32, i32
  }
  func.func @transform_7(%arg0: i32) -> (i32, i32, i32) {
    %c0_i32 = arith.constant 0 : i32
    %c0_i32_0 = arith.constant 0 : i32
    %c0_i32_1 = arith.constant 0 : i32
    %c0_i32_2 = arith.constant 0 : i32
    return %c0_i32, %c0_i32_0, %c0_i32_1 : i32, i32, i32
  }
  func.func @transform_8(%arg0: i32) -> (i32, i32) {
    %c0_i32 = arith.constant 0 : i32
    %c0_i32_0 = arith.constant 0 : i32
    %c0_i32_1 = arith.constant 0 : i32
    return %c0_i32, %c0_i32_0 : i32, i32
  }
  func.func @transform_9(%arg0: i32) -> (i32, i32, i32) {
    %c0_i32 = arith.constant 0 : i32
    %c0_i32_0 = arith.constant 0 : i32
    %c0_i32_1 = arith.constant 0 : i32
    %c0_i32_2 = arith.constant 0 : i32
    return %c0_i32, %c0_i32_0, %c0_i32_1 : i32, i32, i32
  }
  func.func @transform_10(%arg0: i32) -> (i32, i32) {
    %c0_i32 = arith.constant 0 : i32
    %c0_i32_0 = arith.constant 0 : i32
    %c0_i32_1 = arith.constant 0 : i32
    return %c0_i32, %c0_i32_0 : i32, i32
  }
  func.func @transform_11(%arg0: i32) -> (i32, i32, i32) {
    %c0_i32 = arith.constant 0 : i32
    %c0_i32_0 = arith.constant 0 : i32
    %c0_i32_1 = arith.constant 0 : i32
    %c0_i32_2 = arith.constant 0 : i32
    return %c0_i32, %c0_i32_0, %c0_i32_1 : i32, i32, i32
  }
  func.func @transform_12(%arg0: i32) -> (i32, i32) {
    %c0_i32 = arith.constant 0 : i32
    %c0_i32_0 = arith.constant 0 : i32
    %c0_i32_1 = arith.constant 0 : i32
    return %c0_i32, %c0_i32_0 : i32, i32
  }
  func.func @transform_13(%arg0: i32) -> (i32, i32, i32) {
    %c0_i32 = arith.constant 0 : i32
    %c0_i32_0 = arith.constant 0 : i32
    %c0_i32_1 = arith.constant 0 : i32
    return %arg0, %c0_i32, %c0_i32_0 : i32, i32, i32
  }
}

</mosaic_0001>

<llo_original>
// kernel: tpu_custom_call.1
$region0: #{tpu_custom_call.1}
  #allocation0 [shape = 'u32[]', space=smem, size = 0x4, offset = 0x4, fixed_abs, tag = 'smem constant byte address 0x4 - core index']
  #allocation1 [shape = 'u32[72,128]{1,0:T(1,128)}', space=vmem, size = 0x9000, scoped, tag = 'internal scratch']
  #allocation2 [shape = 'f32[48,256]{1,0:T(8,128)}', space=vmem, size = 0xc000, scoped, tag = 'scratch operand']
  %s0 = inlined_call_operand.vmem [shape: f32[2,4,256], index: 0, kind: input, shape index: {}]
  %s1 = inlined_call_operand.vmem [shape: s32[1,256], index: 1, kind: input, shape index: {}]
  %s2 = inlined_call_operand.vmem [shape: s32[1,256], index: 2, kind: input, shape index: {}]
  %s3 = inlined_call_operand.vmem [shape: f32[48,4], index: 3, kind: input, shape index: {}]
  %s4 = inlined_call_operand.vmem [shape: f32[48,1], index: 4, kind: input, shape index: {}]
  %s5 = inlined_call_operand.vmem [shape: f32[24,4], index: 5, kind: input, shape index: {}]
  %s6 = inlined_call_operand.vmem [shape: f32[24,1], index: 6, kind: input, shape index: {}]
  %s7 = inlined_call_operand.hbm [shape: f32[5,24,80], index: 7, kind: input, shape index: {}]
  %s8 = inlined_call_operand.vmem [shape: f32[24,1], index: 8, kind: input, shape index: {}]
  %s9 = inlined_call_operand.vmem [shape: f32[3,24,48], index: 9, kind: input, shape index: {}]
  %s10 = inlined_call_operand.vmem [shape: f32[24,1], index: 10, kind: input, shape index: {}]
  %s11 = inlined_call_operand.hbm [shape: f32[3,24,72], index: 11, kind: input, shape index: {}]
  %s12 = inlined_call_operand.vmem [shape: f32[24,1], index: 12, kind: input, shape index: {}]
  %s13 = inlined_call_operand.hbm [shape: f32[2,88,256], index: 13, kind: output, shape index: {}]
  %s14 = sld [smem:[#allocation0]]
  $region93: #{tpu_custom_call.1} parent=0
    _
  %s16 = ssub.s32 1, %s14
  %s17 = scalar_select 0, %s16, %s14
  $region1: #{tpu_custom_call.1} parent=0
    #allocation3 [shape = 'u8[61440]{0}', space=vmem, size = 0xf000, scoped, tag = 'input window, operand 7, single buffered']
    #allocation4 [shape = 's32[2]{0}', space=sflag, size = 0x8, scoped, tag = 'scoped memory for tpu_custom_call.1']
    #allocation5 [shape = 's32[2]{0}', space=sflag, size = 0x8, scoped, tag = 'scoped memory for tpu_custom_call.1']
    #allocation6 [shape = 'u8[36864]{0}', space=vmem, size = 0x9000, scoped, tag = 'input window, operand 11, single buffered']
    #allocation7 [shape = 's32[1]{0}', space=sflag, size = 0x4, scoped, tag = 'scoped memory for tpu_custom_call.1']
    #allocation8 [shape = 'u8[180224]{0}', space=vmem, size = 0x2c000, scoped, tag = 'output window, operand 0']
    %18 = vsyncpa [#allocation4], 0
    %19 = vsyncpa [#allocation7], 0
    %20 = vsyncpa [#allocation5], 0
    %s21 = scalar_lea.sflag [#allocation5], 1
    %22 = vsyncpa %s21, 0
    loop: start=0, step=1, limit=4
    $region2: #{tpu_custom_call.1} parent=1 // loop_pre_header
      _
    $region3: #{tpu_custom_call.1} parent=1 // loop_header
      %s24 = sphi 0, %s28
      %p25 = scmp.ge.s32.totalorder %s24, 4
      %s34 = sphi 0, %s36
      %s37 = sphi 0, %s34
      %s38 = sphi 0, %s37
      %s54 = sphi 0, %s38
      %s58 = sphi 0, %s58
      %s60 = sphi 0, %s58
      %s61 = sphi 0, %s60
      %s75 = sphi 0, %s61
      %s79 = sphi 0, %s79
      %s81 = sphi 0, %s79
      %s82 = sphi 0, %s81
      %s96 = sphi 0, %s82
      %s100 = sphi 0, %s100
      %s102 = sphi 0, %s100
      %s103 = sphi 0, %s102
      %s117 = sphi 0, %s103
      %s121 = sphi 0, %s121
      %s123 = sphi 0, %s121
      %s124 = sphi 0, %s123
      %s138 = sphi 0, %s124
      %s142 = sphi 0, %s142
      %s144 = sphi 0, %s142
      %s145 = sphi 0, %s144
      %s159 = sphi 0, %s145
      %s163 = sphi 0, %s163
      %s165 = sphi 0, %s163
      %s166 = sphi 0, %s165
      %s180 = sphi 0, %s166
      %s184 = sphi 0, %s184
      %s186 = sphi 0, %s184
      %s187 = sphi 0, %s186
      %s201 = sphi 0, %s187
      %s205 = sphi 0, %s205
      %s207 = sphi 0, %s205
      %s208 = sphi 0, %s207
      %s222 = sphi 0, %s208
      %s226 = sphi 0, %s226
      %s228 = sphi 0, %s226
      %s229 = sphi 0, %s228
      %s243 = sphi 0, %s229
      %s247 = sphi 0, %s247
      %s249 = sphi 0, %s247
      %s250 = sphi 0, %s249
      %s264 = sphi 0, %s250
      %s268 = sphi 0, %s268
      %s270 = sphi 0, %s268
      %s271 = sphi 0, %s270
      %s285 = sphi 0, %s271
      %s289 = sphi 0, %s289
      %s291 = sphi 0, %s289
      %s292 = sphi 0, %s291
      %s306 = sphi 0, %s292
      %s312 = sphi 0, %s314
      %s315 = sphi 0, %s312
      %s316 = sphi 0, %s315
      %s332 = sphi 0, %s316
    $region4: #{tpu_custom_call.1} parent=1 // loop_header_branch
      %27 = sbr.rel (%p25) target = $region8
    $region5: #{tpu_custom_call.1} parent=1 // loop_body
      %s29 = ssub.s32 %s24, 1
      %s30 = ssub.s32 %s24, 2
      %s31 = sadd.s32 %s24, 1
      %s32 = ssub.s32 %s24, %s31
      %p33 = scmp.eq.s32.totalorder %s32, 0
      %s35 = sadd.s32 %s34, 1
      %s36 = scalar_select %p33, %s34, %s35
      %p39 = pneg %p33
      %p40 = scmp.eq.s32.totalorder %s24, 1
      %p41 = por %p39, %p40
      %p42 = scmp.ne.s32.totalorder %s34, %s37
      %p43 = scmp.eq.s32.totalorder %s24, 0
      %p44 = por %p42, %p43
      %p45 = scmp.ne.s32.totalorder %s34, %s37
      %p46 = scmp.eq.s32.totalorder %s29, 1
      %p47 = por %p45, %p46
      %p48 = scmp.ne.s32.totalorder %s37, %s38
      %p49 = scmp.eq.s32.totalorder %s29, 0
      %p50 = por %p48, %p49
      %p51 = scmp.ne.s32.totalorder %s37, %s38
      %p52 = scmp.eq.s32.totalorder %s30, 1
      %p53 = por %p51, %p52
      %p55 = scmp.ne.s32.totalorder %s38, %s54
      %p56 = scmp.eq.s32.totalorder %s30, 0
      %p57 = por %p55, %p56
      %s59 = sadd.s32 %s58, 1
      %p62 = scmp.eq.s32.totalorder %s24, 1
      %p63 = scmp.ne.s32.totalorder %s58, %s60
      %p64 = scmp.eq.s32.totalorder %s24, 0
      %p65 = por %p63, %p64
      %p66 = scmp.ne.s32.totalorder %s58, %s60
      %p67 = scmp.eq.s32.totalorder %s29, 1
      %p68 = por %p66, %p67
      %p69 = scmp.ne.s32.totalorder %s60, %s61
      %p70 = scmp.eq.s32.totalorder %s29, 0
      %p71 = por %p69, %p70
      %p72 = scmp.ne.s32.totalorder %s60, %s61
      %p73 = scmp.eq.s32.totalorder %s30, 1
      %p74 = por %p72, %p73
      %p76 = scmp.ne.s32.totalorder %s61, %s75
      %p77 = scmp.eq.s32.totalorder %s30, 0
      %p78 = por %p76, %p77
      %s80 = sadd.s32 %s79, 1
      %p83 = scmp.eq.s32.totalorder %s24, 1
      %p84 = scmp.ne.s32.totalorder %s79, %s81
      %p85 = scmp.eq.s32.totalorder %s24, 0
      %p86 = por %p84, %p85
      %p87 = scmp.ne.s32.totalorder %s79, %s81
      %p88 = scmp.eq.s32.totalorder %s29, 1
      %p89 = por %p87, %p88
      %p90 = scmp.ne.s32.totalorder %s81, %s82
      %p91 = scmp.eq.s32.totalorder %s29, 0
      %p92 = por %p90, %p91
      %p93 = scmp.ne.s32.totalorder %s81, %s82
      %p94 = scmp.eq.s32.totalorder %s30, 1
      %p95 = por %p93, %p94
      %p97 = scmp.ne.s32.totalorder %s82, %s96
      %p98 = scmp.eq.s32.totalorder %s30, 0
      %p99 = por %p97, %p98
      %s101 = sadd.s32 %s100, 1
      %p104 = scmp.eq.s32.totalorder %s24, 1
      %p105 = scmp.ne.s32.totalorder %s100, %s102
      %p106 = scmp.eq.s32.totalorder %s24, 0
      %p107 = por %p105, %p106
      %p108 = scmp.ne.s32.totalorder %s100, %s102
      %p109 = scmp.eq.s32.totalorder %s29, 1
      %p110 = por %p108, %p109
      %p111 = scmp.ne.s32.totalorder %s102, %s103
      %p112 = scmp.eq.s32.totalorder %s29, 0
      %p113 = por %p111, %p112
      %p114 = scmp.ne.s32.totalorder %s102, %s103
      %p115 = scmp.eq.s32.totalorder %s30, 1
      %p116 = por %p114, %p115
      %p118 = scmp.ne.s32.totalorder %s103, %s117
      %p119 = scmp.eq.s32.totalorder %s30, 0
      %p120 = por %p118, %p119
      %s122 = sadd.s32 %s121, 1
      %p125 = scmp.eq.s32.totalorder %s24, 1
      %p126 = scmp.ne.s32.totalorder %s121, %s123
      %p127 = scmp.eq.s32.totalorder %s24, 0
      %p128 = por %p126, %p127
      %p129 = scmp.ne.s32.totalorder %s121, %s123
      %p130 = scmp.eq.s32.totalorder %s29, 1
      %p131 = por %p129, %p130
      %p132 = scmp.ne.s32.totalorder %s123, %s124
      %p133 = scmp.eq.s32.totalorder %s29, 0
      %p134 = por %p132, %p133
      %p135 = scmp.ne.s32.totalorder %s123, %s124
      %p136 = scmp.eq.s32.totalorder %s30, 1
      %p137 = por %p135, %p136
      %p139 = scmp.ne.s32.totalorder %s124, %s138
      %p140 = scmp.eq.s32.totalorder %s30, 0
      %p141 = por %p139, %p140
      %s143 = sadd.s32 %s142, 1
      %p146 = scmp.eq.s32.totalorder %s24, 1
      %p147 = scmp.ne.s32.totalorder %s142, %s144
      %p148 = scmp.eq.s32.totalorder %s24, 0
      %p149 = por %p147, %p148
      %p150 = scmp.ne.s32.totalorder %s142, %s144
      %p151 = scmp.eq.s32.totalorder %s29, 1
      %p152 = por %p150, %p151
      %p153 = scmp.ne.s32.totalorder %s144, %s145
      %p154 = scmp.eq.s32.totalorder %s29, 0
      %p155 = por %p153, %p154
      %p156 = scmp.ne.s32.totalorder %s144, %s145
      %p157 = scmp.eq.s32.totalorder %s30, 1
      %p158 = por %p156, %p157
      %p160 = scmp.ne.s32.totalorder %s145, %s159
      %p161 = scmp.eq.s32.totalorder %s30, 0
      %p162 = por %p160, %p161
      %s164 = sadd.s32 %s163, 1
      %p167 = scmp.eq.s32.totalorder %s24, 1
      %p168 = scmp.ne.s32.totalorder %s163, %s165
      %p169 = scmp.eq.s32.totalorder %s24, 0
      %p170 = por %p168, %p169
      %p171 = scmp.ne.s32.totalorder %s163, %s165
      %p172 = scmp.eq.s32.totalorder %s29, 1
      %p173 = por %p171, %p172
      %p174 = scmp.ne.s32.totalorder %s165, %s166
      %p175 = scmp.eq.s32.totalorder %s29, 0
      %p176 = por %p174, %p175
      %p177 = scmp.ne.s32.totalorder %s165, %s166
      %p178 = scmp.eq.s32.totalorder %s30, 1
      %p179 = por %p177, %p178
      %p181 = scmp.ne.s32.totalorder %s166, %s180
      %p182 = scmp.eq.s32.totalorder %s30, 0
      %p183 = por %p181, %p182
      %s185 = sadd.s32 %s184, 1
      %p188 = scmp.eq.s32.totalorder %s24, 1
      %p189 = scmp.ne.s32.totalorder %s184, %s186
      %p190 = scmp.eq.s32.totalorder %s24, 0
      %p191 = por %p189, %p190
      %p192 = scmp.ne.s32.totalorder %s184, %s186
      %p193 = scmp.eq.s32.totalorder %s29, 1
      %p194 = por %p192, %p193
      %p195 = scmp.ne.s32.totalorder %s186, %s187
      %p196 = scmp.eq.s32.totalorder %s29, 0
      %p197 = por %p195, %p196
      %p198 = scmp.ne.s32.totalorder %s186, %s187
      %p199 = scmp.eq.s32.totalorder %s30, 1
      %p200 = por %p198, %p199
      %p202 = scmp.ne.s32.totalorder %s187, %s201
      %p203 = scmp.eq.s32.totalorder %s30, 0
      %p204 = por %p202, %p203
      %s206 = sadd.s32 %s205, 1
      %p209 = scmp.eq.s32.totalorder %s24, 1
      %p210 = scmp.ne.s32.totalorder %s205, %s207
      %p211 = scmp.eq.s32.totalorder %s24, 0
      %p212 = por %p210, %p211
      %p213 = scmp.ne.s32.totalorder %s205, %s207
      %p214 = scmp.eq.s32.totalorder %s29, 1
      %p215 = por %p213, %p214
      %p216 = scmp.ne.s32.totalorder %s207, %s208
      %p217 = scmp.eq.s32.totalorder %s29, 0
      %p218 = por %p216, %p217
      %p219 = scmp.ne.s32.totalorder %s207, %s208
      %p220 = scmp.eq.s32.totalorder %s30, 1
      %p221 = por %p219, %p220
      %p223 = scmp.ne.s32.totalorder %s208, %s222
      %p224 = scmp.eq.s32.totalorder %s30, 0
      %p225 = por %p223, %p224
      %s227 = sadd.s32 %s226, 1
      %p230 = scmp.eq.s32.totalorder %s24, 1
      %p231 = scmp.ne.s32.totalorder %s226, %s228
      %p232 = scmp.eq.s32.totalorder %s24, 0
      %p233 = por %p231, %p232
      %p234 = scmp.ne.s32.totalorder %s226, %s228
      %p235 = scmp.eq.s32.totalorder %s29, 1
      %p236 = por %p234, %p235
      %p237 = scmp.ne.s32.totalorder %s228, %s229
      %p238 = scmp.eq.s32.totalorder %s29, 0
      %p239 = por %p237, %p238
      %p240 = scmp.ne.s32.totalorder %s228, %s229
      %p241 = scmp.eq.s32.totalorder %s30, 1
      %p242 = por %p240, %p241
      %p244 = scmp.ne.s32.totalorder %s229, %s243
      %p245 = scmp.eq.s32.totalorder %s30, 0
      %p246 = por %p244, %p245
      %s248 = sadd.s32 %s247, 1
      %p251 = scmp.eq.s32.totalorder %s24, 1
      %p252 = scmp.ne.s32.totalorder %s247, %s249
      %p253 = scmp.eq.s32.totalorder %s24, 0
      %p254 = por %p252, %p253
      %p255 = scmp.ne.s32.totalorder %s247, %s249
      %p256 = scmp.eq.s32.totalorder %s29, 1
      %p257 = por %p255, %p256
      %p258 = scmp.ne.s32.totalorder %s249, %s250
      %p259 = scmp.eq.s32.totalorder %s29, 0
      %p260 = por %p258, %p259
      %p261 = scmp.ne.s32.totalorder %s249, %s250
      %p262 = scmp.eq.s32.totalorder %s30, 1
      %p263 = por %p261, %p262
      %p265 = scmp.ne.s32.totalorder %s250, %s264
      %p266 = scmp.eq.s32.totalorder %s30, 0
      %p267 = por %p265, %p266
      %s269 = sadd.s32 %s268, 1
      %p272 = scmp.eq.s32.totalorder %s24, 1
      %p273 = scmp.ne.s32.totalorder %s268, %s270
      %p274 = scmp.eq.s32.totalorder %s24, 0
      %p275 = por %p273, %p274
      %p276 = scmp.ne.s32.totalorder %s268, %s270
      %p277 = scmp.eq.s32.totalorder %s29, 1
      %p278 = por %p276, %p277
      %p279 = scmp.ne.s32.totalorder %s270, %s271
      %p280 = scmp.eq.s32.totalorder %s29, 0
      %p281 = por %p279, %p280
      %p282 = scmp.ne.s32.totalorder %s270, %s271
      %p283 = scmp.eq.s32.totalorder %s30, 1
      %p284 = por %p282, %p283
      %p286 = scmp.ne.s32.totalorder %s271, %s285
      %p287 = scmp.eq.s32.totalorder %s30, 0
      %p288 = por %p286, %p287
      %s290 = sadd.s32 %s289, 1
      %p293 = scmp.eq.s32.totalorder %s24, 1
      %p294 = scmp.ne.s32.totalorder %s289, %s291
      %p295 = scmp.eq.s32.totalorder %s24, 0
      %p296 = por %p294, %p295
      %p297 = scmp.ne.s32.totalorder %s289, %s291
      %p298 = scmp.eq.s32.totalorder %s29, 1
      %p299 = por %p297, %p298
      %p300 = scmp.ne.s32.totalorder %s291, %s292
      %p301 = scmp.eq.s32.totalorder %s29, 0
      %p302 = por %p300, %p301
      %p303 = scmp.ne.s32.totalorder %s291, %s292
      %p304 = scmp.eq.s32.totalorder %s30, 1
      %p305 = por %p303, %p304
      %p307 = scmp.ne.s32.totalorder %s292, %s306
      %p308 = scmp.eq.s32.totalorder %s30, 0
      %p309 = por %p307, %p308
      %s310 = ssub.s32 %s24, %s31
      %p311 = scmp.eq.s32.totalorder %s310, 0
      %s313 = sadd.s32 %s312, 1
      %s314 = scalar_select %p311, %s312, %s313
      %p317 = pneg %p311
      %p318 = scmp.eq.s32.totalorder %s24, 1
      %p319 = por %p317, %p318
      %p320 = scmp.ne.s32.totalorder %s312, %s315
      %p321 = scmp.eq.s32.totalorder %s24, 0
      %p322 = por %p320, %p321
      %p323 = scmp.ne.s32.totalorder %s312, %s315
      %p324 = scmp.eq.s32.totalorder %s29, 1
      %p325 = por %p323, %p324
      %p326 = scmp.ne.s32.totalorder %s315, %s316
      %p327 = scmp.eq.s32.totalorder %s29, 0
      %p328 = por %p326, %p327
      %p329 = scmp.ne.s32.totalorder %s315, %s316
      %p330 = scmp.eq.s32.totalorder %s30, 1
      %p331 = por %p329, %p330
      %p333 = scmp.ne.s32.totalorder %s316, %s332
      %p334 = scmp.eq.s32.totalorder %s30, 0
      %p335 = por %p333, %p334
      %p336 = scmp.le.s32.totalorder 1, %s24
      %p337 = scmp.lt.s32.totalorder %s24, 3
      %p338 = pnand %p336, %p337
      %p339 = pneg %p338
      // Predicated region
      $region9: #{tpu_custom_call.1} parent=5 // pred_check
        _
      $region10: #{tpu_custom_call.1} parent=5 // pred_check_branch
        %341 = sbr.rel (%p338) target = $region12
      $region11: #{tpu_custom_call.1} parent=5 // pred_region
        %s342 = ssub.s32 %s24, 1
        // Predicated region
        $region13: #{tpu_custom_call.1} parent=11 // pred_check
          %p343 = pneg %p71
        $region14: #{tpu_custom_call.1} parent=11 // pred_check_branch
          %345 = sbr.rel (%p343) target = $region16
        $region15: #{tpu_custom_call.1} parent=11 // pred_region
          _
        $region16: #{tpu_custom_call.1} parent=11 // pred_fallthru
          _
        // Predicated region
        $region17: #{tpu_custom_call.1} parent=11 // pred_check
          %p346 = pneg %p92
        $region18: #{tpu_custom_call.1} parent=11 // pred_check_branch
          %348 = sbr.rel (%p346) target = $region20
        $region19: #{tpu_custom_call.1} parent=11 // pred_region
          _
        $region20: #{tpu_custom_call.1} parent=11 // pred_fallthru
          _
        // Predicated region
        $region21: #{tpu_custom_call.1} parent=11 // pred_check
          %p349 = pneg %p113
        $region22: #{tpu_custom_call.1} parent=11 // pred_check_branch
          %351 = sbr.rel (%p349) target = $region24
        $region23: #{tpu_custom_call.1} parent=11 // pred_region
          _
        $region24: #{tpu_custom_call.1} parent=11 // pred_fallthru
          _
        // Predicated region
        $region25: #{tpu_custom_call.1} parent=11 // pred_check
          %p352 = pneg %p134
        $region26: #{tpu_custom_call.1} parent=11 // pred_check_branch
          %354 = sbr.rel (%p352) target = $region28
        $region27: #{tpu_custom_call.1} parent=11 // pred_region
          _
        $region28: #{tpu_custom_call.1} parent=11 // pred_fallthru
          _
        // Predicated region
        $region29: #{tpu_custom_call.1} parent=11 // pred_check
          %p355 = pneg %p155
        $region30: #{tpu_custom_call.1} parent=11 // pred_check_branch
          %357 = sbr.rel (%p355) target = $region32
        $region31: #{tpu_custom_call.1} parent=11 // pred_region
          _
        $region32: #{tpu_custom_call.1} parent=11 // pred_fallthru
          _
        // Predicated region
        $region33: #{tpu_custom_call.1} parent=11 // pred_check
          %p358 = pneg %p176
        $region34: #{tpu_custom_call.1} parent=11 // pred_check_branch
          %360 = sbr.rel (%p358) target = $region36
        $region35: #{tpu_custom_call.1} parent=11 // pred_region
          _
        $region36: #{tpu_custom_call.1} parent=11 // pred_fallthru
          _
        // Predicated region
        $region37: #{tpu_custom_call.1} parent=11 // pred_check
          %p361 = pneg %p197
        $region38: #{tpu_custom_call.1} parent=11 // pred_check_branch
          %363 = sbr.rel (%p361) target = $region40
        $region39: #{tpu_custom_call.1} parent=11 // pred_region
          %365 = vsyncadd [#allocation4], 0
          %s366 = sshll.u32 %s7, 4
          %s367 = int_to_ptr.hbm [resolvable:$true] %s366
          %s368 = sshll.u32 [#allocation3], 4
          %s369 = int_to_ptr.vmem [resolvable:$true] %s368
          %374 = dma.hbm_to_vmem [thread:$0]  %s367, 1920, %s369, [#allocation4], 128, 128, 8
        $region40: #{tpu_custom_call.1} parent=11 // pred_fallthru
          _
        // Predicated region
        $region41: #{tpu_custom_call.1} parent=11 // pred_check
          %p375 = pneg %p218
        $region42: #{tpu_custom_call.1} parent=11 // pred_check_branch
          %377 = sbr.rel (%p375) target = $region44
        $region43: #{tpu_custom_call.1} parent=11 // pred_region
          _
        $region44: #{tpu_custom_call.1} parent=11 // pred_fallthru
          _
        // Predicated region
        $region45: #{tpu_custom_call.1} parent=11 // pred_check
          %p378 = pneg %p239
        $region46: #{tpu_custom_call.1} parent=11 // pred_check_branch
          %380 = sbr.rel (%p378) target = $region48
        $region47: #{tpu_custom_call.1} parent=11 // pred_region
          _
        $region48: #{tpu_custom_call.1} parent=11 // pred_fallthru
          _
        // Predicated region
        $region49: #{tpu_custom_call.1} parent=11 // pred_check
          %p381 = pneg %p260
        $region50: #{tpu_custom_call.1} parent=11 // pred_check_branch
          %383 = sbr.rel (%p381) target = $region52
        $region51: #{tpu_custom_call.1} parent=11 // pred_region
          _
        $region52: #{tpu_custom_call.1} parent=11 // pred_fallthru
          _
        // Predicated region
        $region53: #{tpu_custom_call.1} parent=11 // pred_check
          %p384 = pneg %p281
        $region54: #{tpu_custom_call.1} parent=11 // pred_check_branch
          %386 = sbr.rel (%p384) target = $region56
        $region55: #{tpu_custom_call.1} parent=11 // pred_region
          %388 = vsyncadd [#allocation7], 0
          %s389 = sshll.u32 %s11, 4
          %s390 = int_to_ptr.hbm [resolvable:$true] %s389
          %s391 = sshll.u32 [#allocation6], 4
          %s392 = int_to_ptr.vmem [resolvable:$true] %s391
          %397 = dma.hbm_to_vmem [thread:$0]  %s390, 1152, %s392, [#allocation7], 128, 128, 8
        $region56: #{tpu_custom_call.1} parent=11 // pred_fallthru
          _
        // Predicated region
        $region57: #{tpu_custom_call.1} parent=11 // pred_check
          %p398 = pneg %p302
        $region58: #{tpu_custom_call.1} parent=11 // pred_check_branch
          %400 = sbr.rel (%p398) target = $region60
        $region59: #{tpu_custom_call.1} parent=11 // pred_region
          _
        $region60: #{tpu_custom_call.1} parent=11 // pred_fallthru
          _
      $region12: #{tpu_custom_call.1} parent=5 // pred_fallthru
        _
      %p401 = scmp.lt.s32.totalorder %s24, 2
      // Predicated region
      $region61: #{tpu_custom_call.1} parent=5 // pred_check
        %p402 = pneg %p401
      $region62: #{tpu_custom_call.1} parent=5 // pred_check_branch
        %404 = sbr.rel (%p402) target = $region64
      $region63: #{tpu_custom_call.1} parent=5 // pred_region
        // Predicated region
        $region65: #{tpu_custom_call.1} parent=63 // pred_check
          %p405 = pneg %p44
        $region66: #{tpu_custom_call.1} parent=63 // pred_check_branch
          %407 = sbr.rel (%p405) target = $region68
        $region67: #{tpu_custom_call.1} parent=63 // pred_region
          %p408 = scmp.lt.s32.totalorder %s24, 1
          %s409 = scalar_select %p408, %s24, 1
          %s410 = smul.addr %s409, 2
          %s411 = smul.addr %s410, 4
          %s412 = scalar_lea.vmem %s0, %s411
        $region68: #{tpu_custom_call.1} parent=63 // pred_fallthru
          _
      $region64: #{tpu_custom_call.1} parent=5 // pred_fallthru
        _
      %p413 = scmp.le.s32.totalorder 1, %s24
      %p414 = scmp.lt.s32.totalorder %s24, 3
      %p415 = pnand %p413, %p414
      %p416 = pneg %p415
      // Predicated region
      $region69: #{tpu_custom_call.1} parent=5 // pred_check
        _
      $region70: #{tpu_custom_call.1} parent=5 // pred_check_branch
        %418 = sbr.rel (%p415) target = $region72
      $region71: #{tpu_custom_call.1} parent=5 // pred_region
        %s419 = ssub.s32 %s24, 1
        // Predicated region
        $region73: #{tpu_custom_call.1} parent=71 // pred_check
          %p420 = pneg %p197
        $region74: #{tpu_custom_call.1} parent=71 // pred_check_branch
          %422 = sbr.rel (%p420) target = $region76
        $region75: #{tpu_custom_call.1} parent=71 // pred_region
          %424 = dma.done [#allocation4], 1920
        $region76: #{tpu_custom_call.1} parent=71 // pred_fallthru
          _
        // Predicated region
        $region77: #{tpu_custom_call.1} parent=71 // pred_check
          %p425 = pneg %p281
        $region78: #{tpu_custom_call.1} parent=71 // pred_check_branch
          %427 = sbr.rel (%p425) target = $region80
        $region79: #{tpu_custom_call.1} parent=71 // pred_region
          %429 = dma.done [#allocation7], 1152
        $region80: #{tpu_custom_call.1} parent=71 // pred_fallthru
          _
        %p430 = scmp.lt.s32.totalorder %s29, 1
        %s431 = scalar_select %p430, %s29, 1
        %s432 = smul.addr %s431, 2
        %s433 = smul.addr %s432, 4
        %s434 = scalar_lea.vmem %s0, %s433
        %p435 = pneg %p50
        %p436 = pneg %p47
        %p437 = pneg %p71
        %p438 = pneg %p68
        %p439 = pneg %p92
        %p440 = pneg %p89
        %p441 = pneg %p113
        %p442 = pneg %p110
        %p443 = pneg %p134
        %p444 = pneg %p131
        %p445 = pneg %p155
        %p446 = pneg %p152
        %p447 = pneg %p176
        %p448 = pneg %p173
        %p449 = pneg %p197
        %p450 = pneg %p194
        %p451 = pneg %p218
        %p452 = pneg %p215
        %p453 = pneg %p239
        %p454 = pneg %p236
        %p455 = pneg %p260
        %p456 = pneg %p257
        %p457 = pneg %p281
        %p458 = pneg %p278
        %p459 = pneg %p302
        %p460 = pneg %p299
        %p461 = pneg %p328
        %p462 = pneg %p325
        %s463 = sand.u32 %s315, 1
        %s464 = scalar_lea.sflag [#allocation5], %s463
        %s465 = sand.u32 %s315, 1
        %s466 = smul.addr %s465, 176
        %s467 = scalar_lea.vmem [#allocation8], %s466
        %p468 = scmp.lt.s32.totalorder %s29, 1
        %s469 = scalar_select %p468, %s29, 1
        %s470 = smul.addr %s469, 2
        %s471 = smul.addr %s470, 4
        %s472 = scalar_lea.vmem %s0, %s471
        %v473 = vld [vmem:[%s472] sm:$0xff]
        %v474 = vld [vmem:[%s1] sm:$0x3]
        %v475 = vld [vmem:[%s2] sm:$0x3]
        %v476 = vld [vmem:[%s3] sm:$0xff]
        %v477 = vld [vmem:[%s3 + $0x8] sm:$0xff]
        %v478 = vld [vmem:[%s3 + $0x10] sm:$0xff]
        %v479 = vld [vmem:[%s3 + $0x18] sm:$0xff]
        %v480 = vld [vmem:[%s3 + $0x20] sm:$0xff]
        %v481 = vld [vmem:[%s3 + $0x28] sm:$0xff]
        %v482 = vld [vmem:[%s4] sm:$0xff]
        %v483 = vld [vmem:[%s4 + $0x8] sm:$0xff]
        %v484 = vld [vmem:[%s4 + $0x10] sm:$0xff]
        %v485 = vld [vmem:[%s4 + $0x18] sm:$0xff]
        %v486 = vld [vmem:[%s4 + $0x20] sm:$0xff]
        %v487 = vld [vmem:[%s4 + $0x28] sm:$0xff]
        %489 = vset.pattern.permute.xlu0 0
        %490 = vperm.xlu0 %489, %v482
        %v491 = vpop.permute.xlu0 %490
        %494 = vset.pattern.permute.xlu0 0
        %495 = vperm.xlu0 %494, %v483
        %v496 = vpop.permute.xlu0 %495
        %499 = vset.pattern.permute.xlu0 0
        %500 = vperm.xlu0 %499, %v484
        %v501 = vpop.permute.xlu0 %500
        %504 = vset.pattern.permute.xlu0 0
        %505 = vperm.xlu0 %504, %v485
        %v506 = vpop.permute.xlu0 %505
        %509 = vset.pattern.permute.xlu0 0
        %510 = vperm.xlu0 %509, %v486
        %v511 = vpop.permute.xlu0 %510
        %514 = vset.pattern.permute.xlu0 0
        %515 = vperm.xlu0 %514, %v487
        %v516 = vpop.permute.xlu0 %515
        %519 = vst [vmem:[#allocation1] ss:$2 sm:$0xff] %v473
        %v520 = vld.sshfl [vmem:[#allocation1] sm:$0xff pattern:$0x75316420]
        %v521 = vld.sshfl [vmem:[#allocation1 + $0x8] sm:$0xff pattern:$0x75316420]
        %vm522 = vcmask 31744
        %v524 = vsel %vm522, %v476, 0
        %v527 = vsel %vm522, %v477, 0
        %v530 = vsel %vm522, %v478, 0
        %v533 = vsel %vm522, %v479, 0
        %v536 = vsel %vm522, %v480, 0
        %v539 = vsel %vm522, %v481, 0
        %vm541 = vcmask 1043456
        %v542 = vsel %vm541, %v520, 0
        %v544 = vsel %vm541, %v521, 0
        %546 = vmatpush.msra.mxu0 0.0
        %547 = vmatpush.msra.mxu0 0.0
        %548 = vmatpush.msra.mxu0 0.0
        %549 = vmatpush.msra.mxu0 0.0
        %550 = vmatpush.msra.mxu0 0.0
        %551 = vmatpush.msra.mxu0 0.0
        %552 = vmatpush.msra.mxu0 0.0
        %553 = vmatpush.msra.mxu0 0.0
        %554 = vmatpush.msra.mxu0 0.0
        %555 = vmatpush.msra.mxu0 0.0
        %556 = vmatpush.msra.mxu0 0.0
        %557 = vmatpush.msra.mxu0 0.0
        %558 = vmatpush.msra.mxu0 0.0
        %559 = vmatpush.msra.mxu0 0.0
        %560 = vmatpush.msra.mxu0 0.0
        %561 = vmatpush.msra.mxu0 %v542
        %562 = vmatmul.f32.gmra.mxu0 %v524
        %v563 = vpop.f32.mrf.mxu0
        %v564 = vadd.f32 %v491, %v563
        %565 = vmatmul.f32.gmra.mxu0 %v527
        %v566 = vpop.f32.mrf.mxu0
        %v567 = vadd.f32 %v496, %v566
        %568 = vmatmul.f32.gmra.mxu0 %v530
        %v569 = vpop.f32.mrf.mxu0
        %v570 = vadd.f32 %v501, %v569
        %571 = vmatmul.f32.gmra.mxu0 %v533
        %v572 = vpop.f32.mrf.mxu0
        %v573 = vadd.f32 %v506, %v572
        %574 = vmatmul.f32.gmra.mxu0 %v536
        %v575 = vpop.f32.mrf.mxu0
        %v576 = vadd.f32 %v511, %v575
        %577 = vmatmul.f32.gmra.mxu0 %v539
        %v578 = vpop.f32.mrf.mxu0
        %v579 = vadd.f32 %v516, %v578
        %580 = vdwg.mxu0
        %581 = vmatpush.msra.mxu0 0.0
        %582 = vmatpush.msra.mxu0 0.0
        %583 = vmatpush.msra.mxu0 0.0
        %584 = vmatpush.msra.mxu0 0.0
        %585 = vmatpush.msra.mxu0 0.0
        %586 = vmatpush.msra.mxu0 0.0
        %587 = vmatpush.msra.mxu0 0.0
        %588 = vmatpush.msra.mxu0 0.0
        %589 = vmatpush.msra.mxu0 0.0
        %590 = vmatpush.msra.mxu0 0.0
        %591 = vmatpush.msra.mxu0 0.0
        %592 = vmatpush.msra.mxu0 0.0
        %593 = vmatpush.msra.mxu0 0.0
        %594 = vmatpush.msra.mxu0 0.0
        %595 = vmatpush.msra.mxu0 0.0
        %596 = vmatpush.msra.mxu0 %v544
        %597 = vmatmul.f32.gmra.mxu0 %v524
        %v598 = vpop.f32.mrf.mxu0
        %v599 = vadd.f32 %v491, %v598
        %600 = vmatmul.f32.gmra.mxu0 %v527
        %v601 = vpop.f32.mrf.mxu0
        %v602 = vadd.f32 %v496, %v601
        %603 = vmatmul.f32.gmra.mxu0 %v530
        %v604 = vpop.f32.mrf.mxu0
        %v605 = vadd.f32 %v501, %v604
        %606 = vmatmul.f32.gmra.mxu0 %v533
        %v607 = vpop.f32.mrf.mxu0
        %v608 = vadd.f32 %v506, %v607
        %609 = vmatmul.f32.gmra.mxu0 %v536
        %v610 = vpop.f32.mrf.mxu0
        %v611 = vadd.f32 %v511, %v610
        %612 = vmatmul.f32.gmra.mxu0 %v539
        %v613 = vpop.f32.mrf.mxu0
        %v614 = vadd.f32 %v516, %v613
        %615 = vdwg.mxu0
        %616 = vst [vmem:[#allocation2] sm:$0xff] %v564
        %617 = vst [vmem:[#allocation2 + $0x8] sm:$0xff] %v599
        %618 = vst [vmem:[#allocation2 + $0x10] sm:$0xff] %v567
        %619 = vst [vmem:[#allocation2 + $0x18] sm:$0xff] %v602
        %620 = vst [vmem:[#allocation2 + $0x20] sm:$0xff] %v570
        %621 = vst [vmem:[#allocation2 + $0x28] sm:$0xff] %v605
        %622 = vst [vmem:[#allocation2 + $0x30] sm:$0xff] %v573
        %623 = vst [vmem:[#allocation2 + $0x38] sm:$0xff] %v608
        %624 = vst [vmem:[#allocation2 + $0x40] sm:$0xff] %v576
        %625 = vst [vmem:[#allocation2 + $0x48] sm:$0xff] %v611
        %626 = vst [vmem:[#allocation2 + $0x50] sm:$0xff] %v579
        %627 = vst [vmem:[#allocation2 + $0x58] sm:$0xff] %v614
        %v628 = vld [vmem:[#allocation2] sm:$0xff]
        %v629 = vld [vmem:[#allocation2 + $0x8] sm:$0xff]
        %v630 = vld [vmem:[#allocation2 + $0x10] sm:$0xff]
        %v631 = vld [vmem:[#allocation2 + $0x18] sm:$0xff]
        %632 = vst [vmem:[%s467 + $0x30] sm:$0xff] %v628
        %633 = vst [vmem:[%s467 + $0x38] sm:$0xff] %v629
        %634 = vst [vmem:[%s467 + $0x40] sm:$0xff] %v630
        %635 = vst [vmem:[%s467 + $0x48] sm:$0xff] %v631
        %636 = vst [vmem:[#allocation1] ss:$2 sm:$0xff] %v473
        %v637 = vld.sshfl [vmem:[#allocation1] sm:$0xff pattern:$0x75316420]
        %v638 = vld.sshfl [vmem:[#allocation1 + $0x8] sm:$0xff pattern:$0x75316420]
        %641 = vrot.lane.b32.xlu0 %v637, 17
        %v642 = vpop.permute.xlu0 %641
        %643 = vrot.lane.b32.xlu0 %v638, 17
        %v644 = vpop.permute.xlu0 %643
        %v645 = vlaneseq
        %v646 = vand.u32 %v645, 127
        %vm647 = vcmp.lt.s32.totalorder %v646, 17
        %v648 = vsel %vm647, %v642, %v644
        %v649 = vsel %vm647, %v644, %v642
        %vm650 = vcmp.ge.s32.totalorder %v474, 1
        %vm651 = vcmp.ge.s32.totalorder %v475, 1
        %vm652 = vmand %vm650, %vm651
        %v653 = vsel %vm652, 1, 0
        %v654 = vperm.slane %v653, 0
        %v655 = vperm.slane %v653, 1
        %vm656 = vcmp.eq.s32.totalorder %v654, 1
        %vm657 = vcmp.eq.s32.totalorder %v655, 1
        %v658 = vsel %vm656, %v649, 0.0
        %v659 = vsel %vm657, %v648, 0.0
        %v660 = vadd.f32 %v658, 0.0
        %v661 = vadd.f32 %v659, 0.0
        %662 = vst [vmem:[#allocation1] ss:$2 sm:$0xff] %v473
        %v663 = vld.sshfl [vmem:[#allocation1] sm:$0xff pattern:$0x75316420]
        %v664 = vld.sshfl [vmem:[#allocation1 + $0x8] sm:$0xff pattern:$0x75316420]
        %667 = vrot.lane.b32.xlu0 %v663, 16
        %v668 = vpop.permute.xlu0 %667
        %669 = vrot.lane.b32.xlu0 %v664, 16
        %v670 = vpop.permute.xlu0 %669
        %vm671 = vcmp.lt.s32.totalorder %v646, 16
        %v672 = vsel %vm671, %v668, %v670
        %v673 = vsel %vm671, %v670, %v668
        %v674 = vsel %vm650, 1, 0
        %v675 = vperm.slane %v674, 0
        %v676 = vperm.slane %v674, 1
        %vm677 = vcmp.eq.s32.totalorder %v675, 1
        %vm678 = vcmp.eq.s32.totalorder %v676, 1
        %v679 = vsel %vm677, %v673, 0.0
        %v680 = vsel %vm678, %v672, 0.0
        %v681 = vadd.f32 %v660, %v679
        %v682 = vadd.f32 %v661, %v680
        %683 = vst [vmem:[#allocation1] ss:$2 sm:$0xff] %v473
        %v684 = vld.sshfl [vmem:[#allocation1] sm:$0xff pattern:$0x75316420]
        %v685 = vld.sshfl [vmem:[#allocation1 + $0x8] sm:$0xff pattern:$0x75316420]
        %688 = vrot.lane.b32.xlu0 %v684, 15
        %v689 = vpop.permute.xlu0 %688
        %690 = vrot.lane.b32.xlu0 %v685, 15
        %v691 = vpop.permute.xlu0 %690
        %vm692 = vcmp.lt.s32.totalorder %v646, 15
        %v693 = vsel %vm692, %v689, %v691
        %v694 = vsel %vm692, %v691, %v689
        %vm695 = vcmp.lt.s32.totalorder %v475, 15
        %vm696 = vmand %vm650, %vm695
        %v697 = vsel %vm696, 1, 0
        %v698 = vperm.slane %v697, 0
        %v699 = vperm.slane %v697, 1
        %vm700 = vcmp.eq.s32.totalorder %v698, 1
        %vm701 = vcmp.eq.s32.totalorder %v699, 1
        %v702 = vsel %vm700, %v694, 0.0
        %v703 = vsel %vm701, %v693, 0.0
        %v704 = vadd.f32 %v681, %v702
        %v705 = vadd.f32 %v682, %v703
        %706 = vst [vmem:[#allocation1] ss:$2 sm:$0xff] %v473
        %v707 = vld.sshfl [vmem:[#allocation1] sm:$0xff pattern:$0x75316420]
        %v708 = vld.sshfl [vmem:[#allocation1 + $0x8] sm:$0xff pattern:$0x75316420]
        %711 = vrot.lane.b32.xlu0 %v707, 1
        %v712 = vpop.permute.xlu0 %711
        %713 = vrot.lane.b32.xlu0 %v708, 1
        %v714 = vpop.permute.xlu0 %713
        %vm715 = vcmp.lt.s32.totalorder %v646, 1
        %v716 = vsel %vm715, %v712, %v714
        %v717 = vsel %vm715, %v714, %v712
        %v718 = vsel %vm651, 1, 0
        %v719 = vperm.slane %v718, 0
        %v720 = vperm.slane %v718, 1
        %vm721 = vcmp.eq.s32.totalorder %v719, 1
        %vm722 = vcmp.eq.s32.totalorder %v720, 1
        %v723 = vsel %vm721, %v717, 0.0
        %v724 = vsel %vm722, %v716, 0.0
        %v725 = vadd.f32 %v704, %v723
        %v726 = vadd.f32 %v705, %v724
        %727 = vst [vmem:[#allocation1] ss:$2 sm:$0xff] %v473
        %v728 = vld.sshfl [vmem:[#allocation1] sm:$0xff pattern:$0x75316420]
        %v729 = vld.sshfl [vmem:[#allocation1 + $0x8] sm:$0xff pattern:$0x75316420]
        %v732 = vadd.f32 %v725, %v728
        %v733 = vadd.f32 %v726, %v729
        %734 = vst [vmem:[#allocation1] ss:$2 sm:$0xff] %v473
        %v735 = vld.sshfl [vmem:[#allocation1] sm:$0xff pattern:$0x75316420]
        %v736 = vld.sshfl [vmem:[#allocation1 + $0x8] sm:$0xff pattern:$0x75316420]
        %739 = vrot.lane.b32.xlu0 %v735, 127
        %v740 = vpop.permute.xlu0 %739
        %741 = vrot.lane.b32.xlu0 %v736, 127
        %v742 = vpop.permute.xlu0 %741
        %vm743 = vcmp.lt.s32.totalorder %v646, 127
        %v744 = vsel %vm743, %v740, %v742
        %v745 = vsel %vm743, %v742, %v740
        %v746 = vsel %vm695, 1, 0
        %v747 = vperm.slane %v746, 0
        %v748 = vperm.slane %v746, 1
        %vm749 = vcmp.eq.s32.totalorder %v747, 1
        %vm750 = vcmp.eq.s32.totalorder %v748, 1
        %v751 = vsel %vm749, %v744, 0.0
        %v752 = vsel %vm750, %v745, 0.0
        %v753 = vadd.f32 %v732, %v751
        %v754 = vadd.f32 %v733, %v752
        %755 = vst [vmem:[#allocation1] ss:$2 sm:$0xff] %v473
        %v756 = vld.sshfl [vmem:[#allocation1] sm:$0xff pattern:$0x75316420]
        %v757 = vld.sshfl [vmem:[#allocation1 + $0x8] sm:$0xff pattern:$0x75316420]
        %760 = vrot.lane.b32.xlu0 %v756, 113
        %v761 = vpop.permute.xlu0 %760
        %762 = vrot.lane.b32.xlu0 %v757, 113
        %v763 = vpop.permute.xlu0 %762
        %vm764 = vcmp.lt.s32.totalorder %v646, 113
        %v765 = vsel %vm764, %v761, %v763
        %v766 = vsel %vm764, %v763, %v761
        %vm767 = vcmp.lt.s32.totalorder %v474, 15
        %vm768 = vmand %vm767, %vm651
        %v769 = vsel %vm768, 1, 0
        %v770 = vperm.slane %v769, 0
        %v771 = vperm.slane %v769, 1
        %vm772 = vcmp.eq.s32.totalorder %v770, 1
        %vm773 = vcmp.eq.s32.totalorder %v771, 1
        %v774 = vsel %vm772, %v765, 0.0
        %v775 = vsel %vm773, %v766, 0.0
        %v776 = vadd.f32 %v753, %v774
        %v777 = vadd.f32 %v754, %v775
        %778 = vst [vmem:[#allocation1] ss:$2 sm:$0xff] %v473
        %v779 = vld.sshfl [vmem:[#allocation1] sm:$0xff pattern:$0x75316420]
        %v780 = vld.sshfl [vmem:[#allocation1 + $0x8] sm:$0xff pattern:$0x75316420]
        %783 = vrot.lane.b32.xlu0 %v779, 112
        %v784 = vpop.permute.xlu0 %783
        %785 = vrot.lane.b32.xlu0 %v780, 112
        %v786 = vpop.permute.xlu0 %785
        %vm787 = vcmp.lt.s32.totalorder %v646, 112
        %v788 = vsel %vm787, %v784, %v786
        %v789 = vsel %vm787, %v786, %v784
        %v790 = vsel %vm767, 1, 0
        %v791 = vperm.slane %v790, 0
        %v792 = vperm.slane %v790, 1
        %vm793 = vcmp.eq.s32.totalorder %v791, 1
        %vm794 = vcmp.eq.s32.totalorder %v792, 1
        %v795 = vsel %vm793, %v788, 0.0
        %v796 = vsel %vm794, %v789, 0.0
        %v797 = vadd.f32 %v776, %v795
        %v798 = vadd.f32 %v777, %v796
        %799 = vst [vmem:[#allocation1] ss:$2 sm:$0xff] %v473
        %v800 = vld.sshfl [vmem:[#allocation1] sm:$0xff pattern:$0x75316420]
        %v801 = vld.sshfl [vmem:[#allocation1 + $0x8] sm:$0xff pattern:$0x75316420]
        %804 = vrot.lane.b32.xlu0 %v800, 111
        %v805 = vpop.permute.xlu0 %804
        %806 = vrot.lane.b32.xlu0 %v801, 111
        %v807 = vpop.permute.xlu0 %806
        %vm808 = vcmp.lt.s32.totalorder %v646, 111
        %v809 = vsel %vm808, %v805, %v807
        %v810 = vsel %vm808, %v807, %v805
        %vm811 = vmand %vm767, %vm695
        %v812 = vsel %vm811, 1, 0
        %v813 = vperm.slane %v812, 0
        %v814 = vperm.slane %v812, 1
        %vm815 = vcmp.eq.s32.totalorder %v813, 1
        %vm816 = vcmp.eq.s32.totalorder %v814, 1
        %v817 = vsel %vm815, %v809, 0.0
        %v818 = vsel %vm816, %v810, 0.0
        %v819 = vadd.f32 %v797, %v817
        %v820 = vadd.f32 %v798, %v818
        %v821 = vmul.f32 %v819, 0.11111111
        %v822 = vmul.f32 %v820, 0.11111111
        %v823 = vld [vmem:[%s5] sm:$0xff]
        %v824 = vld [vmem:[%s5 + $0x8] sm:$0xff]
        %v825 = vld [vmem:[%s5 + $0x10] sm:$0xff]
        %v826 = vld [vmem:[%s6] sm:$0xff]
        %v827 = vld [vmem:[%s6 + $0x8] sm:$0xff]
        %v828 = vld [vmem:[%s6 + $0x10] sm:$0xff]
        %830 = vset.pattern.permute.xlu0 0
        %831 = vperm.xlu0 %830, %v826
        %v832 = vpop.permute.xlu0 %831
        %835 = vset.pattern.permute.xlu0 0
        %836 = vperm.xlu0 %835, %v827
        %v837 = vpop.permute.xlu0 %836
        %840 = vset.pattern.permute.xlu0 0
        %841 = vperm.xlu0 %840, %v828
        %v842 = vpop.permute.xlu0 %841
        %v845 = vsel %vm522, %v823, 0
        %v848 = vsel %vm522, %v824, 0
        %v851 = vsel %vm522, %v825, 0
        %v854 = vsel %vm541, %v821, 0
        %v857 = vsel %vm541, %v822, 0
        %859 = vmatpush.msra.mxu0 0.0
        %860 = vmatpush.msra.mxu0 0.0
        %861 = vmatpush.msra.mxu0 0.0
        %862 = vmatpush.msra.mxu0 0.0
        %863 = vmatpush.msra.mxu0 0.0
        %864 = vmatpush.msra.mxu0 0.0
        %865 = vmatpush.msra.mxu0 0.0
        %866 = vmatpush.msra.mxu0 0.0
        %867 = vmatpush.msra.mxu0 0.0
        %868 = vmatpush.msra.mxu0 0.0
        %869 = vmatpush.msra.mxu0 0.0
        %870 = vmatpush.msra.mxu0 0.0
        %871 = vmatpush.msra.mxu0 0.0
        %872 = vmatpush.msra.mxu0 0.0
        %873 = vmatpush.msra.mxu0 0.0
        %874 = vmatpush.msra.mxu0 %v854
        %875 = vmatmul.f32.gmra.mxu0 %v845
        %v876 = vpop.f32.mrf.mxu0
        %v877 = vadd.f32 %v832, %v876
        %878 = vmatmul.f32.gmra.mxu0 %v848
        %v879 = vpop.f32.mrf.mxu0
        %v880 = vadd.f32 %v837, %v879
        %881 = vmatmul.f32.gmra.mxu0 %v851
        %v882 = vpop.f32.mrf.mxu0
        %v883 = vadd.f32 %v842, %v882
        %884 = vdwg.mxu0
        %885 = vmatpush.msra.mxu0 0.0
        %886 = vmatpush.msra.mxu0 0.0
        %887 = vmatpush.msra.mxu0 0.0
        %888 = vmatpush.msra.mxu0 0.0
        %889 = vmatpush.msra.mxu0 0.0
        %890 = vmatpush.msra.mxu0 0.0
        %891 = vmatpush.msra.mxu0 0.0
        %892 = vmatpush.msra.mxu0 0.0
        %893 = vmatpush.msra.mxu0 0.0
        %894 = vmatpush.msra.mxu0 0.0
        %895 = vmatpush.msra.mxu0 0.0
        %896 = vmatpush.msra.mxu0 0.0
        %897 = vmatpush.msra.mxu0 0.0
        %898 = vmatpush.msra.mxu0 0.0
        %899 = vmatpush.msra.mxu0 0.0
        %900 = vmatpush.msra.mxu0 %v857
        %901 = vmatmul.f32.gmra.mxu0 %v845
        %v902 = vpop.f32.mrf.mxu0
        %v903 = vadd.f32 %v832, %v902
        %904 = vmatmul.f32.gmra.mxu0 %v848
        %v905 = vpop.f32.mrf.mxu0
        %v906 = vadd.f32 %v837, %v905
        %907 = vmatmul.f32.gmra.mxu0 %v851
        %v908 = vpop.f32.mrf.mxu0
        %v909 = vadd.f32 %v842, %v908
        %910 = vdwg.mxu0
        %911 = vst [vmem:[%s467] sm:$0xff] %v877
        %912 = vst [vmem:[%s467 + $0x8] sm:$0xff] %v903
        %913 = vst [vmem:[%s467 + $0x10] sm:$0xff] %v880
        %914 = vst [vmem:[%s467 + $0x18] sm:$0xff] %v906
        %915 = vst [vmem:[%s467 + $0x20] sm:$0xff] %v883
        %916 = vst [vmem:[%s467 + $0x28] sm:$0xff] %v909
        %v917 = vld [vmem:[#allocation2 + $0x20] sm:$0xff]
        %v918 = vld [vmem:[#allocation2 + $0x28] sm:$0xff]
        %v919 = vld [vmem:[#allocation2 + $0x30] sm:$0xff]
        %v920 = vld [vmem:[#allocation2 + $0x38] sm:$0xff]
        %921 = vrot.lane.b32.xlu0 %v917, 34
        %v922 = vpop.permute.xlu0 %921
        %923 = vrot.lane.b32.xlu0 %v919, 34
        %v924 = vpop.permute.xlu0 %923
        %925 = vrot.lane.b32.xlu0 %v918, 34
        %v926 = vpop.permute.xlu0 %925
        %927 = vrot.lane.b32.xlu0 %v920, 34
        %v928 = vpop.permute.xlu0 %927
        %vm929 = vcmp.lt.s32.totalorder %v646, 34
        %v930 = vsel %vm929, %v922, %v926
        %v931 = vsel %vm929, %v924, %v928
        %v932 = vsel %vm929, %v926, %v922
        %v933 = vsel %vm929, %v928, %v924
        %vm934 = vcmp.ge.s32.totalorder %v474, 2
        %vm935 = vcmp.ge.s32.totalorder %v475, 2
        %vm936 = vmand %vm934, %vm935
        %v937 = vsel %vm936, 1, 0
        %v938 = vperm.slane %v937, 0
        %v939 = vperm.slane %v937, 1
        %vm940 = vcmp.eq.s32.totalorder %v938, 1
        %vm941 = vcmp.eq.s32.totalorder %v939, 1
        %v942 = vsel %vm940, %v932, 0.0
        %v943 = vsel %vm941, %v930, 0.0
        %v944 = vsel %vm940, %v933, 0.0
        %v945 = vsel %vm941, %v931, 0.0
        %946 = vrot.lane.b32.xlu0 %v917, 33
        %v947 = vpop.permute.xlu0 %946
        %948 = vrot.lane.b32.xlu0 %v919, 33
        %v949 = vpop.permute.xlu0 %948
        %950 = vrot.lane.b32.xlu0 %v918, 33
        %v951 = vpop.permute.xlu0 %950
        %952 = vrot.lane.b32.xlu0 %v920, 33
        %v953 = vpop.permute.xlu0 %952
        %vm954 = vcmp.lt.s32.totalorder %v646, 33
        %v955 = vsel %vm954, %v947, %v951
        %v956 = vsel %vm954, %v949, %v953
        %v957 = vsel %vm954, %v951, %v947
        %v958 = vsel %vm954, %v953, %v949
        %vm959 = vmand %vm934, %vm651
        %v960 = vsel %vm959, 1, 0
        %v961 = vperm.slane %v960, 0
        %v962 = vperm.slane %v960, 1
        %vm963 = vcmp.eq.s32.totalorder %v961, 1
        %vm964 = vcmp.eq.s32.totalorder %v962, 1
        %v965 = vsel %vm963, %v957, 0.0
        %v966 = vsel %vm964, %v955, 0.0
        %v967 = vsel %vm963, %v958, 0.0
        %v968 = vsel %vm964, %v956, 0.0
        %969 = vrot.lane.b32.xlu0 %v917, 32
        %v970 = vpop.permute.xlu0 %969
        %971 = vrot.lane.b32.xlu0 %v919, 32
        %v972 = vpop.permute.xlu0 %971
        %973 = vrot.lane.b32.xlu0 %v918, 32
        %v974 = vpop.permute.xlu0 %973
        %975 = vrot.lane.b32.xlu0 %v920, 32
        %v976 = vpop.permute.xlu0 %975
        %vm977 = vcmp.lt.s32.totalorder %v646, 32
        %v978 = vsel %vm977, %v970, %v974
        %v979 = vsel %vm977, %v972, %v976
        %v980 = vsel %vm977, %v974, %v970
        %v981 = vsel %vm977, %v976, %v972
        %v982 = vsel %vm934, 1, 0
        %v983 = vperm.slane %v982, 0
        %v984 = vperm.slane %v982, 1
        %vm985 = vcmp.eq.s32.totalorder %v983, 1
        %vm986 = vcmp.eq.s32.totalorder %v984, 1
        %v987 = vsel %vm985, %v980, 0.0
        %v988 = vsel %vm986, %v978, 0.0
        %v989 = vsel %vm985, %v981, 0.0
        %v990 = vsel %vm986, %v979, 0.0
        %991 = vrot.lane.b32.xlu0 %v917, 31
        %v992 = vpop.permute.xlu0 %991
        %993 = vrot.lane.b32.xlu0 %v919, 31
        %v994 = vpop.permute.xlu0 %993
        %995 = vrot.lane.b32.xlu0 %v918, 31
        %v996 = vpop.permute.xlu0 %995
        %997 = vrot.lane.b32.xlu0 %v920, 31
        %v998 = vpop.permute.xlu0 %997
        %vm999 = vcmp.lt.s32.totalorder %v646, 31
        %v1000 = vsel %vm999, %v992, %v996
        %v1001 = vsel %vm999, %v994, %v998
        %v1002 = vsel %vm999, %v996, %v992
        %v1003 = vsel %vm999, %v998, %v994
        %vm1004 = vmand %vm934, %vm695
        %v1005 = vsel %vm1004, 1, 0
        %v1006 = vperm.slane %v1005, 0
        %v1007 = vperm.slane %v1005, 1
        %vm1008 = vcmp.eq.s32.totalorder %v1006, 1
        %vm1009 = vcmp.eq.s32.totalorder %v1007, 1
        %v1010 = vsel %vm1008, %v1002, 0.0
        %v1011 = vsel %vm1009, %v1000, 0.0
        %v1012 = vsel %vm1008, %v1003, 0.0
        %v1013 = vsel %vm1009, %v1001, 0.0
        %1014 = vrot.lane.b32.xlu0 %v917, 30
        %v1015 = vpop.permute.xlu0 %1014
        %1016 = vrot.lane.b32.xlu0 %v919, 30
        %v1017 = vpop.permute.xlu0 %1016
        %1018 = vrot.lane.b32.xlu0 %v918, 30
        %v1019 = vpop.permute.xlu0 %1018
        %1020 = vrot.lane.b32.xlu0 %v920, 30
        %v1021 = vpop.permute.xlu0 %1020
        %vm1022 = vcmp.lt.s32.totalorder %v646, 30
        %v1023 = vsel %vm1022, %v1015, %v1019
        %v1024 = vsel %vm1022, %v1017, %v1021
        %v1025 = vsel %vm1022, %v1019, %v1015
        %v1026 = vsel %vm1022, %v1021, %v1017
        %vm1027 = vcmp.lt.s32.totalorder %v475, 14
        %vm1028 = vmand %vm934, %vm1027
        %v1029 = vsel %vm1028, 1, 0
        %v1030 = vperm.slane %v1029, 0
        %v1031 = vperm.slane %v1029, 1
        %vm1032 = vcmp.eq.s32.totalorder %v1030, 1
        %vm1033 = vcmp.eq.s32.totalorder %v1031, 1
        %v1034 = vsel %vm1032, %v1025, 0.0
        %v1035 = vsel %vm1033, %v1023, 0.0
        %v1036 = vsel %vm1032, %v1026, 0.0
        %v1037 = vsel %vm1033, %v1024, 0.0
        %v1038 = vld [vmem:[#allocation3] sm:$0xff]
        %v1039 = vld [vmem:[#allocation3 + $0x8] sm:$0xff]
        %v1040 = vld [vmem:[#allocation3 + $0x10] sm:$0xff]
        %1041 = vrot.lane.b32.xlu0 %v917, 18
        %v1042 = vpop.permute.xlu0 %1041
        %1043 = vrot.lane.b32.xlu0 %v919, 18
        %v1044 = vpop.permute.xlu0 %1043
        %1045 = vrot.lane.b32.xlu0 %v918, 18
        %v1046 = vpop.permute.xlu0 %1045
        %1047 = vrot.lane.b32.xlu0 %v920, 18
        %v1048 = vpop.permute.xlu0 %1047
        %vm1049 = vcmp.lt.s32.totalorder %v646, 18
        %v1050 = vsel %vm1049, %v1042, %v1046
        %v1051 = vsel %vm1049, %v1044, %v1048
        %v1052 = vsel %vm1049, %v1046, %v1042
        %v1053 = vsel %vm1049, %v1048, %v1044
        %vm1054 = vmand %vm650, %vm935
        %v1055 = vsel %vm1054, 1, 0
        %v1056 = vperm.slane %v1055, 0
        %v1057 = vperm.slane %v1055, 1
        %vm1058 = vcmp.eq.s32.totalorder %v1056, 1
        %vm1059 = vcmp.eq.s32.totalorder %v1057, 1
        %v1060 = vsel %vm1058, %v1052, 0.0
        %v1061 = vsel %vm1059, %v1050, 0.0
        %v1062 = vsel %vm1058, %v1053, 0.0
        %v1063 = vsel %vm1059, %v1051, 0.0
        %1064 = vrot.lane.b32.xlu0 %v917, 17
        %v1065 = vpop.permute.xlu0 %1064
        %1066 = vrot.lane.b32.xlu0 %v919, 17
        %v1067 = vpop.permute.xlu0 %1066
        %1068 = vrot.lane.b32.xlu0 %v918, 17
        %v1069 = vpop.permute.xlu0 %1068
        %1070 = vrot.lane.b32.xlu0 %v920, 17
        %v1071 = vpop.permute.xlu0 %1070
        %v1072 = vsel %vm647, %v1065, %v1069
        %v1073 = vsel %vm647, %v1067, %v1071
        %v1074 = vsel %vm647, %v1069, %v1065
        %v1075 = vsel %vm647, %v1071, %v1067
        %v1076 = vsel %vm656, %v1074, 0.0
        %v1077 = vsel %vm657, %v1072, 0.0
        %v1078 = vsel %vm656, %v1075, 0.0
        %v1079 = vsel %vm657, %v1073, 0.0
        %1080 = vrot.lane.b32.xlu0 %v917, 16
        %v1081 = vpop.permute.xlu0 %1080
        %1082 = vrot.lane.b32.xlu0 %v919, 16
        %v1083 = vpop.permute.xlu0 %1082
        %1084 = vrot.lane.b32.xlu0 %v918, 16
        %v1085 = vpop.permute.xlu0 %1084
        %1086 = vrot.lane.b32.xlu0 %v920, 16
        %v1087 = vpop.permute.xlu0 %1086
        %v1088 = vsel %vm671, %v1081, %v1085
        %v1089 = vsel %vm671, %v1083, %v1087
        %v1090 = vsel %vm671, %v1085, %v1081
        %v1091 = vsel %vm671, %v1087, %v1083
        %v1092 = vsel %vm677, %v1090, 0.0
        %v1093 = vsel %vm678, %v1088, 0.0
        %v1094 = vsel %vm677, %v1091, 0.0
        %v1095 = vsel %vm678, %v1089, 0.0
        %1096 = vrot.lane.b32.xlu0 %v917, 15
        %v1097 = vpop.permute.xlu0 %1096
        %1098 = vrot.lane.b32.xlu0 %v919, 15
        %v1099 = vpop.permute.xlu0 %1098
        %1100 = vrot.lane.b32.xlu0 %v918, 15
        %v1101 = vpop.permute.xlu0 %1100
        %1102 = vrot.lane.b32.xlu0 %v920, 15
        %v1103 = vpop.permute.xlu0 %1102
        %v1104 = vsel %vm692, %v1097, %v1101
        %v1105 = vsel %vm692, %v1099, %v1103
        %v1106 = vsel %vm692, %v1101, %v1097
        %v1107 = vsel %vm692, %v1103, %v1099
        %v1108 = vsel %vm700, %v1106, 0.0
        %v1109 = vsel %vm701, %v1104, 0.0
        %v1110 = vsel %vm700, %v1107, 0.0
        %v1111 = vsel %vm701, %v1105, 0.0
        %1112 = vrot.lane.b32.xlu0 %v917, 14
        %v1113 = vpop.permute.xlu0 %1112
        %1114 = vrot.lane.b32.xlu0 %v919, 14
        %v1115 = vpop.permute.xlu0 %1114
        %1116 = vrot.lane.b32.xlu0 %v918, 14
        %v1117 = vpop.permute.xlu0 %1116
        %1118 = vrot.lane.b32.xlu0 %v920, 14
        %v1119 = vpop.permute.xlu0 %1118
        %vm1120 = vcmp.lt.s32.totalorder %v646, 14
        %v1121 = vsel %vm1120, %v1113, %v1117
        %v1122 = vsel %vm1120, %v1115, %v1119
        %v1123 = vsel %vm1120, %v1117, %v1113
        %v1124 = vsel %vm1120, %v1119, %v1115
        %vm1125 = vmand %vm650, %vm1027
        %v1126 = vsel %vm1125, 1, 0
        %v1127 = vperm.slane %v1126, 0
        %v1128 = vperm.slane %v1126, 1
        %vm1129 = vcmp.eq.s32.totalorder %v1127, 1
        %vm1130 = vcmp.eq.s32.totalorder %v1128, 1
        %v1131 = vsel %vm1129, %v1123, 0.0
        %v1132 = vsel %vm1130, %v1121, 0.0
        %v1133 = vsel %vm1129, %v1124, 0.0
        %v1134 = vsel %vm1130, %v1122, 0.0
        %s1135 = scalar_lea.vmem [#allocation3], 24
        %v1136 = vld [vmem:[%s1135] sm:$0xff]
        %v1137 = vld [vmem:[%s1135 + $0x8] sm:$0xff]
        %v1138 = vld [vmem:[%s1135 + $0x10] sm:$0xff]
        %vm1139 = vcmask 654336
        %v1141 = vsel %vm1139, %v1136, 0
        %v1144 = vsel %vm1139, %v1137, 0
        %v1147 = vsel %vm1139, %v1138, 0
        %1149 = vmatpush.msra.mxu0 0.0
        %1150 = vmatpush.msra.mxu0 0.0
        %1151 = vmatpush.msra.mxu0 0.0
        %1152 = vmatpush.msra.mxu0 0.0
        %1153 = vmatpush.msra.mxu0 0.0
        %1154 = vmatpush.msra.mxu0 0.0
        %1155 = vmatpush.msra.mxu0 %v1133
        %1156 = vmatpush.msra.mxu0 %v1131
        %1157 = vmatpush.msra.mxu0 %v1110
        %1158 = vmatpush.msra.mxu0 %v1108
        %1159 = vmatpush.msra.mxu0 %v1094
        %1160 = vmatpush.msra.mxu0 %v1092
        %1161 = vmatpush.msra.mxu0 %v1078
        %1162 = vmatpush.msra.mxu0 %v1076
        %1163 = vmatpush.msra.mxu0 %v1062
        %1164 = vmatpush.msra.mxu0 %v1060
        %1165 = vmatmul.f32.gmra.mxu0 %v1141
        %v1166 = vpop.f32.mrf.mxu0
        %v1167 = vadd.f32 0.0, %v1166
        %1168 = vmatmul.f32.gmra.mxu0 %v1144
        %v1169 = vpop.f32.mrf.mxu0
        %v1170 = vadd.f32 0.0, %v1169
        %1171 = vmatmul.f32.gmra.mxu0 %v1147
        %v1172 = vpop.f32.mrf.mxu0
        %v1173 = vadd.f32 0.0, %v1172
        %1174 = vdwg.mxu0
        %1175 = vmatpush.msra.mxu0 0.0
        %1176 = vmatpush.msra.mxu0 0.0
        %1177 = vmatpush.msra.mxu0 0.0
        %1178 = vmatpush.msra.mxu0 0.0
        %1179 = vmatpush.msra.mxu0 0.0
        %1180 = vmatpush.msra.mxu0 0.0
        %1181 = vmatpush.msra.mxu0 %v1134
        %1182 = vmatpush.msra.mxu0 %v1132
        %1183 = vmatpush.msra.mxu0 %v1111
        %1184 = vmatpush.msra.mxu0 %v1109
        %1185 = vmatpush.msra.mxu0 %v1095
        %1186 = vmatpush.msra.mxu0 %v1093
        %1187 = vmatpush.msra.mxu0 %v1079
        %1188 = vmatpush.msra.mxu0 %v1077
        %1189 = vmatpush.msra.mxu0 %v1063
        %1190 = vmatpush.msra.mxu0 %v1061
        %1191 = vmatmul.f32.gmra.mxu0 %v1141
        %v1192 = vpop.f32.mrf.mxu0
        %v1193 = vadd.f32 0.0, %v1192
        %1194 = vmatmul.f32.gmra.mxu0 %v1144
        %v1195 = vpop.f32.mrf.mxu0
        %v1196 = vadd.f32 0.0, %v1195
        %1197 = vmatmul.f32.gmra.mxu0 %v1147
        %v1198 = vpop.f32.mrf.mxu0
        %v1199 = vadd.f32 0.0, %v1198
        %1200 = vdwg.mxu0
        %v1202 = vsel %vm1139, %v1038, 0
        %v1205 = vsel %vm1139, %v1039, 0
        %v1208 = vsel %vm1139, %v1040, 0
        %1210 = vmatpush.msra.mxu0 0.0
        %1211 = vmatpush.msra.mxu0 0.0
        %1212 = vmatpush.msra.mxu0 0.0
        %1213 = vmatpush.msra.mxu0 0.0
        %1214 = vmatpush.msra.mxu0 0.0
        %1215 = vmatpush.msra.mxu0 0.0
        %1216 = vmatpush.msra.mxu0 %v1036
        %1217 = vmatpush.msra.mxu0 %v1034
        %1218 = vmatpush.msra.mxu0 %v1012
        %1219 = vmatpush.msra.mxu0 %v1010
        %1220 = vmatpush.msra.mxu0 %v989
        %1221 = vmatpush.msra.mxu0 %v987
        %1222 = vmatpush.msra.mxu0 %v967
        %1223 = vmatpush.msra.mxu0 %v965
        %1224 = vmatpush.msra.mxu0 %v944
        %1225 = vmatpush.msra.mxu0 %v942
        %1226 = vmatmul.f32.gmra.mxu0 %v1202
        %v1227 = vpop.f32.mrf.mxu0
        %v1228 = vadd.f32 %v1167, %v1227
        %1229 = vmatmul.f32.gmra.mxu0 %v1205
        %v1230 = vpop.f32.mrf.mxu0
        %v1231 = vadd.f32 %v1170, %v1230
        %1232 = vmatmul.f32.gmra.mxu0 %v1208
        %v1233 = vpop.f32.mrf.mxu0
        %v1234 = vadd.f32 %v1173, %v1233
        %1235 = vdwg.mxu0
        %1236 = vmatpush.msra.mxu0 0.0
        %1237 = vmatpush.msra.mxu0 0.0
        %1238 = vmatpush.msra.mxu0 0.0
        %1239 = vmatpush.msra.mxu0 0.0
        %1240 = vmatpush.msra.mxu0 0.0
        %1241 = vmatpush.msra.mxu0 0.0
        %1242 = vmatpush.msra.mxu0 %v1037
        %1243 = vmatpush.msra.mxu0 %v1035
        %1244 = vmatpush.msra.mxu0 %v1013
        %1245 = vmatpush.msra.mxu0 %v1011
        %1246 = vmatpush.msra.mxu0 %v990
        %1247 = vmatpush.msra.mxu0 %v988
        %1248 = vmatpush.msra.mxu0 %v968
        %1249 = vmatpush.msra.mxu0 %v966
        %1250 = vmatpush.msra.mxu0 %v945
        %1251 = vmatpush.msra.mxu0 %v943
        %1252 = vmatmul.f32.gmra.mxu0 %v1202
        %v1253 = vpop.f32.mrf.mxu0
        %v1254 = vadd.f32 %v1193, %v1253
        %1255 = vmatmul.f32.gmra.mxu0 %v1205
        %v1256 = vpop.f32.mrf.mxu0
        %v1257 = vadd.f32 %v1196, %v1256
        %1258 = vmatmul.f32.gmra.mxu0 %v1208
        %v1259 = vpop.f32.mrf.mxu0
        %v1260 = vadd.f32 %v1199, %v1259
        %1261 = vdwg.mxu0
        %1262 = vrot.lane.b32.xlu0 %v917, 2
        %v1263 = vpop.permute.xlu0 %1262
        %1264 = vrot.lane.b32.xlu0 %v919, 2
        %v1265 = vpop.permute.xlu0 %1264
        %1266 = vrot.lane.b32.xlu0 %v918, 2
        %v1267 = vpop.permute.xlu0 %1266
        %1268 = vrot.lane.b32.xlu0 %v920, 2
        %v1269 = vpop.permute.xlu0 %1268
        %vm1270 = vcmp.lt.s32.totalorder %v646, 2
        %v1271 = vsel %vm1270, %v1263, %v1267
        %v1272 = vsel %vm1270, %v1265, %v1269
        %v1273 = vsel %vm1270, %v1267, %v1263
        %v1274 = vsel %vm1270, %v1269, %v1265
        %v1275 = vsel %vm935, 1, 0
        %v1276 = vperm.slane %v1275, 0
        %v1277 = vperm.slane %v1275, 1
        %vm1278 = vcmp.eq.s32.totalorder %v1276, 1
        %vm1279 = vcmp.eq.s32.totalorder %v1277, 1
        %v1280 = vsel %vm1278, %v1273, 0.0
        %v1281 = vsel %vm1279, %v1271, 0.0
        %v1282 = vsel %vm1278, %v1274, 0.0
        %v1283 = vsel %vm1279, %v1272, 0.0
        %1284 = vrot.lane.b32.xlu0 %v917, 1
        %v1285 = vpop.permute.xlu0 %1284
        %1286 = vrot.lane.b32.xlu0 %v919, 1
        %v1287 = vpop.permute.xlu0 %1286
        %1288 = vrot.lane.b32.xlu0 %v918, 1
        %v1289 = vpop.permute.xlu0 %1288
        %1290 = vrot.lane.b32.xlu0 %v920, 1
        %v1291 = vpop.permute.xlu0 %1290
        %v1292 = vsel %vm715, %v1285, %v1289
        %v1293 = vsel %vm715, %v1287, %v1291
        %v1294 = vsel %vm715, %v1289, %v1285
        %v1295 = vsel %vm715, %v1291, %v1287
        %v1296 = vsel %vm721, %v1294, 0.0
        %v1297 = vsel %vm722, %v1292, 0.0
        %v1298 = vsel %vm721, %v1295, 0.0
        %v1299 = vsel %vm722, %v1293, 0.0
        %1300 = vrot.lane.b32.xlu0 %v917, 127
        %v1301 = vpop.permute.xlu0 %1300
        %1302 = vrot.lane.b32.xlu0 %v919, 127
        %v1303 = vpop.permute.xlu0 %1302
        %1304 = vrot.lane.b32.xlu0 %v918, 127
        %v1305 = vpop.permute.xlu0 %1304
        %1306 = vrot.lane.b32.xlu0 %v920, 127
        %v1307 = vpop.permute.xlu0 %1306
        %v1308 = vsel %vm743, %v1301, %v1305
        %v1309 = vsel %vm743, %v1303, %v1307
        %v1310 = vsel %vm743, %v1305, %v1301
        %v1311 = vsel %vm743, %v1307, %v1303
        %v1312 = vsel %vm749, %v1308, 0.0
        %v1313 = vsel %vm750, %v1310, 0.0
        %v1314 = vsel %vm749, %v1309, 0.0
        %v1315 = vsel %vm750, %v1311, 0.0
        %1316 = vrot.lane.b32.xlu0 %v917, 126
        %v1317 = vpop.permute.xlu0 %1316
        %1318 = vrot.lane.b32.xlu0 %v919, 126
        %v1319 = vpop.permute.xlu0 %1318
        %1320 = vrot.lane.b32.xlu0 %v918, 126
        %v1321 = vpop.permute.xlu0 %1320
        %1322 = vrot.lane.b32.xlu0 %v920, 126
        %v1323 = vpop.permute.xlu0 %1322
        %vm1324 = vcmp.lt.s32.totalorder %v646, 126
        %v1325 = vsel %vm1324, %v1317, %v1321
        %v1326 = vsel %vm1324, %v1319, %v1323
        %v1327 = vsel %vm1324, %v1321, %v1317
        %v1328 = vsel %vm1324, %v1323, %v1319
        %v1329 = vsel %vm1027, 1, 0
        %v1330 = vperm.slane %v1329, 0
        %v1331 = vperm.slane %v1329, 1
        %vm1332 = vcmp.eq.s32.totalorder %v1330, 1
        %vm1333 = vcmp.eq.s32.totalorder %v1331, 1
        %v1334 = vsel %vm1332, %v1325, 0.0
        %v1335 = vsel %vm1333, %v1327, 0.0
        %v1336 = vsel %vm1332, %v1326, 0.0
        %v1337 = vsel %vm1333, %v1328, 0.0
        %s1338 = scalar_lea.vmem [#allocation3], 48
        %v1339 = vld [vmem:[%s1338] sm:$0xff]
        %v1340 = vld [vmem:[%s1338 + $0x8] sm:$0xff]
        %v1341 = vld [vmem:[%s1338 + $0x10] sm:$0xff]
        %v1343 = vsel %vm1139, %v1339, 0
        %v1346 = vsel %vm1139, %v1340, 0
        %v1349 = vsel %vm1139, %v1341, 0
        %1351 = vmatpush.msra.mxu0 0.0
        %1352 = vmatpush.msra.mxu0 0.0
        %1353 = vmatpush.msra.mxu0 0.0
        %1354 = vmatpush.msra.mxu0 0.0
        %1355 = vmatpush.msra.mxu0 0.0
        %1356 = vmatpush.msra.mxu0 0.0
        %1357 = vmatpush.msra.mxu0 %v1336
        %1358 = vmatpush.msra.mxu0 %v1334
        %1359 = vmatpush.msra.mxu0 %v1314
        %1360 = vmatpush.msra.mxu0 %v1312
        %1361 = vmatpush.msra.mxu0 %v919
        %1362 = vmatpush.msra.mxu0 %v917
        %1363 = vmatpush.msra.mxu0 %v1298
        %1364 = vmatpush.msra.mxu0 %v1296
        %1365 = vmatpush.msra.mxu0 %v1282
        %1366 = vmatpush.msra.mxu0 %v1280
        %1367 = vmatmul.f32.gmra.mxu0 %v1343
        %v1368 = vpop.f32.mrf.mxu0
        %v1369 = vadd.f32 0.0, %v1368
        %1370 = vmatmul.f32.gmra.mxu0 %v1346
        %v1371 = vpop.f32.mrf.mxu0
        %v1372 = vadd.f32 0.0, %v1371
        %1373 = vmatmul.f32.gmra.mxu0 %v1349
        %v1374 = vpop.f32.mrf.mxu0
        %v1375 = vadd.f32 0.0, %v1374
        %1376 = vdwg.mxu0
        %1377 = vmatpush.msra.mxu0 0.0
        %1378 = vmatpush.msra.mxu0 0.0
        %1379 = vmatpush.msra.mxu0 0.0
        %1380 = vmatpush.msra.mxu0 0.0
        %1381 = vmatpush.msra.mxu0 0.0
        %1382 = vmatpush.msra.mxu0 0.0
        %1383 = vmatpush.msra.mxu0 %v1337
        %1384 = vmatpush.msra.mxu0 %v1335
        %1385 = vmatpush.msra.mxu0 %v1315
        %1386 = vmatpush.msra.mxu0 %v1313
        %1387 = vmatpush.msra.mxu0 %v920
        %1388 = vmatpush.msra.mxu0 %v918
        %1389 = vmatpush.msra.mxu0 %v1299
        %1390 = vmatpush.msra.mxu0 %v1297
        %1391 = vmatpush.msra.mxu0 %v1283
        %1392 = vmatpush.msra.mxu0 %v1281
        %1393 = vmatmul.f32.gmra.mxu0 %v1343
        %v1394 = vpop.f32.mrf.mxu0
        %v1395 = vadd.f32 0.0, %v1394
        %1396 = vmatmul.f32.gmra.mxu0 %v1346
        %v1397 = vpop.f32.mrf.mxu0
        %v1398 = vadd.f32 0.0, %v1397
        %1399 = vmatmul.f32.gmra.mxu0 %v1349
        %v1400 = vpop.f32.mrf.mxu0
        %v1401 = vadd.f32 0.0, %v1400
        %1402 = vdwg.mxu0
        %v1403 = vadd.f32 %v1228, %v1369
        %v1404 = vadd.f32 %v1254, %v1395
        %v1405 = vadd.f32 %v1231, %v1372
        %v1406 = vadd.f32 %v1257, %v1398
        %v1407 = vadd.f32 %v1234, %v1375
        %v1408 = vadd.f32 %v1260, %v1401
        %1409 = vrot.lane.b32.xlu0 %v917, 114
        %v1410 = vpop.permute.xlu0 %1409
        %1411 = vrot.lane.b32.xlu0 %v919, 114
        %v1412 = vpop.permute.xlu0 %1411
        %1413 = vrot.lane.b32.xlu0 %v918, 114
        %v1414 = vpop.permute.xlu0 %1413
        %1415 = vrot.lane.b32.xlu0 %v920, 114
        %v1416 = vpop.permute.xlu0 %1415
        %vm1417 = vcmp.lt.s32.totalorder %v646, 114
        %v1418 = vsel %vm1417, %v1410, %v1414
        %v1419 = vsel %vm1417, %v1412, %v1416
        %v1420 = vsel %vm1417, %v1414, %v1410
        %v1421 = vsel %vm1417, %v1416, %v1412
        %vm1422 = vmand %vm767, %vm935
        %v1423 = vsel %vm1422, 1, 0
        %v1424 = vperm.slane %v1423, 0
        %v1425 = vperm.slane %v1423, 1
        %vm1426 = vcmp.eq.s32.totalorder %v1424, 1
        %vm1427 = vcmp.eq.s32.totalorder %v1425, 1
        %v1428 = vsel %vm1426, %v1418, 0.0
        %v1429 = vsel %vm1427, %v1420, 0.0
        %v1430 = vsel %vm1426, %v1419, 0.0
        %v1431 = vsel %vm1427, %v1421, 0.0
        %1432 = vrot.lane.b32.xlu0 %v917, 113
        %v1433 = vpop.permute.xlu0 %1432
        %1434 = vrot.lane.b32.xlu0 %v919, 113
        %v1435 = vpop.permute.xlu0 %1434
        %1436 = vrot.lane.b32.xlu0 %v918, 113
        %v1437 = vpop.permute.xlu0 %1436
        %1438 = vrot.lane.b32.xlu0 %v920, 113
        %v1439 = vpop.permute.xlu0 %1438
        %v1440 = vsel %vm764, %v1433, %v1437
        %v1441 = vsel %vm764, %v1435, %v1439
        %v1442 = vsel %vm764, %v1437, %v1433
        %v1443 = vsel %vm764, %v1439, %v1435
        %v1444 = vsel %vm772, %v1440, 0.0
        %v1445 = vsel %vm773, %v1442, 0.0
        %v1446 = vsel %vm772, %v1441, 0.0
        %v1447 = vsel %vm773, %v1443, 0.0
        %1448 = vrot.lane.b32.xlu0 %v917, 112
        %v1449 = vpop.permute.xlu0 %1448
        %1450 = vrot.lane.b32.xlu0 %v919, 112
        %v1451 = vpop.permute.xlu0 %1450
        %1452 = vrot.lane.b32.xlu0 %v918, 112
        %v1453 = vpop.permute.xlu0 %1452
        %1454 = vrot.lane.b32.xlu0 %v920, 112
        %v1455 = vpop.permute.xlu0 %1454
        %v1456 = vsel %vm787, %v1449, %v1453
        %v1457 = vsel %vm787, %v1451, %v1455
        %v1458 = vsel %vm787, %v1453, %v1449
        %v1459 = vsel %vm787, %v1455, %v1451
        %v1460 = vsel %vm793, %v1456, 0.0
        %v1461 = vsel %vm794, %v1458, 0.0
        %v1462 = vsel %vm793, %v1457, 0.0
        %v1463 = vsel %vm794, %v1459, 0.0
        %1464 = vrot.lane.b32.xlu0 %v917, 111
        %v1465 = vpop.permute.xlu0 %1464
        %1466 = vrot.lane.b32.xlu0 %v919, 111
        %v1467 = vpop.permute.xlu0 %1466
        %1468 = vrot.lane.b32.xlu0 %v918, 111
        %v1469 = vpop.permute.xlu0 %1468
        %1470 = vrot.lane.b32.xlu0 %v920, 111
        %v1471 = vpop.permute.xlu0 %1470
        %v1472 = vsel %vm808, %v1465, %v1469
        %v1473 = vsel %vm808, %v1467, %v1471
        %v1474 = vsel %vm808, %v1469, %v1465
        %v1475 = vsel %vm808, %v1471, %v1467
        %v1476 = vsel %vm815, %v1472, 0.0
        %v1477 = vsel %vm816, %v1474, 0.0
        %v1478 = vsel %vm815, %v1473, 0.0
        %v1479 = vsel %vm816, %v1475, 0.0
        %1480 = vrot.lane.b32.xlu0 %v917, 110
        %v1481 = vpop.permute.xlu0 %1480
        %1482 = vrot.lane.b32.xlu0 %v919, 110
        %v1483 = vpop.permute.xlu0 %1482
        %1484 = vrot.lane.b32.xlu0 %v918, 110
        %v1485 = vpop.permute.xlu0 %1484
        %1486 = vrot.lane.b32.xlu0 %v920, 110
        %v1487 = vpop.permute.xlu0 %1486
        %vm1488 = vcmp.lt.s32.totalorder %v646, 110
        %v1489 = vsel %vm1488, %v1481, %v1485
        %v1490 = vsel %vm1488, %v1483, %v1487
        %v1491 = vsel %vm1488, %v1485, %v1481
        %v1492 = vsel %vm1488, %v1487, %v1483
        %vm1493 = vmand %vm767, %vm1027
        %v1494 = vsel %vm1493, 1, 0
        %v1495 = vperm.slane %v1494, 0
        %v1496 = vperm.slane %v1494, 1
        %vm1497 = vcmp.eq.s32.totalorder %v1495, 1
        %vm1498 = vcmp.eq.s32.totalorder %v1496, 1
        %v1499 = vsel %vm1497, %v1489, 0.0
        %v1500 = vsel %vm1498, %v1491, 0.0
        %v1501 = vsel %vm1497, %v1490, 0.0
        %v1502 = vsel %vm1498, %v1492, 0.0
        %s1503 = scalar_lea.vmem [#allocation3], 72
        %v1504 = vld [vmem:[%s1503] sm:$0xff]
        %v1505 = vld [vmem:[%s1503 + $0x8] sm:$0xff]
        %v1506 = vld [vmem:[%s1503 + $0x10] sm:$0xff]
        %v1508 = vsel %vm1139, %v1504, 0
        %v1511 = vsel %vm1139, %v1505, 0
        %v1514 = vsel %vm1139, %v1506, 0
        %1516 = vmatpush.msra.mxu0 0.0
        %1517 = vmatpush.msra.mxu0 0.0
        %1518 = vmatpush.msra.mxu0 0.0
        %1519 = vmatpush.msra.mxu0 0.0
        %1520 = vmatpush.msra.mxu0 0.0
        %1521 = vmatpush.msra.mxu0 0.0
        %1522 = vmatpush.msra.mxu0 %v1501
        %1523 = vmatpush.msra.mxu0 %v1499
        %1524 = vmatpush.msra.mxu0 %v1478
        %1525 = vmatpush.msra.mxu0 %v1476
        %1526 = vmatpush.msra.mxu0 %v1462
        %1527 = vmatpush.msra.mxu0 %v1460
        %1528 = vmatpush.msra.mxu0 %v1446
        %1529 = vmatpush.msra.mxu0 %v1444
        %1530 = vmatpush.msra.mxu0 %v1430
        %1531 = vmatpush.msra.mxu0 %v1428
        %1532 = vmatmul.f32.gmra.mxu0 %v1508
        %v1533 = vpop.f32.mrf.mxu0
        %v1534 = vadd.f32 0.0, %v1533
        %1535 = vmatmul.f32.gmra.mxu0 %v1511
        %v1536 = vpop.f32.mrf.mxu0
        %v1537 = vadd.f32 0.0, %v1536
        %1538 = vmatmul.f32.gmra.mxu0 %v1514
        %v1539 = vpop.f32.mrf.mxu0
        %v1540 = vadd.f32 0.0, %v1539
        %1541 = vdwg.mxu0
        %1542 = vmatpush.msra.mxu0 0.0
        %1543 = vmatpush.msra.mxu0 0.0
        %1544 = vmatpush.msra.mxu0 0.0
        %1545 = vmatpush.msra.mxu0 0.0
        %1546 = vmatpush.msra.mxu0 0.0
        %1547 = vmatpush.msra.mxu0 0.0
        %1548 = vmatpush.msra.mxu0 %v1502
        %1549 = vmatpush.msra.mxu0 %v1500
        %1550 = vmatpush.msra.mxu0 %v1479
        %1551 = vmatpush.msra.mxu0 %v1477
        %1552 = vmatpush.msra.mxu0 %v1463
        %1553 = vmatpush.msra.mxu0 %v1461
        %1554 = vmatpush.msra.mxu0 %v1447
        %1555 = vmatpush.msra.mxu0 %v1445
        %1556 = vmatpush.msra.mxu0 %v1431
        %1557 = vmatpush.msra.mxu0 %v1429
        %1558 = vmatmul.f32.gmra.mxu0 %v1508
        %v1559 = vpop.f32.mrf.mxu0
        %v1560 = vadd.f32 0.0, %v1559
        %1561 = vmatmul.f32.gmra.mxu0 %v1511
        %v1562 = vpop.f32.mrf.mxu0
        %v1563 = vadd.f32 0.0, %v1562
        %1564 = vmatmul.f32.gmra.mxu0 %v1514
        %v1565 = vpop.f32.mrf.mxu0
        %v1566 = vadd.f32 0.0, %v1565
        %1567 = vdwg.mxu0
        %v1568 = vadd.f32 %v1403, %v1534
        %v1569 = vadd.f32 %v1404, %v1560
        %v1570 = vadd.f32 %v1405, %v1537
        %v1571 = vadd.f32 %v1406, %v1563
        %v1572 = vadd.f32 %v1407, %v1540
        %v1573 = vadd.f32 %v1408, %v1566
        %1574 = vrot.lane.b32.xlu0 %v917, 98
        %v1575 = vpop.permute.xlu0 %1574
        %1576 = vrot.lane.b32.xlu0 %v919, 98
        %v1577 = vpop.permute.xlu0 %1576
        %1578 = vrot.lane.b32.xlu0 %v918, 98
        %v1579 = vpop.permute.xlu0 %1578
        %1580 = vrot.lane.b32.xlu0 %v920, 98
        %v1581 = vpop.permute.xlu0 %1580
        %vm1582 = vcmp.lt.s32.totalorder %v646, 98
        %v1583 = vsel %vm1582, %v1575, %v1579
        %v1584 = vsel %vm1582, %v1577, %v1581
        %v1585 = vsel %vm1582, %v1579, %v1575
        %v1586 = vsel %vm1582, %v1581, %v1577
        %vm1587 = vcmp.lt.s32.totalorder %v474, 14
        %vm1588 = vmand %vm1587, %vm935
        %v1589 = vsel %vm1588, 1, 0
        %v1590 = vperm.slane %v1589, 0
        %v1591 = vperm.slane %v1589, 1
        %vm1592 = vcmp.eq.s32.totalorder %v1590, 1
        %vm1593 = vcmp.eq.s32.totalorder %v1591, 1
        %v1594 = vsel %vm1592, %v1583, 0.0
        %v1595 = vsel %vm1593, %v1585, 0.0
        %v1596 = vsel %vm1592, %v1584, 0.0
        %v1597 = vsel %vm1593, %v1586, 0.0
        %1598 = vrot.lane.b32.xlu0 %v917, 97
        %v1599 = vpop.permute.xlu0 %1598
        %1600 = vrot.lane.b32.xlu0 %v919, 97
        %v1601 = vpop.permute.xlu0 %1600
        %1602 = vrot.lane.b32.xlu0 %v918, 97
        %v1603 = vpop.permute.xlu0 %1602
        %1604 = vrot.lane.b32.xlu0 %v920, 97
        %v1605 = vpop.permute.xlu0 %1604
        %vm1606 = vcmp.lt.s32.totalorder %v646, 97
        %v1607 = vsel %vm1606, %v1599, %v1603
        %v1608 = vsel %vm1606, %v1601, %v1605
        %v1609 = vsel %vm1606, %v1603, %v1599
        %v1610 = vsel %vm1606, %v1605, %v1601
        %vm1611 = vmand %vm1587, %vm651
        %v1612 = vsel %vm1611, 1, 0
        %v1613 = vperm.slane %v1612, 0
        %v1614 = vperm.slane %v1612, 1
        %vm1615 = vcmp.eq.s32.totalorder %v1613, 1
        %vm1616 = vcmp.eq.s32.totalorder %v1614, 1
        %v1617 = vsel %vm1615, %v1607, 0.0
        %v1618 = vsel %vm1616, %v1609, 0.0
        %v1619 = vsel %vm1615, %v1608, 0.0
        %v1620 = vsel %vm1616, %v1610, 0.0
        %1621 = vrot.lane.b32.xlu0 %v917, 96
        %v1622 = vpop.permute.xlu0 %1621
        %1623 = vrot.lane.b32.xlu0 %v919, 96
        %v1624 = vpop.permute.xlu0 %1623
        %1625 = vrot.lane.b32.xlu0 %v918, 96
        %v1626 = vpop.permute.xlu0 %1625
        %1627 = vrot.lane.b32.xlu0 %v920, 96
        %v1628 = vpop.permute.xlu0 %1627
        %vm1629 = vcmp.lt.s32.totalorder %v646, 96
        %v1630 = vsel %vm1629, %v1622, %v1626
        %v1631 = vsel %vm1629, %v1624, %v1628
        %v1632 = vsel %vm1629, %v1626, %v1622
        %v1633 = vsel %vm1629, %v1628, %v1624
        %v1634 = vsel %vm1587, 1, 0
        %v1635 = vperm.slane %v1634, 0
        %v1636 = vperm.slane %v1634, 1
        %vm1637 = vcmp.eq.s32.totalorder %v1635, 1
        %vm1638 = vcmp.eq.s32.totalorder %v1636, 1
        %v1639 = vsel %vm1637, %v1630, 0.0
        %v1640 = vsel %vm1638, %v1632, 0.0
        %v1641 = vsel %vm1637, %v1631, 0.0
        %v1642 = vsel %vm1638, %v1633, 0.0
        %1643 = vrot.lane.b32.xlu0 %v917, 95
        %v1644 = vpop.permute.xlu0 %1643
        %1645 = vrot.lane.b32.xlu0 %v919, 95
        %v1646 = vpop.permute.xlu0 %1645
        %1647 = vrot.lane.b32.xlu0 %v918, 95
        %v1648 = vpop.permute.xlu0 %1647
        %1649 = vrot.lane.b32.xlu0 %v920, 95
        %v1650 = vpop.permute.xlu0 %1649
        %vm1651 = vcmp.lt.s32.totalorder %v646, 95
        %v1652 = vsel %vm1651, %v1644, %v1648
        %v1653 = vsel %vm1651, %v1646, %v1650
        %v1654 = vsel %vm1651, %v1648, %v1644
        %v1655 = vsel %vm1651, %v1650, %v1646
        %vm1656 = vmand %vm1587, %vm695
        %v1657 = vsel %vm1656, 1, 0
        %v1658 = vperm.slane %v1657, 0
        %v1659 = vperm.slane %v1657, 1
        %vm1660 = vcmp.eq.s32.totalorder %v1658, 1
        %vm1661 = vcmp.eq.s32.totalorder %v1659, 1
        %v1662 = vsel %vm1660, %v1652, 0.0
        %v1663 = vsel %vm1661, %v1654, 0.0
        %v1664 = vsel %vm1660, %v1653, 0.0
        %v1665 = vsel %vm1661, %v1655, 0.0
        %1666 = vrot.lane.b32.xlu0 %v917, 94
        %v1667 = vpop.permute.xlu0 %1666
        %1668 = vrot.lane.b32.xlu0 %v919, 94
        %v1669 = vpop.permute.xlu0 %1668
        %1670 = vrot.lane.b32.xlu0 %v918, 94
        %v1671 = vpop.permute.xlu0 %1670
        %1672 = vrot.lane.b32.xlu0 %v920, 94
        %v1673 = vpop.permute.xlu0 %1672
        %vm1674 = vcmp.lt.s32.totalorder %v646, 94
        %v1675 = vsel %vm1674, %v1667, %v1671
        %v1676 = vsel %vm1674, %v1669, %v1673
        %v1677 = vsel %vm1674, %v1671, %v1667
        %v1678 = vsel %vm1674, %v1673, %v1669
        %vm1679 = vmand %vm1587, %vm1027
        %v1680 = vsel %vm1679, 1, 0
        %v1681 = vperm.slane %v1680, 0
        %v1682 = vperm.slane %v1680, 1
        %vm1683 = vcmp.eq.s32.totalorder %v1681, 1
        %vm1684 = vcmp.eq.s32.totalorder %v1682, 1
        %v1685 = vsel %vm1683, %v1675, 0.0
        %v1686 = vsel %vm1684, %v1677, 0.0
        %v1687 = vsel %vm1683, %v1676, 0.0
        %v1688 = vsel %vm1684, %v1678, 0.0
        %s1689 = scalar_lea.vmem [#allocation3], 96
        %v1690 = vld [vmem:[%s1689] sm:$0xff]
        %v1691 = vld [vmem:[%s1689 + $0x8] sm:$0xff]
        %v1692 = vld [vmem:[%s1689 + $0x10] sm:$0xff]
        %v1694 = vsel %vm1139, %v1690, 0
        %v1697 = vsel %vm1139, %v1691, 0
        %v1700 = vsel %vm1139, %v1692, 0
        %1702 = vmatpush.msra.mxu0 0.0
        %1703 = vmatpush.msra.mxu0 0.0
        %1704 = vmatpush.msra.mxu0 0.0
        %1705 = vmatpush.msra.mxu0 0.0
        %1706 = vmatpush.msra.mxu0 0.0
        %1707 = vmatpush.msra.mxu0 0.0
        %1708 = vmatpush.msra.mxu0 %v1687
        %1709 = vmatpush.msra.mxu0 %v1685
        %1710 = vmatpush.msra.mxu0 %v1664
        %1711 = vmatpush.msra.mxu0 %v1662
        %1712 = vmatpush.msra.mxu0 %v1641
        %1713 = vmatpush.msra.mxu0 %v1639
        %1714 = vmatpush.msra.mxu0 %v1619
        %1715 = vmatpush.msra.mxu0 %v1617
        %1716 = vmatpush.msra.mxu0 %v1596
        %1717 = vmatpush.msra.mxu0 %v1594
        %1718 = vmatmul.f32.gmra.mxu0 %v1694
        %v1719 = vpop.f32.mrf.mxu0
        %v1720 = vadd.f32 0.0, %v1719
        %1721 = vmatmul.f32.gmra.mxu0 %v1697
        %v1722 = vpop.f32.mrf.mxu0
        %v1723 = vadd.f32 0.0, %v1722
        %1724 = vmatmul.f32.gmra.mxu0 %v1700
        %v1725 = vpop.f32.mrf.mxu0
        %v1726 = vadd.f32 0.0, %v1725
        %1727 = vdwg.mxu0
        %1728 = vmatpush.msra.mxu0 0.0
        %1729 = vmatpush.msra.mxu0 0.0
        %1730 = vmatpush.msra.mxu0 0.0
        %1731 = vmatpush.msra.mxu0 0.0
        %1732 = vmatpush.msra.mxu0 0.0
        %1733 = vmatpush.msra.mxu0 0.0
        %1734 = vmatpush.msra.mxu0 %v1688
        %1735 = vmatpush.msra.mxu0 %v1686
        %1736 = vmatpush.msra.mxu0 %v1665
        %1737 = vmatpush.msra.mxu0 %v1663
        %1738 = vmatpush.msra.mxu0 %v1642
        %1739 = vmatpush.msra.mxu0 %v1640
        %1740 = vmatpush.msra.mxu0 %v1620
        %1741 = vmatpush.msra.mxu0 %v1618
        %1742 = vmatpush.msra.mxu0 %v1597
        %1743 = vmatpush.msra.mxu0 %v1595
        %1744 = vmatmul.f32.gmra.mxu0 %v1694
        %v1745 = vpop.f32.mrf.mxu0
        %v1746 = vadd.f32 0.0, %v1745
        %1747 = vmatmul.f32.gmra.mxu0 %v1697
        %v1748 = vpop.f32.mrf.mxu0
        %v1749 = vadd.f32 0.0, %v1748
        %1750 = vmatmul.f32.gmra.mxu0 %v1700
        %v1751 = vpop.f32.mrf.mxu0
        %v1752 = vadd.f32 0.0, %v1751
        %1753 = vdwg.mxu0
        %v1754 = vadd.f32 %v1568, %v1720
        %v1755 = vadd.f32 %v1569, %v1746
        %v1756 = vadd.f32 %v1570, %v1723
        %v1757 = vadd.f32 %v1571, %v1749
        %v1758 = vadd.f32 %v1572, %v1726
        %v1759 = vadd.f32 %v1573, %v1752
        %v1760 = vld [vmem:[%s8] sm:$0xff]
        %v1761 = vld [vmem:[%s8 + $0x8] sm:$0xff]
        %v1762 = vld [vmem:[%s8 + $0x10] sm:$0xff]
        %1764 = vset.pattern.permute.xlu0 0
        %1765 = vperm.xlu0 %1764, %v1760
        %v1766 = vpop.permute.xlu0 %1765
        %1769 = vset.pattern.permute.xlu0 0
        %1770 = vperm.xlu0 %1769, %v1761
        %v1771 = vpop.permute.xlu0 %1770
        %1774 = vset.pattern.permute.xlu0 0
        %1775 = vperm.xlu0 %1774, %v1762
        %v1776 = vpop.permute.xlu0 %1775
        %v1778 = vadd.f32 %v1754, %v1766
        %v1779 = vadd.f32 %v1755, %v1766
        %v1780 = vadd.f32 %v1756, %v1771
        %v1781 = vadd.f32 %v1757, %v1771
        %v1782 = vadd.f32 %v1758, %v1776
        %v1783 = vadd.f32 %v1759, %v1776
        %1784 = vst [vmem:[%s467 + $0x50] sm:$0xff] %v1778
        %1785 = vst [vmem:[%s467 + $0x58] sm:$0xff] %v1779
        %1786 = vst [vmem:[%s467 + $0x60] sm:$0xff] %v1780
        %1787 = vst [vmem:[%s467 + $0x68] sm:$0xff] %v1781
        %1788 = vst [vmem:[%s467 + $0x70] sm:$0xff] %v1782
        %1789 = vst [vmem:[%s467 + $0x78] sm:$0xff] %v1783
        %v1790 = vld [vmem:[#allocation2 + $0x40] sm:$0xff]
        %v1791 = vld [vmem:[#allocation2 + $0x48] sm:$0xff]
        %v1792 = vld [vmem:[#allocation2 + $0x50] sm:$0xff]
        %v1793 = vld [vmem:[#allocation2 + $0x58] sm:$0xff]
        %1794 = vrot.lane.b32.xlu0 %v1790, 17
        %v1795 = vpop.permute.xlu0 %1794
        %1796 = vrot.lane.b32.xlu0 %v1792, 17
        %v1797 = vpop.permute.xlu0 %1796
        %1798 = vrot.lane.b32.xlu0 %v1791, 17
        %v1799 = vpop.permute.xlu0 %1798
        %1800 = vrot.lane.b32.xlu0 %v1793, 17
        %v1801 = vpop.permute.xlu0 %1800
        %v1802 = vsel %vm647, %v1795, %v1799
        %v1803 = vsel %vm647, %v1797, %v1801
        %v1804 = vsel %vm647, %v1799, %v1795
        %v1805 = vsel %vm647, %v1801, %v1797
        %v1806 = vsel %vm656, %v1804, 0.0
        %v1807 = vsel %vm657, %v1802, 0.0
        %v1808 = vsel %vm656, %v1805, 0.0
        %v1809 = vsel %vm657, %v1803, 0.0
        %1810 = vrot.lane.b32.xlu0 %v1790, 16
        %v1811 = vpop.permute.xlu0 %1810
        %1812 = vrot.lane.b32.xlu0 %v1792, 16
        %v1813 = vpop.permute.xlu0 %1812
        %1814 = vrot.lane.b32.xlu0 %v1791, 16
        %v1815 = vpop.permute.xlu0 %1814
        %1816 = vrot.lane.b32.xlu0 %v1793, 16
        %v1817 = vpop.permute.xlu0 %1816
        %v1818 = vsel %vm671, %v1811, %v1815
        %v1819 = vsel %vm671, %v1813, %v1817
        %v1820 = vsel %vm671, %v1815, %v1811
        %v1821 = vsel %vm671, %v1817, %v1813
        %v1822 = vsel %vm677, %v1820, 0.0
        %v1823 = vsel %vm678, %v1818, 0.0
        %v1824 = vsel %vm677, %v1821, 0.0
        %v1825 = vsel %vm678, %v1819, 0.0
        %1826 = vrot.lane.b32.xlu0 %v1790, 15
        %v1827 = vpop.permute.xlu0 %1826
        %1828 = vrot.lane.b32.xlu0 %v1792, 15
        %v1829 = vpop.permute.xlu0 %1828
        %1830 = vrot.lane.b32.xlu0 %v1791, 15
        %v1831 = vpop.permute.xlu0 %1830
        %1832 = vrot.lane.b32.xlu0 %v1793, 15
        %v1833 = vpop.permute.xlu0 %1832
        %v1834 = vsel %vm692, %v1827, %v1831
        %v1835 = vsel %vm692, %v1829, %v1833
        %v1836 = vsel %vm692, %v1831, %v1827
        %v1837 = vsel %vm692, %v1833, %v1829
        %v1838 = vsel %vm700, %v1836, 0.0
        %v1839 = vsel %vm701, %v1834, 0.0
        %v1840 = vsel %vm700, %v1837, 0.0
        %v1841 = vsel %vm701, %v1835, 0.0
        %v1842 = vld [vmem:[%s9] sm:$0xff]
        %v1843 = vld [vmem:[%s9 + $0x8] sm:$0xff]
        %v1844 = vld [vmem:[%s9 + $0x10] sm:$0xff]
        %1845 = vrot.lane.b32.xlu0 %v1790, 1
        %v1846 = vpop.permute.xlu0 %1845
        %1847 = vrot.lane.b32.xlu0 %v1792, 1
        %v1848 = vpop.permute.xlu0 %1847
        %1849 = vrot.lane.b32.xlu0 %v1791, 1
        %v1850 = vpop.permute.xlu0 %1849
        %1851 = vrot.lane.b32.xlu0 %v1793, 1
        %v1852 = vpop.permute.xlu0 %1851
        %v1853 = vsel %vm715, %v1846, %v1850
        %v1854 = vsel %vm715, %v1848, %v1852
        %v1855 = vsel %vm715, %v1850, %v1846
        %v1856 = vsel %vm715, %v1852, %v1848
        %v1857 = vsel %vm721, %v1855, 0.0
        %v1858 = vsel %vm722, %v1853, 0.0
        %v1859 = vsel %vm721, %v1856, 0.0
        %v1860 = vsel %vm722, %v1854, 0.0
        %1861 = vrot.lane.b32.xlu0 %v1790, 127
        %v1862 = vpop.permute.xlu0 %1861
        %1863 = vrot.lane.b32.xlu0 %v1792, 127
        %v1864 = vpop.permute.xlu0 %1863
        %1865 = vrot.lane.b32.xlu0 %v1791, 127
        %v1866 = vpop.permute.xlu0 %1865
        %1867 = vrot.lane.b32.xlu0 %v1793, 127
        %v1868 = vpop.permute.xlu0 %1867
        %v1869 = vsel %vm743, %v1862, %v1866
        %v1870 = vsel %vm743, %v1864, %v1868
        %v1871 = vsel %vm743, %v1866, %v1862
        %v1872 = vsel %vm743, %v1868, %v1864
        %v1873 = vsel %vm749, %v1869, 0.0
        %v1874 = vsel %vm750, %v1871, 0.0
        %v1875 = vsel %vm749, %v1870, 0.0
        %v1876 = vsel %vm750, %v1872, 0.0
        %s1877 = scalar_lea.vmem %s9, 24
        %v1878 = vld [vmem:[%s1877] sm:$0xff]
        %v1879 = vld [vmem:[%s1877 + $0x8] sm:$0xff]
        %v1880 = vld [vmem:[%s1877 + $0x10] sm:$0xff]
        %vm1881 = vcmask 392192
        %v1883 = vsel %vm1881, %v1878, 0
        %v1886 = vsel %vm1881, %v1879, 0
        %v1889 = vsel %vm1881, %v1880, 0
        %1891 = vmatpush.msra.mxu0 0.0
        %1892 = vmatpush.msra.mxu0 0.0
        %1893 = vmatpush.msra.mxu0 0.0
        %1894 = vmatpush.msra.mxu0 0.0
        %1895 = vmatpush.msra.mxu0 0.0
        %1896 = vmatpush.msra.mxu0 0.0
        %1897 = vmatpush.msra.mxu0 0.0
        %1898 = vmatpush.msra.mxu0 0.0
        %1899 = vmatpush.msra.mxu0 0.0
        %1900 = vmatpush.msra.mxu0 0.0
        %1901 = vmatpush.msra.mxu0 %v1875
        %1902 = vmatpush.msra.mxu0 %v1873
        %1903 = vmatpush.msra.mxu0 %v1792
        %1904 = vmatpush.msra.mxu0 %v1790
        %1905 = vmatpush.msra.mxu0 %v1859
        %1906 = vmatpush.msra.mxu0 %v1857
        %1907 = vmatmul.f32.gmra.mxu0 %v1883
        %v1908 = vpop.f32.mrf.mxu0
        %v1909 = vadd.f32 0.0, %v1908
        %1910 = vmatmul.f32.gmra.mxu0 %v1886
        %v1911 = vpop.f32.mrf.mxu0
        %v1912 = vadd.f32 0.0, %v1911
        %1913 = vmatmul.f32.gmra.mxu0 %v1889
        %v1914 = vpop.f32.mrf.mxu0
        %v1915 = vadd.f32 0.0, %v1914
        %1916 = vdwg.mxu0
        %1917 = vmatpush.msra.mxu0 0.0
        %1918 = vmatpush.msra.mxu0 0.0
        %1919 = vmatpush.msra.mxu0 0.0
        %1920 = vmatpush.msra.mxu0 0.0
        %1921 = vmatpush.msra.mxu0 0.0
        %1922 = vmatpush.msra.mxu0 0.0
        %1923 = vmatpush.msra.mxu0 0.0
        %1924 = vmatpush.msra.mxu0 0.0
        %1925 = vmatpush.msra.mxu0 0.0
        %1926 = vmatpush.msra.mxu0 0.0
        %1927 = vmatpush.msra.mxu0 %v1876
        %1928 = vmatpush.msra.mxu0 %v1874
        %1929 = vmatpush.msra.mxu0 %v1793
        %1930 = vmatpush.msra.mxu0 %v1791
        %1931 = vmatpush.msra.mxu0 %v1860
        %1932 = vmatpush.msra.mxu0 %v1858
        %1933 = vmatmul.f32.gmra.mxu0 %v1883
        %v1934 = vpop.f32.mrf.mxu0
        %v1935 = vadd.f32 0.0, %v1934
        %1936 = vmatmul.f32.gmra.mxu0 %v1886
        %v1937 = vpop.f32.mrf.mxu0
        %v1938 = vadd.f32 0.0, %v1937
        %1939 = vmatmul.f32.gmra.mxu0 %v1889
        %v1940 = vpop.f32.mrf.mxu0
        %v1941 = vadd.f32 0.0, %v1940
        %1942 = vdwg.mxu0
        %v1944 = vsel %vm1881, %v1842, 0
        %v1947 = vsel %vm1881, %v1843, 0
        %v1950 = vsel %vm1881, %v1844, 0
        %1952 = vmatpush.msra.mxu0 0.0
        %1953 = vmatpush.msra.mxu0 0.0
        %1954 = vmatpush.msra.mxu0 0.0
        %1955 = vmatpush.msra.mxu0 0.0
        %1956 = vmatpush.msra.mxu0 0.0
        %1957 = vmatpush.msra.mxu0 0.0
        %1958 = vmatpush.msra.mxu0 0.0
        %1959 = vmatpush.msra.mxu0 0.0
        %1960 = vmatpush.msra.mxu0 0.0
        %1961 = vmatpush.msra.mxu0 0.0
        %1962 = vmatpush.msra.mxu0 %v1840
        %1963 = vmatpush.msra.mxu0 %v1838
        %1964 = vmatpush.msra.mxu0 %v1824
        %1965 = vmatpush.msra.mxu0 %v1822
        %1966 = vmatpush.msra.mxu0 %v1808
        %1967 = vmatpush.msra.mxu0 %v1806
        %1968 = vmatmul.f32.gmra.mxu0 %v1944
        %v1969 = vpop.f32.mrf.mxu0
        %v1970 = vadd.f32 %v1909, %v1969
        %1971 = vmatmul.f32.gmra.mxu0 %v1947
        %v1972 = vpop.f32.mrf.mxu0
        %v1973 = vadd.f32 %v1912, %v1972
        %1974 = vmatmul.f32.gmra.mxu0 %v1950
        %v1975 = vpop.f32.mrf.mxu0
        %v1976 = vadd.f32 %v1915, %v1975
        %1977 = vdwg.mxu0
        %1978 = vmatpush.msra.mxu0 0.0
        %1979 = vmatpush.msra.mxu0 0.0
        %1980 = vmatpush.msra.mxu0 0.0
        %1981 = vmatpush.msra.mxu0 0.0
        %1982 = vmatpush.msra.mxu0 0.0
        %1983 = vmatpush.msra.mxu0 0.0
        %1984 = vmatpush.msra.mxu0 0.0
        %1985 = vmatpush.msra.mxu0 0.0
        %1986 = vmatpush.msra.mxu0 0.0
        %1987 = vmatpush.msra.mxu0 0.0
        %1988 = vmatpush.msra.mxu0 %v1841
        %1989 = vmatpush.msra.mxu0 %v1839
        %1990 = vmatpush.msra.mxu0 %v1825
        %1991 = vmatpush.msra.mxu0 %v1823
        %1992 = vmatpush.msra.mxu0 %v1809
        %1993 = vmatpush.msra.mxu0 %v1807
        %1994 = vmatmul.f32.gmra.mxu0 %v1944
        %v1995 = vpop.f32.mrf.mxu0
        %v1996 = vadd.f32 %v1935, %v1995
        %1997 = vmatmul.f32.gmra.mxu0 %v1947
        %v1998 = vpop.f32.mrf.mxu0
        %v1999 = vadd.f32 %v1938, %v1998
        %2000 = vmatmul.f32.gmra.mxu0 %v1950
        %v2001 = vpop.f32.mrf.mxu0
        %v2002 = vadd.f32 %v1941, %v2001
        %2003 = vdwg.mxu0
        %2004 = vrot.lane.b32.xlu0 %v1790, 113
        %v2005 = vpop.permute.xlu0 %2004
        %2006 = vrot.lane.b32.xlu0 %v1792, 113
        %v2007 = vpop.permute.xlu0 %2006
        %2008 = vrot.lane.b32.xlu0 %v1791, 113
        %v2009 = vpop.permute.xlu0 %2008
        %2010 = vrot.lane.b32.xlu0 %v1793, 113
        %v2011 = vpop.permute.xlu0 %2010
        %v2012 = vsel %vm764, %v2005, %v2009
        %v2013 = vsel %vm764, %v2007, %v2011
        %v2014 = vsel %vm764, %v2009, %v2005
        %v2015 = vsel %vm764, %v2011, %v2007
        %v2016 = vsel %vm772, %v2012, 0.0
        %v2017 = vsel %vm773, %v2014, 0.0
        %v2018 = vsel %vm772, %v2013, 0.0
        %v2019 = vsel %vm773, %v2015, 0.0
        %2020 = vrot.lane.b32.xlu0 %v1790, 112
        %v2021 = vpop.permute.xlu0 %2020
        %2022 = vrot.lane.b32.xlu0 %v1792, 112
        %v2023 = vpop.permute.xlu0 %2022
        %2024 = vrot.lane.b32.xlu0 %v1791, 112
        %v2025 = vpop.permute.xlu0 %2024
        %2026 = vrot.lane.b32.xlu0 %v1793, 112
        %v2027 = vpop.permute.xlu0 %2026
        %v2028 = vsel %vm787, %v2021, %v2025
        %v2029 = vsel %vm787, %v2023, %v2027
        %v2030 = vsel %vm787, %v2025, %v2021
        %v2031 = vsel %vm787, %v2027, %v2023
        %v2032 = vsel %vm793, %v2028, 0.0
        %v2033 = vsel %vm794, %v2030, 0.0
        %v2034 = vsel %vm793, %v2029, 0.0
        %v2035 = vsel %vm794, %v2031, 0.0
        %2036 = vrot.lane.b32.xlu0 %v1790, 111
        %v2037 = vpop.permute.xlu0 %2036
        %2038 = vrot.lane.b32.xlu0 %v1792, 111
        %v2039 = vpop.permute.xlu0 %2038
        %2040 = vrot.lane.b32.xlu0 %v1791, 111
        %v2041 = vpop.permute.xlu0 %2040
        %2042 = vrot.lane.b32.xlu0 %v1793, 111
        %v2043 = vpop.permute.xlu0 %2042
        %v2044 = vsel %vm808, %v2037, %v2041
        %v2045 = vsel %vm808, %v2039, %v2043
        %v2046 = vsel %vm808, %v2041, %v2037
        %v2047 = vsel %vm808, %v2043, %v2039
        %v2048 = vsel %vm815, %v2044, 0.0
        %v2049 = vsel %vm816, %v2046, 0.0
        %v2050 = vsel %vm815, %v2045, 0.0
        %v2051 = vsel %vm816, %v2047, 0.0
        %s2052 = scalar_lea.vmem %s9, 48
        %v2053 = vld [vmem:[%s2052] sm:$0xff]
        %v2054 = vld [vmem:[%s2052 + $0x8] sm:$0xff]
        %v2055 = vld [vmem:[%s2052 + $0x10] sm:$0xff]
        %v2057 = vsel %vm1881, %v2053, 0
        %v2060 = vsel %vm1881, %v2054, 0
        %v2063 = vsel %vm1881, %v2055, 0
        %2065 = vmatpush.msra.mxu0 0.0
        %2066 = vmatpush.msra.mxu0 0.0
        %2067 = vmatpush.msra.mxu0 0.0
        %2068 = vmatpush.msra.mxu0 0.0
        %2069 = vmatpush.msra.mxu0 0.0
        %2070 = vmatpush.msra.mxu0 0.0
        %2071 = vmatpush.msra.mxu0 0.0
        %2072 = vmatpush.msra.mxu0 0.0
        %2073 = vmatpush.msra.mxu0 0.0
        %2074 = vmatpush.msra.mxu0 0.0
        %2075 = vmatpush.msra.mxu0 %v2050
        %2076 = vmatpush.msra.mxu0 %v2048
        %2077 = vmatpush.msra.mxu0 %v2034
        %2078 = vmatpush.msra.mxu0 %v2032
        %2079 = vmatpush.msra.mxu0 %v2018
        %2080 = vmatpush.msra.mxu0 %v2016
        %2081 = vmatmul.f32.gmra.mxu0 %v2057
        %v2082 = vpop.f32.mrf.mxu0
        %v2083 = vadd.f32 0.0, %v2082
        %2084 = vmatmul.f32.gmra.mxu0 %v2060
        %v2085 = vpop.f32.mrf.mxu0
        %v2086 = vadd.f32 0.0, %v2085
        %2087 = vmatmul.f32.gmra.mxu0 %v2063
        %v2088 = vpop.f32.mrf.mxu0
        %v2089 = vadd.f32 0.0, %v2088
        %2090 = vdwg.mxu0
        %2091 = vmatpush.msra.mxu0 0.0
        %2092 = vmatpush.msra.mxu0 0.0
        %2093 = vmatpush.msra.mxu0 0.0
        %2094 = vmatpush.msra.mxu0 0.0
        %2095 = vmatpush.msra.mxu0 0.0
        %2096 = vmatpush.msra.mxu0 0.0
        %2097 = vmatpush.msra.mxu0 0.0
        %2098 = vmatpush.msra.mxu0 0.0
        %2099 = vmatpush.msra.mxu0 0.0
        %2100 = vmatpush.msra.mxu0 0.0
        %2101 = vmatpush.msra.mxu0 %v2051
        %2102 = vmatpush.msra.mxu0 %v2049
        %2103 = vmatpush.msra.mxu0 %v2035
        %2104 = vmatpush.msra.mxu0 %v2033
        %2105 = vmatpush.msra.mxu0 %v2019
        %2106 = vmatpush.msra.mxu0 %v2017
        %2107 = vmatmul.f32.gmra.mxu0 %v2057
        %v2108 = vpop.f32.mrf.mxu0
        %v2109 = vadd.f32 0.0, %v2108
        %2110 = vmatmul.f32.gmra.mxu0 %v2060
        %v2111 = vpop.f32.mrf.mxu0
        %v2112 = vadd.f32 0.0, %v2111
        %2113 = vmatmul.f32.gmra.mxu0 %v2063
        %v2114 = vpop.f32.mrf.mxu0
        %v2115 = vadd.f32 0.0, %v2114
        %2116 = vdwg.mxu0
        %v2117 = vadd.f32 %v1970, %v2083
        %v2118 = vadd.f32 %v1996, %v2109
        %v2119 = vadd.f32 %v1973, %v2086
        %v2120 = vadd.f32 %v1999, %v2112
        %v2121 = vadd.f32 %v1976, %v2089
        %v2122 = vadd.f32 %v2002, %v2115
        %v2123 = vld [vmem:[%s10] sm:$0xff]
        %v2124 = vld [vmem:[%s10 + $0x8] sm:$0xff]
        %v2125 = vld [vmem:[%s10 + $0x10] sm:$0xff]
        %2127 = vset.pattern.permute.xlu0 0
        %2128 = vperm.xlu0 %2127, %v2123
        %v2129 = vpop.permute.xlu0 %2128
        %2132 = vset.pattern.permute.xlu0 0
        %2133 = vperm.xlu0 %2132, %v2124
        %v2134 = vpop.permute.xlu0 %2133
        %2137 = vset.pattern.permute.xlu0 0
        %2138 = vperm.xlu0 %2137, %v2125
        %v2139 = vpop.permute.xlu0 %2138
        %v2141 = vadd.f32 %v2117, %v2129
        %v2142 = vadd.f32 %v2118, %v2129
        %v2143 = vadd.f32 %v2119, %v2134
        %v2144 = vadd.f32 %v2120, %v2134
        %v2145 = vadd.f32 %v2121, %v2139
        %v2146 = vadd.f32 %v2122, %v2139
        %2147 = vrot.lane.b32.xlu0 %v2141, 17
        %v2148 = vpop.permute.xlu0 %2147
        %2149 = vrot.lane.b32.xlu0 %v2143, 17
        %v2150 = vpop.permute.xlu0 %2149
        %2151 = vrot.lane.b32.xlu0 %v2145, 17
        %v2152 = vpop.permute.xlu0 %2151
        %2153 = vrot.lane.b32.xlu0 %v2142, 17
        %v2154 = vpop.permute.xlu0 %2153
        %2155 = vrot.lane.b32.xlu0 %v2144, 17
        %v2156 = vpop.permute.xlu0 %2155
        %2157 = vrot.lane.b32.xlu0 %v2146, 17
        %v2158 = vpop.permute.xlu0 %2157
        %v2159 = vsel %vm647, %v2148, %v2154
        %v2160 = vsel %vm647, %v2150, %v2156
        %v2161 = vsel %vm647, %v2152, %v2158
        %v2162 = vsel %vm647, %v2154, %v2148
        %v2163 = vsel %vm647, %v2156, %v2150
        %v2164 = vsel %vm647, %v2158, %v2152
        %v2165 = vsel %vm656, %v2162, 0.0
        %v2166 = vsel %vm657, %v2159, 0.0
        %v2167 = vsel %vm656, %v2163, 0.0
        %v2168 = vsel %vm657, %v2160, 0.0
        %v2169 = vsel %vm656, %v2164, 0.0
        %v2170 = vsel %vm657, %v2161, 0.0
        %2171 = vrot.lane.b32.xlu0 %v2141, 16
        %v2172 = vpop.permute.xlu0 %2171
        %2173 = vrot.lane.b32.xlu0 %v2143, 16
        %v2174 = vpop.permute.xlu0 %2173
        %2175 = vrot.lane.b32.xlu0 %v2145, 16
        %v2176 = vpop.permute.xlu0 %2175
        %2177 = vrot.lane.b32.xlu0 %v2142, 16
        %v2178 = vpop.permute.xlu0 %2177
        %2179 = vrot.lane.b32.xlu0 %v2144, 16
        %v2180 = vpop.permute.xlu0 %2179
        %2181 = vrot.lane.b32.xlu0 %v2146, 16
        %v2182 = vpop.permute.xlu0 %2181
        %v2183 = vsel %vm671, %v2172, %v2178
        %v2184 = vsel %vm671, %v2174, %v2180
        %v2185 = vsel %vm671, %v2176, %v2182
        %v2186 = vsel %vm671, %v2178, %v2172
        %v2187 = vsel %vm671, %v2180, %v2174
        %v2188 = vsel %vm671, %v2182, %v2176
        %v2189 = vsel %vm677, %v2186, 0.0
        %v2190 = vsel %vm678, %v2183, 0.0
        %v2191 = vsel %vm677, %v2187, 0.0
        %v2192 = vsel %vm678, %v2184, 0.0
        %v2193 = vsel %vm677, %v2188, 0.0
        %v2194 = vsel %vm678, %v2185, 0.0
        %2195 = vrot.lane.b32.xlu0 %v2141, 15
        %v2196 = vpop.permute.xlu0 %2195
        %2197 = vrot.lane.b32.xlu0 %v2143, 15
        %v2198 = vpop.permute.xlu0 %2197
        %2199 = vrot.lane.b32.xlu0 %v2145, 15
        %v2200 = vpop.permute.xlu0 %2199
        %2201 = vrot.lane.b32.xlu0 %v2142, 15
        %v2202 = vpop.permute.xlu0 %2201
        %2203 = vrot.lane.b32.xlu0 %v2144, 15
        %v2204 = vpop.permute.xlu0 %2203
        %2205 = vrot.lane.b32.xlu0 %v2146, 15
        %v2206 = vpop.permute.xlu0 %2205
        %v2207 = vsel %vm692, %v2196, %v2202
        %v2208 = vsel %vm692, %v2198, %v2204
        %v2209 = vsel %vm692, %v2200, %v2206
        %v2210 = vsel %vm692, %v2202, %v2196
        %v2211 = vsel %vm692, %v2204, %v2198
        %v2212 = vsel %vm692, %v2206, %v2200
        %v2213 = vsel %vm700, %v2210, 0.0
        %v2214 = vsel %vm701, %v2207, 0.0
        %v2215 = vsel %vm700, %v2211, 0.0
        %v2216 = vsel %vm701, %v2208, 0.0
        %v2217 = vsel %vm700, %v2212, 0.0
        %v2218 = vsel %vm701, %v2209, 0.0
        %v2219 = vld [vmem:[#allocation6] sm:$0xff]
        %v2220 = vld [vmem:[#allocation6 + $0x8] sm:$0xff]
        %v2221 = vld [vmem:[#allocation6 + $0x10] sm:$0xff]
        %2222 = vrot.lane.b32.xlu0 %v2141, 1
        %v2223 = vpop.permute.xlu0 %2222
        %2224 = vrot.lane.b32.xlu0 %v2143, 1
        %v2225 = vpop.permute.xlu0 %2224
        %2226 = vrot.lane.b32.xlu0 %v2145, 1
        %v2227 = vpop.permute.xlu0 %2226
        %2228 = vrot.lane.b32.xlu0 %v2142, 1
        %v2229 = vpop.permute.xlu0 %2228
        %2230 = vrot.lane.b32.xlu0 %v2144, 1
        %v2231 = vpop.permute.xlu0 %2230
        %2232 = vrot.lane.b32.xlu0 %v2146, 1
        %v2233 = vpop.permute.xlu0 %2232
        %v2234 = vsel %vm715, %v2223, %v2229
        %v2235 = vsel %vm715, %v2225, %v2231
        %v2236 = vsel %vm715, %v2227, %v2233
        %v2237 = vsel %vm715, %v2229, %v2223
        %v2238 = vsel %vm715, %v2231, %v2225
        %v2239 = vsel %vm715, %v2233, %v2227
        %v2240 = vsel %vm721, %v2237, 0.0
        %v2241 = vsel %vm722, %v2234, 0.0
        %v2242 = vsel %vm721, %v2238, 0.0
        %v2243 = vsel %vm722, %v2235, 0.0
        %v2244 = vsel %vm721, %v2239, 0.0
        %v2245 = vsel %vm722, %v2236, 0.0
        %2246 = vrot.lane.b32.xlu0 %v2141, 127
        %v2247 = vpop.permute.xlu0 %2246
        %2248 = vrot.lane.b32.xlu0 %v2143, 127
        %v2249 = vpop.permute.xlu0 %2248
        %2250 = vrot.lane.b32.xlu0 %v2145, 127
        %v2251 = vpop.permute.xlu0 %2250
        %2252 = vrot.lane.b32.xlu0 %v2142, 127
        %v2253 = vpop.permute.xlu0 %2252
        %2254 = vrot.lane.b32.xlu0 %v2144, 127
        %v2255 = vpop.permute.xlu0 %2254
        %2256 = vrot.lane.b32.xlu0 %v2146, 127
        %v2257 = vpop.permute.xlu0 %2256
        %v2258 = vsel %vm743, %v2247, %v2253
        %v2259 = vsel %vm743, %v2249, %v2255
        %v2260 = vsel %vm743, %v2251, %v2257
        %v2261 = vsel %vm743, %v2253, %v2247
        %v2262 = vsel %vm743, %v2255, %v2249
        %v2263 = vsel %vm743, %v2257, %v2251
        %v2264 = vsel %vm749, %v2258, 0.0
        %v2265 = vsel %vm750, %v2261, 0.0
        %v2266 = vsel %vm749, %v2259, 0.0
        %v2267 = vsel %vm750, %v2262, 0.0
        %v2268 = vsel %vm749, %v2260, 0.0
        %v2269 = vsel %vm750, %v2263, 0.0
        %s2270 = scalar_lea.vmem [#allocation6], 24
        %v2271 = vld [vmem:[%s2270] sm:$0xff]
        %v2272 = vld [vmem:[%s2270 + $0x8] sm:$0xff]
        %v2273 = vld [vmem:[%s2270 + $0x10] sm:$0xff]
        %vm2274 = vcmask 588800
        %v2276 = vsel %vm2274, %v2271, 0
        %v2279 = vsel %vm2274, %v2272, 0
        %v2282 = vsel %vm2274, %v2273, 0
        %2284 = vmatpush.msra.mxu0 0.0
        %2285 = vmatpush.msra.mxu0 0.0
        %2286 = vmatpush.msra.mxu0 0.0
        %2287 = vmatpush.msra.mxu0 0.0
        %2288 = vmatpush.msra.mxu0 0.0
        %2289 = vmatpush.msra.mxu0 0.0
        %2290 = vmatpush.msra.mxu0 0.0
        %2291 = vmatpush.msra.mxu0 %v2268
        %2292 = vmatpush.msra.mxu0 %v2266
        %2293 = vmatpush.msra.mxu0 %v2264
        %2294 = vmatpush.msra.mxu0 %v2145
        %2295 = vmatpush.msra.mxu0 %v2143
        %2296 = vmatpush.msra.mxu0 %v2141
        %2297 = vmatpush.msra.mxu0 %v2244
        %2298 = vmatpush.msra.mxu0 %v2242
        %2299 = vmatpush.msra.mxu0 %v2240
        %2300 = vmatmul.f32.gmra.mxu0 %v2276
        %v2301 = vpop.f32.mrf.mxu0
        %v2302 = vadd.f32 0.0, %v2301
        %2303 = vmatmul.f32.gmra.mxu0 %v2279
        %v2304 = vpop.f32.mrf.mxu0
        %v2305 = vadd.f32 0.0, %v2304
        %2306 = vmatmul.f32.gmra.mxu0 %v2282
        %v2307 = vpop.f32.mrf.mxu0
        %v2308 = vadd.f32 0.0, %v2307
        %2309 = vdwg.mxu0
        %2310 = vmatpush.msra.mxu0 0.0
        %2311 = vmatpush.msra.mxu0 0.0
        %2312 = vmatpush.msra.mxu0 0.0
        %2313 = vmatpush.msra.mxu0 0.0
        %2314 = vmatpush.msra.mxu0 0.0
        %2315 = vmatpush.msra.mxu0 0.0
        %2316 = vmatpush.msra.mxu0 0.0
        %2317 = vmatpush.msra.mxu0 %v2269
        %2318 = vmatpush.msra.mxu0 %v2267
        %2319 = vmatpush.msra.mxu0 %v2265
        %2320 = vmatpush.msra.mxu0 %v2146
        %2321 = vmatpush.msra.mxu0 %v2144
        %2322 = vmatpush.msra.mxu0 %v2142
        %2323 = vmatpush.msra.mxu0 %v2245
        %2324 = vmatpush.msra.mxu0 %v2243
        %2325 = vmatpush.msra.mxu0 %v2241
        %2326 = vmatmul.f32.gmra.mxu0 %v2276
        %v2327 = vpop.f32.mrf.mxu0
        %v2328 = vadd.f32 0.0, %v2327
        %2329 = vmatmul.f32.gmra.mxu0 %v2279
        %v2330 = vpop.f32.mrf.mxu0
        %v2331 = vadd.f32 0.0, %v2330
        %2332 = vmatmul.f32.gmra.mxu0 %v2282
        %v2333 = vpop.f32.mrf.mxu0
        %v2334 = vadd.f32 0.0, %v2333
        %2335 = vdwg.mxu0
        %v2337 = vsel %vm2274, %v2219, 0
        %v2340 = vsel %vm2274, %v2220, 0
        %v2343 = vsel %vm2274, %v2221, 0
        %2345 = vmatpush.msra.mxu0 0.0
        %2346 = vmatpush.msra.mxu0 0.0
        %2347 = vmatpush.msra.mxu0 0.0
        %2348 = vmatpush.msra.mxu0 0.0
        %2349 = vmatpush.msra.mxu0 0.0
        %2350 = vmatpush.msra.mxu0 0.0
        %2351 = vmatpush.msra.mxu0 0.0
        %2352 = vmatpush.msra.mxu0 %v2217
        %2353 = vmatpush.msra.mxu0 %v2215
        %2354 = vmatpush.msra.mxu0 %v2213
        %2355 = vmatpush.msra.mxu0 %v2193
        %2356 = vmatpush.msra.mxu0 %v2191
        %2357 = vmatpush.msra.mxu0 %v2189
        %2358 = vmatpush.msra.mxu0 %v2169
        %2359 = vmatpush.msra.mxu0 %v2167
        %2360 = vmatpush.msra.mxu0 %v2165
        %2361 = vmatmul.f32.gmra.mxu0 %v2337
        %v2362 = vpop.f32.mrf.mxu0
        %v2363 = vadd.f32 %v2302, %v2362
        %2364 = vmatmul.f32.gmra.mxu0 %v2340
        %v2365 = vpop.f32.mrf.mxu0
        %v2366 = vadd.f32 %v2305, %v2365
        %2367 = vmatmul.f32.gmra.mxu0 %v2343
        %v2368 = vpop.f32.mrf.mxu0
        %v2369 = vadd.f32 %v2308, %v2368
        %2370 = vdwg.mxu0
        %2371 = vmatpush.msra.mxu0 0.0
        %2372 = vmatpush.msra.mxu0 0.0
        %2373 = vmatpush.msra.mxu0 0.0
        %2374 = vmatpush.msra.mxu0 0.0
        %2375 = vmatpush.msra.mxu0 0.0
        %2376 = vmatpush.msra.mxu0 0.0
        %2377 = vmatpush.msra.mxu0 0.0
        %2378 = vmatpush.msra.mxu0 %v2218
        %2379 = vmatpush.msra.mxu0 %v2216
        %2380 = vmatpush.msra.mxu0 %v2214
        %2381 = vmatpush.msra.mxu0 %v2194
        %2382 = vmatpush.msra.mxu0 %v2192
        %2383 = vmatpush.msra.mxu0 %v2190
        %2384 = vmatpush.msra.mxu0 %v2170
        %2385 = vmatpush.msra.mxu0 %v2168
        %2386 = vmatpush.msra.mxu0 %v2166
        %2387 = vmatmul.f32.gmra.mxu0 %v2337
        %v2388 = vpop.f32.mrf.mxu0
        %v2389 = vadd.f32 %v2328, %v2388
        %2390 = vmatmul.f32.gmra.mxu0 %v2340
        %v2391 = vpop.f32.mrf.mxu0
        %v2392 = vadd.f32 %v2331, %v2391
        %2393 = vmatmul.f32.gmra.mxu0 %v2343
        %v2394 = vpop.f32.mrf.mxu0
        %v2395 = vadd.f32 %v2334, %v2394
        %2396 = vdwg.mxu0
        %2397 = vrot.lane.b32.xlu0 %v2141, 113
        %v2398 = vpop.permute.xlu0 %2397
        %2399 = vrot.lane.b32.xlu0 %v2143, 113
        %v2400 = vpop.permute.xlu0 %2399
        %2401 = vrot.lane.b32.xlu0 %v2145, 113
        %v2402 = vpop.permute.xlu0 %2401
        %2403 = vrot.lane.b32.xlu0 %v2142, 113
        %v2404 = vpop.permute.xlu0 %2403
        %2405 = vrot.lane.b32.xlu0 %v2144, 113
        %v2406 = vpop.permute.xlu0 %2405
        %2407 = vrot.lane.b32.xlu0 %v2146, 113
        %v2408 = vpop.permute.xlu0 %2407
        %v2409 = vsel %vm764, %v2398, %v2404
        %v2410 = vsel %vm764, %v2400, %v2406
        %v2411 = vsel %vm764, %v2402, %v2408
        %v2412 = vsel %vm764, %v2404, %v2398
        %v2413 = vsel %vm764, %v2406, %v2400
        %v2414 = vsel %vm764, %v2408, %v2402
        %v2415 = vsel %vm772, %v2409, 0.0
        %v2416 = vsel %vm773, %v2412, 0.0
        %v2417 = vsel %vm772, %v2410, 0.0
        %v2418 = vsel %vm773, %v2413, 0.0
        %v2419 = vsel %vm772, %v2411, 0.0
        %v2420 = vsel %vm773, %v2414, 0.0
        %2421 = vrot.lane.b32.xlu0 %v2141, 112
        %v2422 = vpop.permute.xlu0 %2421
        %2423 = vrot.lane.b32.xlu0 %v2143, 112
        %v2424 = vpop.permute.xlu0 %2423
        %2425 = vrot.lane.b32.xlu0 %v2145, 112
        %v2426 = vpop.permute.xlu0 %2425
        %2427 = vrot.lane.b32.xlu0 %v2142, 112
        %v2428 = vpop.permute.xlu0 %2427
        %2429 = vrot.lane.b32.xlu0 %v2144, 112
        %v2430 = vpop.permute.xlu0 %2429
        %2431 = vrot.lane.b32.xlu0 %v2146, 112
        %v2432 = vpop.permute.xlu0 %2431
        %v2433 = vsel %vm787, %v2422, %v2428
        %v2434 = vsel %vm787, %v2424, %v2430
        %v2435 = vsel %vm787, %v2426, %v2432
        %v2436 = vsel %vm787, %v2428, %v2422
        %v2437 = vsel %vm787, %v2430, %v2424
        %v2438 = vsel %vm787, %v2432, %v2426
        %v2439 = vsel %vm793, %v2433, 0.0
        %v2440 = vsel %vm794, %v2436, 0.0
        %v2441 = vsel %vm793, %v2434, 0.0
        %v2442 = vsel %vm794, %v2437, 0.0
        %v2443 = vsel %vm793, %v2435, 0.0
        %v2444 = vsel %vm794, %v2438, 0.0
        %2445 = vrot.lane.b32.xlu0 %v2141, 111
        %v2446 = vpop.permute.xlu0 %2445
        %2447 = vrot.lane.b32.xlu0 %v2143, 111
        %v2448 = vpop.permute.xlu0 %2447
        %2449 = vrot.lane.b32.xlu0 %v2145, 111
        %v2450 = vpop.permute.xlu0 %2449
        %2451 = vrot.lane.b32.xlu0 %v2142, 111
        %v2452 = vpop.permute.xlu0 %2451
        %2453 = vrot.lane.b32.xlu0 %v2144, 111
        %v2454 = vpop.permute.xlu0 %2453
        %2455 = vrot.lane.b32.xlu0 %v2146, 111
        %v2456 = vpop.permute.xlu0 %2455
        %v2457 = vsel %vm808, %v2446, %v2452
        %v2458 = vsel %vm808, %v2448, %v2454
        %v2459 = vsel %vm808, %v2450, %v2456
        %v2460 = vsel %vm808, %v2452, %v2446
        %v2461 = vsel %vm808, %v2454, %v2448
        %v2462 = vsel %vm808, %v2456, %v2450
        %v2463 = vsel %vm815, %v2457, 0.0
        %v2464 = vsel %vm816, %v2460, 0.0
        %v2465 = vsel %vm815, %v2458, 0.0
        %v2466 = vsel %vm816, %v2461, 0.0
        %v2467 = vsel %vm815, %v2459, 0.0
        %v2468 = vsel %vm816, %v2462, 0.0
        %s2469 = scalar_lea.vmem [#allocation6], 48
        %v2470 = vld [vmem:[%s2469] sm:$0xff]
        %v2471 = vld [vmem:[%s2469 + $0x8] sm:$0xff]
        %v2472 = vld [vmem:[%s2469 + $0x10] sm:$0xff]
        %v2474 = vsel %vm2274, %v2470, 0
        %v2477 = vsel %vm2274, %v2471, 0
        %v2480 = vsel %vm2274, %v2472, 0
        %2482 = vmatpush.msra.mxu0 0.0
        %2483 = vmatpush.msra.mxu0 0.0
        %2484 = vmatpush.msra.mxu0 0.0
        %2485 = vmatpush.msra.mxu0 0.0
        %2486 = vmatpush.msra.mxu0 0.0
        %2487 = vmatpush.msra.mxu0 0.0
        %2488 = vmatpush.msra.mxu0 0.0
        %2489 = vmatpush.msra.mxu0 %v2467
        %2490 = vmatpush.msra.mxu0 %v2465
        %2491 = vmatpush.msra.mxu0 %v2463
        %2492 = vmatpush.msra.mxu0 %v2443
        %2493 = vmatpush.msra.mxu0 %v2441
        %2494 = vmatpush.msra.mxu0 %v2439
        %2495 = vmatpush.msra.mxu0 %v2419
        %2496 = vmatpush.msra.mxu0 %v2417
        %2497 = vmatpush.msra.mxu0 %v2415
        %2498 = vmatmul.f32.gmra.mxu0 %v2474
        %v2499 = vpop.f32.mrf.mxu0
        %v2500 = vadd.f32 0.0, %v2499
        %2501 = vmatmul.f32.gmra.mxu0 %v2477
        %v2502 = vpop.f32.mrf.mxu0
        %v2503 = vadd.f32 0.0, %v2502
        %2504 = vmatmul.f32.gmra.mxu0 %v2480
        %v2505 = vpop.f32.mrf.mxu0
        %v2506 = vadd.f32 0.0, %v2505
        %2507 = vdwg.mxu0
        %2508 = vmatpush.msra.mxu0 0.0
        %2509 = vmatpush.msra.mxu0 0.0
        %2510 = vmatpush.msra.mxu0 0.0
        %2511 = vmatpush.msra.mxu0 0.0
        %2512 = vmatpush.msra.mxu0 0.0
        %2513 = vmatpush.msra.mxu0 0.0
        %2514 = vmatpush.msra.mxu0 0.0
        %2515 = vmatpush.msra.mxu0 %v2468
        %2516 = vmatpush.msra.mxu0 %v2466
        %2517 = vmatpush.msra.mxu0 %v2464
        %2518 = vmatpush.msra.mxu0 %v2444
        %2519 = vmatpush.msra.mxu0 %v2442
        %2520 = vmatpush.msra.mxu0 %v2440
        %2521 = vmatpush.msra.mxu0 %v2420
        %2522 = vmatpush.msra.mxu0 %v2418
        %2523 = vmatpush.msra.mxu0 %v2416
        %2524 = vmatmul.f32.gmra.mxu0 %v2474
        %v2525 = vpop.f32.mrf.mxu0
        %v2526 = vadd.f32 0.0, %v2525
        %2527 = vmatmul.f32.gmra.mxu0 %v2477
        %v2528 = vpop.f32.mrf.mxu0
        %v2529 = vadd.f32 0.0, %v2528
        %2530 = vmatmul.f32.gmra.mxu0 %v2480
        %v2531 = vpop.f32.mrf.mxu0
        %v2532 = vadd.f32 0.0, %v2531
        %2533 = vdwg.mxu0
        %v2534 = vadd.f32 %v2363, %v2500
        %v2535 = vadd.f32 %v2389, %v2526
        %v2536 = vadd.f32 %v2366, %v2503
        %v2537 = vadd.f32 %v2392, %v2529
        %v2538 = vadd.f32 %v2369, %v2506
        %v2539 = vadd.f32 %v2395, %v2532
        %v2540 = vld [vmem:[%s12] sm:$0xff]
        %v2541 = vld [vmem:[%s12 + $0x8] sm:$0xff]
        %v2542 = vld [vmem:[%s12 + $0x10] sm:$0xff]
        %2544 = vset.pattern.permute.xlu0 0
        %2545 = vperm.xlu0 %2544, %v2540
        %v2546 = vpop.permute.xlu0 %2545
        %2549 = vset.pattern.permute.xlu0 0
        %2550 = vperm.xlu0 %2549, %v2541
        %v2551 = vpop.permute.xlu0 %2550
        %2554 = vset.pattern.permute.xlu0 0
        %2555 = vperm.xlu0 %2554, %v2542
        %v2556 = vpop.permute.xlu0 %2555
        %v2558 = vadd.f32 %v2534, %v2546
        %v2559 = vadd.f32 %v2535, %v2546
        %v2560 = vadd.f32 %v2536, %v2551
        %v2561 = vadd.f32 %v2537, %v2551
        %v2562 = vadd.f32 %v2538, %v2556
        %v2563 = vadd.f32 %v2539, %v2556
        %2564 = vst [vmem:[%s467 + $0x80] sm:$0xff] %v2558
        %2565 = vst [vmem:[%s467 + $0x88] sm:$0xff] %v2559
        %2566 = vst [vmem:[%s467 + $0x90] sm:$0xff] %v2560
        %2567 = vst [vmem:[%s467 + $0x98] sm:$0xff] %v2561
        %2568 = vst [vmem:[%s467 + $0xa0] sm:$0xff] %v2562
        %2569 = vst [vmem:[%s467 + $0xa8] sm:$0xff] %v2563
        %s2570 = sand.u32 %s315, 1
        %s2571 = scalar_lea.sflag [#allocation5], %s2570
        %s2572 = sand.u32 %s315, 1
        %s2573 = smul.addr %s2572, 176
        %s2574 = scalar_lea.vmem [#allocation8], %s2573
        // Predicated region
        $region81: #{tpu_custom_call.1} parent=71 // pred_check
          %p2575 = pneg %p325
        $region82: #{tpu_custom_call.1} parent=71 // pred_check_branch
          %2577 = sbr.rel (%p2575) target = $region84
        $region83: #{tpu_custom_call.1} parent=71 // pred_region
          %2579 = vsyncadd %s2571, 0
          %s2580 = smul.addr %s29, 22
          %s2581 = smul.addr %s2580, 8
          %s2582 = scalar_lea.hbm %s13, %s2581
          %s2583 = sshll.u32 %s2574, 4
          %s2584 = int_to_ptr.vmem [resolvable:$true] %s2583
          %s2585 = sshll.u32 %s2582, 4
          %s2586 = int_to_ptr.hbm [resolvable:$true] %s2585
          %2591 = dma.vmem_to_hbm [thread:$0]  %s2584, 2816, %s2586, %s2571, 256, 256, 16
        $region84: #{tpu_custom_call.1} parent=71 // pred_fallthru
          _
      $region72: #{tpu_custom_call.1} parent=5 // pred_fallthru
        _
      %p2592 = scmp.le.s32.totalorder 2, %s24
      // Predicated region
      $region85: #{tpu_custom_call.1} parent=5 // pred_check
        %p2593 = pneg %p2592
      $region86: #{tpu_custom_call.1} parent=5 // pred_check_branch
        %2595 = sbr.rel (%p2593) target = $region88
      $region87: #{tpu_custom_call.1} parent=5 // pred_region
        %s2596 = ssub.s32 %s24, 2
        // Predicated region
        $region89: #{tpu_custom_call.1} parent=87 // pred_check
          %p2597 = pneg %p331
        $region90: #{tpu_custom_call.1} parent=87 // pred_check_branch
          %2599 = sbr.rel (%p2597) target = $region92
        $region91: #{tpu_custom_call.1} parent=87 // pred_region
          %s2600 = sand.u32 %s316, 1
          %s2601 = scalar_lea.sflag [#allocation5], %s2600
          %s2602 = sand.u32 %s316, 1
          %s2603 = smul.addr %s2602, 176
          %s2604 = scalar_lea.vmem [#allocation8], %s2603
          %2606 = dma.done %s2601, 2816
        $region92: #{tpu_custom_call.1} parent=87 // pred_fallthru
          _
      $region88: #{tpu_custom_call.1} parent=5 // pred_fallthru
        _
    $region6: #{tpu_custom_call.1} parent=1 // loop_footer
      %s28 = sadd.s32 1, %s24
    $region7: #{tpu_custom_call.1} parent=1 // loop_footer_branch
      %23 = sbr.rel target = $region3
    $region8: #{tpu_custom_call.1} parent=1 // loop_exit
      _
    %2607 = vsyncpa [#allocation4], 1
    %s2608 = scalar_lea.sflag [#allocation4], 1
    %2609 = vsyncpa %s2608, 1
    %2610 = vsyncpa [#allocation7], 1
    %2611 = vsyncpa [#allocation5], 1
    %s2612 = scalar_lea.sflag [#allocation5], 1
    %2613 = vsyncpa %s2612, 1

</llo_original>
